<compile_context>
chip_gen: v6e
topology: v6e:2x2x1
jax: 0.10.0
libtpu: 0.0.40
codegen_flags: <defaults>
</compile_context>

<pallas_src>
import jax
import jax.numpy as jnp
import numpy as np
from jax import lax
from jax.experimental import pallas as pl
from jax.experimental.pallas import tpu as pltpu


def _largest_divisor_leq(n, cap):
    cap = max(1, min(n, cap))
    for b in range(cap, 0, -1):
        if n % b == 0:
            return b
    return 1


# ----------------------------- Conv 3x3 + ReLU ----------------------------- #
def _conv3x3_relu_kernel(xp_ref, w_ref, b_ref, o_ref):
    # xp_ref: (BN, H+2, W+2, Cin)  zero-padded bf16 input block (BN images)
    # w_ref : (9*Cin, Cout)        bf16 taps, row index = (dy*3 + dx)*Cin + cin
    # b_ref : (1, Cout)            f32 bias
    # o_ref : (BN, H*W, Cout)      bf16 features, row-major (h, w) per image
    BN, Hp, Wp, Cin = xp_ref.shape
    H, W = Hp - 2, Wp - 2
    M = BN * H * W
    # im2col: 9 shifted views -> one (M, 9*Cin) patch matrix, then a single
    # long-K MXU matmul with f32 accumulation (no VPU accumulation chain).
    patches = [
        xp_ref[:, dy:dy + H, dx:dx + W, :].reshape(M, Cin)
        for dy in range(3) for dx in range(3)
    ]
    col = jnp.concatenate(patches, axis=-1)                     # (M, 9*Cin) bf16
    acc = jnp.dot(col, w_ref[...], preferred_element_type=jnp.float32)
    acc = jnp.maximum(acc + b_ref[...], 0.0)                    # bias + ReLU in f32
    o_ref[...] = acc.reshape(BN, H * W, -1).astype(o_ref.dtype)


def conv3x3_relu(x_pad_nhwc, w_taps, b_row, H, W, block_n):
    N, Hp, Wp, Cin = x_pad_nhwc.shape
    Cout = w_taps.shape[-1]
    return pl.pallas_call(
        _conv3x3_relu_kernel,
        out_shape=jax.ShapeDtypeStruct((N, H * W, Cout), jnp.bfloat16),
        grid_spec=pltpu.PrefetchScalarGridSpec(
            num_scalar_prefetch=0,
            grid=(N // block_n,),
            in_specs=[
                pl.BlockSpec((block_n, Hp, Wp, Cin), lambda n: (n, 0, 0, 0)),
                pl.BlockSpec((9 * Cin, Cout), lambda n: (0, 0)),
                pl.BlockSpec((1, Cout), lambda n: (0, 0)),
            ],
            out_specs=pl.BlockSpec((block_n, H * W, Cout), lambda n: (n, 0, 0)),
        ),
        # Independent per-image work: "parallel" lets v7x shard the batch axis
        # across its two TensorCores (no-op on v5e/v6e).
        compiler_params=pltpu.CompilerParams(
            dimension_semantics=("parallel",)),
    )(x_pad_nhwc, w_taps, b_row)


# ------------------------------ Linear (fc) -------------------------------- #
def _linear_kernel(x_ref, w_ref, b_ref, o_ref, acc_ref):
    # x_ref: (bn, bk) bf16, w_ref: (Cp, bk) bf16, b_ref: (1, Cp) f32
    # o_ref: (bn, Cp) f32, acc_ref: (bn, Cp) f32 VMEM accumulator (K-resident)
    k = pl.program_id(1)

    @pl.when(k == 0)
    def _():
        acc_ref[...] = jnp.zeros_like(acc_ref)

    # Contract on the shared D axis: weight stays (C, D) — no transpose pass.
    acc_ref[...] += lax.dot_general(
        x_ref[...], w_ref[...],
        dimension_numbers=(((1,), (1,)), ((), ())),
        preferred_element_type=jnp.float32)

    @pl.when(k == pl.num_programs(1) - 1)
    def _():
        o_ref[...] = (acc_ref[...] + b_ref[...]).astype(o_ref.dtype)


def linear(x2d, w_cd, b_row, *, block_n, block_k):
    N, D = x2d.shape
    Cp = w_cd.shape[0]
    return pl.pallas_call(
        _linear_kernel,
        out_shape=jax.ShapeDtypeStruct((N, Cp), jnp.float32),
        grid_spec=pltpu.PrefetchScalarGridSpec(
            num_scalar_prefetch=0,
            grid=(N // block_n, D // block_k),
            in_specs=[
                pl.BlockSpec((block_n, block_k), lambda i, k: (i, k)),
                pl.BlockSpec((Cp, block_k), lambda i, k: (0, k)),
                pl.BlockSpec((1, Cp), lambda i, k: (0, 0)),
            ],
            out_specs=pl.BlockSpec((block_n, Cp), lambda i, k: (i, 0)),
            scratch_shapes=[pltpu.VMEM((block_n, Cp), jnp.float32)],
        ),
        compiler_params=pltpu.CompilerParams(
            dimension_semantics=("parallel", "arbitrary")),
    )(x2d, w_cd, b_row)


# ------------------------------ Full forward -------------------------------- #
def alexnet_forward(x_nchw, w_conv, b_conv, w_fc, b_fc):
    """x_nchw: (N, Cin, H, W); w_conv: (Cout, Cin, 3, 3) [PyTorch OIHW];
    w_fc: (num_classes, Cout*H*W) with PyTorch NCHW flatten order; b_fc: (num_classes,)."""
    N, Cin, H, W = x_nchw.shape
    Cout = w_conv.shape[0]
    num_classes, D = w_fc.shape
    assert D == Cout * H * W

    # NCHW -> NHWC (bf16) + zero pad; adjacent ops so XLA fuses into one input pass.
    x_nhwc = jnp.transpose(x_nchw, (0, 2, 3, 1)).astype(jnp.bfloat16)
    x_pad = jnp.pad(x_nhwc, ((0, 0), (1, 1), (1, 1), (0, 0)))
    # OIHW -> (dy, dx, Cin, Cout) -> (9*Cin, Cout), bf16 for the MXU.
    w_taps = (jnp.transpose(w_conv, (2, 3, 1, 0))
              .reshape(9 * Cin, Cout).astype(jnp.bfloat16))
    b_row = b_conv.reshape(1, Cout).astype(jnp.float32)

    # Keep >=2 grid steps when N>=2 (v7x megacore) while amortizing per-step overhead.
    block_n = _largest_divisor_leq(N, max(1, min(8, N // 2)))
    feat = conv3x3_relu(x_pad, w_taps, b_row, H, W, block_n)   # (N, H*W, Cout), (h,w,c) order
    feat_flat = feat.reshape(N, D)                             # contiguous — no transpose

    # Fold the PyTorch (c,h,w) flatten order into the fc weight columns (now (h,w,c)),
    # and pad the class dim up to a multiple of 128 for lane-dense stores.
    w_hwc = (jnp.transpose(w_fc.reshape(num_classes, Cout, H, W), (0, 2, 3, 1))
             .reshape(num_classes, D))
    Cp = ((num_classes + 127) // 128) * 128
    w_pad = jnp.pad(w_hwc, ((0, Cp - num_classes), (0, 0))).astype(jnp.bfloat16)
    b_pad = jnp.pad(b_fc, (0, Cp - num_classes)).reshape(1, Cp).astype(jnp.float32)

    bn = _largest_divisor_leq(N, 256)
    bk = _largest_divisor_leq(D, 4096)
    logits = linear(feat_flat, w_pad, b_pad, block_n=bn, block_k=bk)
    return logits[:, :num_classes]


# ------------------------------ Pure-JAX reference -------------------------- #
def reference_forward(x_nchw, w_conv, b_conv, w_fc, b_fc):
    # Mirror the kernel's mixed precision (bf16 operands, f32 accumulation).
    f32 = jnp.float32
    xb = x_nchw.astype(jnp.bfloat16).astype(f32)
    wb = w_conv.astype(jnp.bfloat16).astype(f32)
    y = lax.conv_general_dilated(
        xb, wb, window_strides=(1, 1), padding=((1, 1), (1, 1)),
        dimension_numbers=("NCHW", "OIHW", "NCHW"))
    y = jnp.maximum(y + b_conv[None, :, None, None].astype(f32), 0.0)
    yb = y.astype(jnp.bfloat16).astype(f32)
    wf = w_fc.astype(jnp.bfloat16).astype(f32)
    return yb.reshape(y.shape[0], -1) @ wf.T + b_fc.astype(f32)


if __name__ == "__main__":
    # Small shapes consistent with the module's forward:
    # Conv2d(Cin->Cout, 3, padding=1) + ReLU, then Linear(Cout*H*W -> num_classes).
    N, Cin, Cout, H, W, NUM_CLASSES = 2, 4, 8, 16, 16, 40
    D = Cout * H * W

    key = jax.random.PRNGKey(0)
    k_x, k_wc, k_bc, k_wf, k_bf = jax.random.split(key, 5)
    x = jax.random.normal(k_x, (N, Cin, H, W), dtype=jnp.float32)
    w_conv = jax.random.normal(k_wc, (Cout, Cin, 3, 3), dtype=jnp.float32) * 0.1
    b_conv = jax.random.normal(k_bc, (Cout,), dtype=jnp.float32) * 0.1
    w_fc = jax.random.normal(k_wf, (NUM_CLASSES, D), dtype=jnp.float32) * 0.02
    b_fc = jax.random.normal(k_bf, (NUM_CLASSES,), dtype=jnp.float32) * 0.02

    fwd = jax.jit(alexnet_forward)
    out = jax.block_until_ready(fwd(x, w_conv, b_conv, w_fc, b_fc))
    ref = jax.block_until_ready(reference_forward(x, w_conv, b_conv, w_fc, b_fc))

    assert out.shape == (N, NUM_CLASSES), out.shape
    np.testing.assert_allclose(np.asarray(out), np.asarray(ref),
                               rtol=2e-3, atol=2e-3)
    print("KERNEL_OK")
</pallas_src>

<mosaic_0001>
module attributes {stable_mosaic.version = 11 : i64} {
  func.func @_conv3x3_relu_kernel(%arg0: i32, %arg1: memref<1x18x18x4xbf16, #tpu.memory_space<vmem>>, %arg2: memref<36x8xbf16, #tpu.memory_space<vmem>>, %arg3: memref<1x8xf32, #tpu.memory_space<vmem>>, %arg4: memref<1x256x8xbf16, #tpu.memory_space<vmem>>) attributes {dimension_semantics = [#tpu.dimension_semantics<parallel>], iteration_bounds = array<i64: 2>, scalar_prefetch = 0 : i64, scratch_operands = 0 : i64, tpu.core_type = #tpu.core_type<tc>, window_params = [{transform_indices = @transform_0, window_bounds = array<i64: 1, 18, 18, 4>}, {pipeline_mode = #tpu.pipeline_mode<synchronous>, transform_indices = @transform_1, window_bounds = array<i64: 36, 8>}, {pipeline_mode = #tpu.pipeline_mode<synchronous>, transform_indices = @transform_2, window_bounds = array<i64: 1, 8>}, {transform_indices = @transform_3, window_bounds = array<i64: 1, 256, 8>}]} {
    %c0 = arith.constant 0 : index
    %c0_0 = arith.constant 0 : index
    %c0_1 = arith.constant 0 : index
    %c0_2 = arith.constant 0 : index
    %0 = vector.load %arg1[%c0, %c0_0, %c0_1, %c0_2] : memref<1x18x18x4xbf16, #tpu.memory_space<vmem>>, vector<1x16x16x4xbf16>
    %1 = vector.shape_cast %0 : vector<1x16x16x4xbf16> to vector<256x4xbf16>
    %c0_3 = arith.constant 0 : index
    %c0_4 = arith.constant 0 : index
    %c1 = arith.constant 1 : index
    %c0_5 = arith.constant 0 : index
    %2 = vector.load %arg1[%c0_3, %c0_4, %c1, %c0_5] : memref<1x18x18x4xbf16, #tpu.memory_space<vmem>>, vector<1x16x16x4xbf16>
    %3 = vector.shape_cast %2 : vector<1x16x16x4xbf16> to vector<256x4xbf16>
    %c0_6 = arith.constant 0 : index
    %c0_7 = arith.constant 0 : index
    %c2 = arith.constant 2 : index
    %c0_8 = arith.constant 0 : index
    %4 = vector.load %arg1[%c0_6, %c0_7, %c2, %c0_8] : memref<1x18x18x4xbf16, #tpu.memory_space<vmem>>, vector<1x16x16x4xbf16>
    %5 = vector.shape_cast %4 : vector<1x16x16x4xbf16> to vector<256x4xbf16>
    %c0_9 = arith.constant 0 : index
    %c1_10 = arith.constant 1 : index
    %c0_11 = arith.constant 0 : index
    %c0_12 = arith.constant 0 : index
    %6 = vector.load %arg1[%c0_9, %c1_10, %c0_11, %c0_12] : memref<1x18x18x4xbf16, #tpu.memory_space<vmem>>, vector<1x16x16x4xbf16>
    %7 = vector.shape_cast %6 : vector<1x16x16x4xbf16> to vector<256x4xbf16>
    %c0_13 = arith.constant 0 : index
    %c1_14 = arith.constant 1 : index
    %c1_15 = arith.constant 1 : index
    %c0_16 = arith.constant 0 : index
    %8 = vector.load %arg1[%c0_13, %c1_14, %c1_15, %c0_16] : memref<1x18x18x4xbf16, #tpu.memory_space<vmem>>, vector<1x16x16x4xbf16>
    %9 = vector.shape_cast %8 : vector<1x16x16x4xbf16> to vector<256x4xbf16>
    %c0_17 = arith.constant 0 : index
    %c1_18 = arith.constant 1 : index
    %c2_19 = arith.constant 2 : index
    %c0_20 = arith.constant 0 : index
    %10 = vector.load %arg1[%c0_17, %c1_18, %c2_19, %c0_20] : memref<1x18x18x4xbf16, #tpu.memory_space<vmem>>, vector<1x16x16x4xbf16>
    %11 = vector.shape_cast %10 : vector<1x16x16x4xbf16> to vector<256x4xbf16>
    %c0_21 = arith.constant 0 : index
    %c2_22 = arith.constant 2 : index
    %c0_23 = arith.constant 0 : index
    %c0_24 = arith.constant 0 : index
    %12 = vector.load %arg1[%c0_21, %c2_22, %c0_23, %c0_24] : memref<1x18x18x4xbf16, #tpu.memory_space<vmem>>, vector<1x16x16x4xbf16>
    %13 = vector.shape_cast %12 : vector<1x16x16x4xbf16> to vector<256x4xbf16>
    %c0_25 = arith.constant 0 : index
    %c2_26 = arith.constant 2 : index
    %c1_27 = arith.constant 1 : index
    %c0_28 = arith.constant 0 : index
    %14 = vector.load %arg1[%c0_25, %c2_26, %c1_27, %c0_28] : memref<1x18x18x4xbf16, #tpu.memory_space<vmem>>, vector<1x16x16x4xbf16>
    %15 = vector.shape_cast %14 : vector<1x16x16x4xbf16> to vector<256x4xbf16>
    %c0_29 = arith.constant 0 : index
    %c2_30 = arith.constant 2 : index
    %c2_31 = arith.constant 2 : index
    %c0_32 = arith.constant 0 : index
    %16 = vector.load %arg1[%c0_29, %c2_30, %c2_31, %c0_32] : memref<1x18x18x4xbf16, #tpu.memory_space<vmem>>, vector<1x16x16x4xbf16>
    %17 = vector.shape_cast %16 : vector<1x16x16x4xbf16> to vector<256x4xbf16>
    %18 = tpu.concatenate %1, %3, %5, %7, %9, %11, %13, %15, %17 in 1 : vector<256x4xbf16>, vector<256x4xbf16>, vector<256x4xbf16>, vector<256x4xbf16>, vector<256x4xbf16>, vector<256x4xbf16>, vector<256x4xbf16>, vector<256x4xbf16>, vector<256x4xbf16> -> vector<256x36xbf16>
    %c0_33 = arith.constant 0 : index
    %c0_34 = arith.constant 0 : index
    %19 = vector.load %arg2[%c0_33, %c0_34] : memref<36x8xbf16, #tpu.memory_space<vmem>>, vector<36x8xbf16>
    %cst = arith.constant dense<0.000000e+00> : vector<256x8xf32>
    %20 = tpu.matmul %18, %19, %cst {dimension_numbers = #tpu.dot_dimension_numbers<[1], [0], [0], [1], [0, 0, 1, 1], [], []>} : vector<256x36xbf16>, vector<36x8xbf16>, vector<256x8xf32> -> vector<256x8xf32>
    %c0_35 = arith.constant 0 : index
    %c0_36 = arith.constant 0 : index
    %21 = vector.load %arg3[%c0_35, %c0_36] : memref<1x8xf32, #tpu.memory_space<vmem>>, vector<1x8xf32>
    %22 = vector.broadcast %21 : vector<1x8xf32> to vector<256x8xf32>
    %23 = arith.addf %20, %22 : vector<256x8xf32>
    %cst_37 = arith.constant 0.000000e+00 : f32
    %24 = vector.broadcast %cst_37 : f32 to vector<256x8xf32>
    %25 = arith.maximumf %23, %24 : vector<256x8xf32>
    %26 = vector.shape_cast %25 : vector<256x8xf32> to vector<1x256x8xf32>
    %27 = arith.truncf %26 : vector<1x256x8xf32> to vector<1x256x8xbf16>
    %c0_38 = arith.constant 0 : index
    %c0_39 = arith.constant 0 : index
    %c0_40 = arith.constant 0 : index
    %28 = vector.load %arg4[%c0_38, %c0_39, %c0_40] : memref<1x256x8xbf16, #tpu.memory_space<vmem>>, vector<1x256x8xbf16>
    tpu.vector_store %arg4[%c0_38, %c0_39, %c0_40], %27 {strides = array<i32>} : memref<1x256x8xbf16, #tpu.memory_space<vmem>>, vector<1x256x8xbf16>,
    return
  }
  func.func @transform_0(%arg0: i32) -> (i32, i32, i32, i32) {
    %c0_i32 = arith.constant 0 : i32
    %c0_i32_0 = arith.constant 0 : i32
    %c0_i32_1 = arith.constant 0 : i32
    %c0_i32_2 = arith.constant 0 : i32
    return %arg0, %c0_i32, %c0_i32_0, %c0_i32_1 : i32, i32, i32, i32
  }
  func.func @transform_1(%arg0: i32) -> (i32, i32) {
    %c0_i32 = arith.constant 0 : i32
    %c0_i32_0 = arith.constant 0 : i32
    %c0_i32_1 = arith.constant 0 : i32
    return %c0_i32, %c0_i32_0 : i32, i32
  }
  func.func @transform_2(%arg0: i32) -> (i32, i32) {
    %c0_i32 = arith.constant 0 : i32
    %c0_i32_0 = arith.constant 0 : i32
    %c0_i32_1 = arith.constant 0 : i32
    return %c0_i32, %c0_i32_0 : i32, i32
  }
  func.func @transform_3(%arg0: i32) -> (i32, i32, i32) {
    %c0_i32 = arith.constant 0 : i32
    %c0_i32_0 = arith.constant 0 : i32
    %c0_i32_1 = arith.constant 0 : i32
    return %arg0, %c0_i32, %c0_i32_0 : i32, i32, i32
  }
}

module attributes {stable_mosaic.version = 11 : i64} {
  func.func @_linear_kernel(%arg0: i32, %arg1: i32, %arg2: memref<2x2048xbf16, #tpu.memory_space<vmem>>, %arg3: memref<128x2048xbf16, #tpu.memory_space<vmem>>, %arg4: memref<1x128xf32, #tpu.memory_space<vmem>>, %arg5: memref<2x128xf32, #tpu.memory_space<vmem>>, %arg6: memref<2x128xf32, #tpu.memory_space<vmem>>) attributes {dimension_semantics = [#tpu.dimension_semantics<parallel>, #tpu.dimension_semantics<arbitrary>], iteration_bounds = array<i64: 1, 1>, scalar_prefetch = 0 : i64, scratch_operands = 1 : i64, tpu.core_type = #tpu.core_type<tc>, window_params = [{transform_indices = @transform_0, window_bounds = array<i64: 2, 2048>}, {transform_indices = @transform_1, window_bounds = array<i64: 128, 2048>}, {pipeline_mode = #tpu.pipeline_mode<synchronous>, transform_indices = @transform_2, window_bounds = array<i64: 1, 128>}, {transform_indices = @transform_3, window_bounds = array<i64: 2, 128>}]} {
    %c0_i32 = arith.constant 0 : i32
    %0 = arith.cmpi eq, %arg1, %c0_i32 : i32
    %1 = arith.extui %0 : i1 to i32
    %c0_i32_0 = arith.constant 0 : i32
    %2 = arith.cmpi ne, %1, %c0_i32_0 : i32
    scf.if %2 {
      %cst_10 = arith.constant 0.000000e+00 : f32
      %12 = vector.broadcast %cst_10 : f32 to vector<2x128xf32>
      %c0_11 = arith.constant 0 : index
      %c0_12 = arith.constant 0 : index
      %13 = vector.load %arg6[%c0_11, %c0_12] : memref<2x128xf32, #tpu.memory_space<vmem>>, vector<2x128xf32>
      tpu.vector_store %arg6[%c0_11, %c0_12], %12 {strides = array<i32>} : memref<2x128xf32, #tpu.memory_space<vmem>>, vector<2x128xf32>,
    } else {
    }
    %c0 = arith.constant 0 : index
    %c0_1 = arith.constant 0 : index
    %3 = vector.load %arg6[%c0, %c0_1] : memref<2x128xf32, #tpu.memory_space<vmem>>, vector<2x128xf32>
    %c0_2 = arith.constant 0 : index
    %c0_3 = arith.constant 0 : index
    %4 = vector.load %arg2[%c0_2, %c0_3] : memref<2x2048xbf16, #tpu.memory_space<vmem>>, vector<2x2048xbf16>
    %c0_4 = arith.constant 0 : index
    %c0_5 = arith.constant 0 : index
    %5 = vector.load %arg3[%c0_4, %c0_5] : memref<128x2048xbf16, #tpu.memory_space<vmem>>, vector<128x2048xbf16>
    %cst = arith.constant dense<0.000000e+00> : vector<2x128xf32>
    %6 = tpu.matmul %4, %5, %cst {dimension_numbers = #tpu.dot_dimension_numbers<[1], [1], [0], [0], [0, 0, 1, 0], [], []>} : vector<2x2048xbf16>, vector<128x2048xbf16>, vector<2x128xf32> -> vector<2x128xf32>
    %7 = arith.addf %3, %6 : vector<2x128xf32>
    %c0_6 = arith.constant 0 : index
    %c0_7 = arith.constant 0 : index
    %8 = vector.load %arg6[%c0_6, %c0_7] : memref<2x128xf32, #tpu.memory_space<vmem>>, vector<2x128xf32>
    tpu.vector_store %arg6[%c0_6, %c0_7], %7 {strides = array<i32>} : memref<2x128xf32, #tpu.memory_space<vmem>>, vector<2x128xf32>,
    %c0_i32_8 = arith.constant 0 : i32
    %9 = arith.cmpi eq, %arg1, %c0_i32_8 : i32
    %10 = arith.extui %9 : i1 to i32
    %c0_i32_9 = arith.constant 0 : i32
    %11 = arith.cmpi ne, %10, %c0_i32_9 : i32
    scf.if %11 {
      %c0_10 = arith.constant 0 : index
      %c0_11 = arith.constant 0 : index
      %12 = vector.load %arg6[%c0_10, %c0_11] : memref<2x128xf32, #tpu.memory_space<vmem>>, vector<2x128xf32>
      %c0_12 = arith.constant 0 : index
      %c0_13 = arith.constant 0 : index
      %13 = vector.load %arg4[%c0_12, %c0_13] : memref<1x128xf32, #tpu.memory_space<vmem>>, vector<1x128xf32>
      %14 = vector.broadcast %13 : vector<1x128xf32> to vector<2x128xf32>
      %15 = arith.addf %12, %14 : vector<2x128xf32>
      %c0_14 = arith.constant 0 : index
      %c0_15 = arith.constant 0 : index
      %16 = vector.load %arg5[%c0_14, %c0_15] : memref<2x128xf32, #tpu.memory_space<vmem>>, vector<2x128xf32>
      tpu.vector_store %arg5[%c0_14, %c0_15], %15 {strides = array<i32>} : memref<2x128xf32, #tpu.memory_space<vmem>>, vector<2x128xf32>,
    } else {
    }
    return
  }
  func.func @transform_0(%arg0: i32, %arg1: i32) -> (i32, i32) {
    %c0_i32 = arith.constant 0 : i32
    return %arg0, %arg1 : i32, i32
  }
  func.func @transform_1(%arg0: i32, %arg1: i32) -> (i32, i32) {
    %c0_i32 = arith.constant 0 : i32
    %c0_i32_0 = arith.constant 0 : i32
    return %c0_i32, %arg1 : i32, i32
  }
  func.func @transform_2(%arg0: i32, %arg1: i32) -> (i32, i32) {
    %c0_i32 = arith.constant 0 : i32
    %c0_i32_0 = arith.constant 0 : i32
    %c0_i32_1 = arith.constant 0 : i32
    return %c0_i32, %c0_i32_0 : i32, i32
  }
  func.func @transform_3(%arg0: i32, %arg1: i32) -> (i32, i32) {
    %c0_i32 = arith.constant 0 : i32
    %c0_i32_0 = arith.constant 0 : i32
    return %arg0, %c0_i32 : i32, i32
  }
}

</mosaic_0001>

<llo_original>
// kernel: alexnet_forward.3
$region0: #{alexnet_forward.3}
  #allocation0 [shape = 'u32[]', space=smem, size = 0x4, offset = 0x4, fixed_abs, tag = 'smem constant byte address 0x4 - core index']
  #allocation1 [shape = 'u32[144,128]{1,0:T(1,128)}', space=vmem, size = 0x12000, scoped, tag = 'internal scratch']
  #allocation2 [shape = 'f32[2,128]{1,0:T(2,128)}', space=vmem, size = 0x400, scoped, tag = 'scratch operand']
  %s0 = inlined_call_operand.vmem [shape: bf16[2,2048], index: 0, kind: input, shape index: {}]
  %s1 = inlined_call_operand.vmem [shape: bf16[128,2048], index: 1, kind: input, shape index: {}]
  %s2 = inlined_call_operand.vmem [shape: f32[1,128], index: 2, kind: input, shape index: {}]
  %s3 = inlined_call_operand.hbm [shape: f32[2,128], index: 3, kind: output, shape index: {}]
  %s4 = sld [smem:[#allocation0]]
  $region30: #{alexnet_forward.3} parent=0
    _
  %s6 = ssub.s32 1, %s4
  %s7 = scalar_select 0, %s6, %s4
  $region1: #{alexnet_forward.3} parent=0
    #allocation3 [shape = 'u8[1024]{0}', space=vmem, size = 0x400, scoped, tag = 'output window, operand 0, single buffered']
    #allocation4 [shape = 's32[1]{0}', space=sflag, size = 0x4, scoped, tag = 'scoped memory for alexnet_forward.3']
    %8 = vsyncpa [#allocation4], 0
    // Predicated region
    $region2: #{alexnet_forward.3} parent=1 // pred_check
      _
    $region3: #{alexnet_forward.3} parent=1 // pred_check_branch
      %10 = sbr.rel (0) target = $region5
    $region4: #{alexnet_forward.3} parent=1 // pred_region
      _
    $region5: #{alexnet_forward.3} parent=1 // pred_fallthru
      _
    // Predicated region
    $region6: #{alexnet_forward.3} parent=1 // pred_check
      _
    $region7: #{alexnet_forward.3} parent=1 // pred_check_branch
      %12 = sbr.rel (0) target = $region9
    $region8: #{alexnet_forward.3} parent=1 // pred_region
      _
    $region9: #{alexnet_forward.3} parent=1 // pred_fallthru
      _
    // Predicated region
    $region10: #{alexnet_forward.3} parent=1 // pred_check
      _
    $region11: #{alexnet_forward.3} parent=1 // pred_check_branch
      %14 = sbr.rel (0) target = $region13
    $region12: #{alexnet_forward.3} parent=1 // pred_region
      _
    $region13: #{alexnet_forward.3} parent=1 // pred_fallthru
      _
    %p16 = scmp.eq.s32.totalorder 0, 0
    // Predicated region
    $region14: #{alexnet_forward.3} parent=1 // pred_check
      %p17 = pneg %p16
    $region15: #{alexnet_forward.3} parent=1 // pred_check_branch
      %19 = sbr.rel (%p17) target = $region17
    $region16: #{alexnet_forward.3} parent=1 // pred_region
      %20 = vst [vmem:[#allocation2] sm:$0x3] 0.0
    $region17: #{alexnet_forward.3} parent=1 // pred_fallthru
      _
    %v21 = vld [vmem:[#allocation2] sm:$0x3]
    %v22 = vld [vmem:[%s0] sm:$0xff]
    %v23 = vld [vmem:[%s0 + $0x8] sm:$0xff]
    %v24 = vld [vmem:[%s1] sm:$0xff]
    %v25 = vld [vmem:[%s1 + $0x8] sm:$0xff]
    %v26 = vld [vmem:[%s1 + $0x10] sm:$0xff]
    %v27 = vld [vmem:[%s1 + $0x18] sm:$0xff]
    %v28 = vld [vmem:[%s1 + $0x20] sm:$0xff]
    %v29 = vld [vmem:[%s1 + $0x28] sm:$0xff]
    %v30 = vld [vmem:[%s1 + $0x30] sm:$0xff]
    %v31 = vld [vmem:[%s1 + $0x38] sm:$0xff]
    %v32 = vld [vmem:[%s1 + $0x40] sm:$0xff]
    %v33 = vld [vmem:[%s1 + $0x48] sm:$0xff]
    %v34 = vld [vmem:[%s1 + $0x50] sm:$0xff]
    %v35 = vld [vmem:[%s1 + $0x58] sm:$0xff]
    %v36 = vld [vmem:[%s1 + $0x60] sm:$0xff]
    %v37 = vld [vmem:[%s1 + $0x68] sm:$0xff]
    %v38 = vld [vmem:[%s1 + $0x70] sm:$0xff]
    %v39 = vld [vmem:[%s1 + $0x78] sm:$0xff]
    %v40 = vld [vmem:[%s1 + $0x80] sm:$0xff]
    %v41 = vld [vmem:[%s1 + $0x88] sm:$0xff]
    %v42 = vld [vmem:[%s1 + $0x90] sm:$0xff]
    %v43 = vld [vmem:[%s1 + $0x98] sm:$0xff]
    %v44 = vld [vmem:[%s1 + $0xa0] sm:$0xff]
    %v45 = vld [vmem:[%s1 + $0xa8] sm:$0xff]
    %v46 = vld [vmem:[%s1 + $0xb0] sm:$0xff]
    %v47 = vld [vmem:[%s1 + $0xb8] sm:$0xff]
    %v48 = vld [vmem:[%s1 + $0xc0] sm:$0xff]
    %v49 = vld [vmem:[%s1 + $0xc8] sm:$0xff]
    %v50 = vld [vmem:[%s1 + $0xd0] sm:$0xff]
    %v51 = vld [vmem:[%s1 + $0xd8] sm:$0xff]
    %v52 = vld [vmem:[%s1 + $0xe0] sm:$0xff]
    %v53 = vld [vmem:[%s1 + $0xe8] sm:$0xff]
    %v54 = vld [vmem:[%s1 + $0xf0] sm:$0xff]
    %v55 = vld [vmem:[%s1 + $0xf8] sm:$0xff]
    %v56 = vld [vmem:[%s1 + $0x100] sm:$0xff]
    %v57 = vld [vmem:[%s1 + $0x108] sm:$0xff]
    %v58 = vld [vmem:[%s1 + $0x110] sm:$0xff]
    %v59 = vld [vmem:[%s1 + $0x118] sm:$0xff]
    %v60 = vld [vmem:[%s1 + $0x120] sm:$0xff]
    %v61 = vld [vmem:[%s1 + $0x128] sm:$0xff]
    %v62 = vld [vmem:[%s1 + $0x130] sm:$0xff]
    %v63 = vld [vmem:[%s1 + $0x138] sm:$0xff]
    %v64 = vld [vmem:[%s1 + $0x140] sm:$0xff]
    %v65 = vld [vmem:[%s1 + $0x148] sm:$0xff]
    %v66 = vld [vmem:[%s1 + $0x150] sm:$0xff]
    %v67 = vld [vmem:[%s1 + $0x158] sm:$0xff]
    %v68 = vld [vmem:[%s1 + $0x160] sm:$0xff]
    %v69 = vld [vmem:[%s1 + $0x168] sm:$0xff]
    %v70 = vld [vmem:[%s1 + $0x170] sm:$0xff]
    %v71 = vld [vmem:[%s1 + $0x178] sm:$0xff]
    %v72 = vld [vmem:[%s1 + $0x180] sm:$0xff]
    %v73 = vld [vmem:[%s1 + $0x188] sm:$0xff]
    %v74 = vld [vmem:[%s1 + $0x190] sm:$0xff]
    %v75 = vld [vmem:[%s1 + $0x198] sm:$0xff]
    %v76 = vld [vmem:[%s1 + $0x1a0] sm:$0xff]
    %v77 = vld [vmem:[%s1 + $0x1a8] sm:$0xff]
    %v78 = vld [vmem:[%s1 + $0x1b0] sm:$0xff]
    %v79 = vld [vmem:[%s1 + $0x1b8] sm:$0xff]
    %v80 = vld [vmem:[%s1 + $0x1c0] sm:$0xff]
    %v81 = vld [vmem:[%s1 + $0x1c8] sm:$0xff]
    %v82 = vld [vmem:[%s1 + $0x1d0] sm:$0xff]
    %v83 = vld [vmem:[%s1 + $0x1d8] sm:$0xff]
    %v84 = vld [vmem:[%s1 + $0x1e0] sm:$0xff]
    %v85 = vld [vmem:[%s1 + $0x1e8] sm:$0xff]
    %v86 = vld [vmem:[%s1 + $0x1f0] sm:$0xff]
    %v87 = vld [vmem:[%s1 + $0x1f8] sm:$0xff]
    %v88 = vld [vmem:[%s1 + $0x200] sm:$0xff]
    %v89 = vld [vmem:[%s1 + $0x208] sm:$0xff]
    %v90 = vld [vmem:[%s1 + $0x210] sm:$0xff]
    %v91 = vld [vmem:[%s1 + $0x218] sm:$0xff]
    %v92 = vld [vmem:[%s1 + $0x220] sm:$0xff]
    %v93 = vld [vmem:[%s1 + $0x228] sm:$0xff]
    %v94 = vld [vmem:[%s1 + $0x230] sm:$0xff]
    %v95 = vld [vmem:[%s1 + $0x238] sm:$0xff]
    %v96 = vld [vmem:[%s1 + $0x240] sm:$0xff]
    %v97 = vld [vmem:[%s1 + $0x248] sm:$0xff]
    %v98 = vld [vmem:[%s1 + $0x250] sm:$0xff]
    %v99 = vld [vmem:[%s1 + $0x258] sm:$0xff]
    %v100 = vld [vmem:[%s1 + $0x260] sm:$0xff]
    %v101 = vld [vmem:[%s1 + $0x268] sm:$0xff]
    %v102 = vld [vmem:[%s1 + $0x270] sm:$0xff]
    %v103 = vld [vmem:[%s1 + $0x278] sm:$0xff]
    %v104 = vld [vmem:[%s1 + $0x280] sm:$0xff]
    %v105 = vld [vmem:[%s1 + $0x288] sm:$0xff]
    %v106 = vld [vmem:[%s1 + $0x290] sm:$0xff]
    %v107 = vld [vmem:[%s1 + $0x298] sm:$0xff]
    %v108 = vld [vmem:[%s1 + $0x2a0] sm:$0xff]
    %v109 = vld [vmem:[%s1 + $0x2a8] sm:$0xff]
    %v110 = vld [vmem:[%s1 + $0x2b0] sm:$0xff]
    %v111 = vld [vmem:[%s1 + $0x2b8] sm:$0xff]
    %v112 = vld [vmem:[%s1 + $0x2c0] sm:$0xff]
    %v113 = vld [vmem:[%s1 + $0x2c8] sm:$0xff]
    %v114 = vld [vmem:[%s1 + $0x2d0] sm:$0xff]
    %v115 = vld [vmem:[%s1 + $0x2d8] sm:$0xff]
    %v116 = vld [vmem:[%s1 + $0x2e0] sm:$0xff]
    %v117 = vld [vmem:[%s1 + $0x2e8] sm:$0xff]
    %v118 = vld [vmem:[%s1 + $0x2f0] sm:$0xff]
    %v119 = vld [vmem:[%s1 + $0x2f8] sm:$0xff]
    %v120 = vld [vmem:[%s1 + $0x300] sm:$0xff]
    %v121 = vld [vmem:[%s1 + $0x308] sm:$0xff]
    %v122 = vld [vmem:[%s1 + $0x310] sm:$0xff]
    %v123 = vld [vmem:[%s1 + $0x318] sm:$0xff]
    %v124 = vld [vmem:[%s1 + $0x320] sm:$0xff]
    %v125 = vld [vmem:[%s1 + $0x328] sm:$0xff]
    %v126 = vld [vmem:[%s1 + $0x330] sm:$0xff]
    %v127 = vld [vmem:[%s1 + $0x338] sm:$0xff]
    %v128 = vld [vmem:[%s1 + $0x340] sm:$0xff]
    %v129 = vld [vmem:[%s1 + $0x348] sm:$0xff]
    %v130 = vld [vmem:[%s1 + $0x350] sm:$0xff]
    %v131 = vld [vmem:[%s1 + $0x358] sm:$0xff]
    %v132 = vld [vmem:[%s1 + $0x360] sm:$0xff]
    %v133 = vld [vmem:[%s1 + $0x368] sm:$0xff]
    %v134 = vld [vmem:[%s1 + $0x370] sm:$0xff]
    %v135 = vld [vmem:[%s1 + $0x378] sm:$0xff]
    %v136 = vld [vmem:[%s1 + $0x380] sm:$0xff]
    %v137 = vld [vmem:[%s1 + $0x388] sm:$0xff]
    %v138 = vld [vmem:[%s1 + $0x390] sm:$0xff]
    %v139 = vld [vmem:[%s1 + $0x398] sm:$0xff]
    %v140 = vld [vmem:[%s1 + $0x3a0] sm:$0xff]
    %v141 = vld [vmem:[%s1 + $0x3a8] sm:$0xff]
    %v142 = vld [vmem:[%s1 + $0x3b0] sm:$0xff]
    %v143 = vld [vmem:[%s1 + $0x3b8] sm:$0xff]
    %v144 = vld [vmem:[%s1 + $0x3c0] sm:$0xff]
    %v145 = vld [vmem:[%s1 + $0x3c8] sm:$0xff]
    %v146 = vld [vmem:[%s1 + $0x3d0] sm:$0xff]
    %v147 = vld [vmem:[%s1 + $0x3d8] sm:$0xff]
    %v148 = vld [vmem:[%s1 + $0x3e0] sm:$0xff]
    %v149 = vld [vmem:[%s1 + $0x3e8] sm:$0xff]
    %v150 = vld [vmem:[%s1 + $0x3f0] sm:$0xff]
    %v151 = vld [vmem:[%s1 + $0x3f8] sm:$0xff]
    %v154 = vcombine.high %v22, %v22
    %v156 = vunpack.c.l.s4 1966171168
    %v157 = vunpack.c.0.s8 %v156
    %v158 = vlaneseq
    %v159 = vshrl.u32 %v158, 7
    %v160 = vsub.s32 %v157, %v159
    %v161 = vrot.slane %v22, %v160
    %v163 = vunpack.c.l.s4 1966171168
    %v164 = vunpack.c.0.s8 %v163
    %v165 = vlaneseq
    %v166 = vshrl.u32 %v165, 7
    %v167 = vsub.s32 %v164, %v166
    %v168 = vrot.slane %v154, %v167
    %v169 = vcombine.high %v161, %v161
    %v170 = vcombine.high %v168, %v168
    %v172 = vunpack.c.l.s4 1966171168
    %v173 = vunpack.c.0.s8 %v172
    %v174 = vlaneseq
    %v175 = vshrl.u32 %v174, 7
    %v176 = vsub.s32 %v173, %v175
    %v177 = vrot.slane %v161, %v176
    %v179 = vunpack.c.l.s4 1966171168
    %v180 = vunpack.c.0.s8 %v179
    %v181 = vlaneseq
    %v182 = vshrl.u32 %v181, 7
    %v183 = vsub.s32 %v180, %v182
    %v184 = vrot.slane %v168, %v183
    %v186 = vunpack.c.l.s4 1966171168
    %v187 = vunpack.c.0.s8 %v186
    %v188 = vlaneseq
    %v189 = vshrl.u32 %v188, 7
    %v190 = vsub.s32 %v187, %v189
    %v191 = vrot.slane %v169, %v190
    %v193 = vunpack.c.l.s4 1966171168
    %v194 = vunpack.c.0.s8 %v193
    %v195 = vlaneseq
    %v196 = vshrl.u32 %v195, 7
    %v197 = vsub.s32 %v194, %v196
    %v198 = vrot.slane %v170, %v197
    %v199 = vcombine.high %v177, %v177
    %v200 = vcombine.high %v184, %v184
    %v201 = vcombine.high %v191, %v191
    %v202 = vcombine.high %v198, %v198
    %v203 = vcombine.high %v23, %v23
    %v205 = vunpack.c.l.s4 1966171168
    %v206 = vunpack.c.0.s8 %v205
    %v207 = vlaneseq
    %v208 = vshrl.u32 %v207, 7
    %v209 = vsub.s32 %v206, %v208
    %v210 = vrot.slane %v23, %v209
    %v212 = vunpack.c.l.s4 1966171168
    %v213 = vunpack.c.0.s8 %v212
    %v214 = vlaneseq
    %v215 = vshrl.u32 %v214, 7
    %v216 = vsub.s32 %v213, %v215
    %v217 = vrot.slane %v203, %v216
    %v218 = vcombine.high %v210, %v210
    %v219 = vcombine.high %v217, %v217
    %v221 = vunpack.c.l.s4 1966171168
    %v222 = vunpack.c.0.s8 %v221
    %v223 = vlaneseq
    %v224 = vshrl.u32 %v223, 7
    %v225 = vsub.s32 %v222, %v224
    %v226 = vrot.slane %v210, %v225
    %v228 = vunpack.c.l.s4 1966171168
    %v229 = vunpack.c.0.s8 %v228
    %v230 = vlaneseq
    %v231 = vshrl.u32 %v230, 7
    %v232 = vsub.s32 %v229, %v231
    %v233 = vrot.slane %v217, %v232
    %v235 = vunpack.c.l.s4 1966171168
    %v236 = vunpack.c.0.s8 %v235
    %v237 = vlaneseq
    %v238 = vshrl.u32 %v237, 7
    %v239 = vsub.s32 %v236, %v238
    %v240 = vrot.slane %v218, %v239
    %v242 = vunpack.c.l.s4 1966171168
    %v243 = vunpack.c.0.s8 %v242
    %v244 = vlaneseq
    %v245 = vshrl.u32 %v244, 7
    %v246 = vsub.s32 %v243, %v245
    %v247 = vrot.slane %v219, %v246
    %v248 = vcombine.high %v226, %v226
    %v249 = vcombine.high %v233, %v233
    %v250 = vcombine.high %v240, %v240
    %v251 = vcombine.high %v247, %v247
    %v396 = vunpack.c.l.b16 %v24
    %v397 = vunpack.c.h.b16 %v24
    %v398 = vunpack.c.l.b16 %v25
    %v399 = vunpack.c.h.b16 %v25
    %v400 = vunpack.c.l.b16 %v26
    %v401 = vunpack.c.h.b16 %v26
    %v402 = vunpack.c.l.b16 %v27
    %v403 = vunpack.c.h.b16 %v27
    %v404 = vunpack.c.l.b16 %v28
    %v405 = vunpack.c.h.b16 %v28
    %v406 = vunpack.c.l.b16 %v29
    %v407 = vunpack.c.h.b16 %v29
    %v408 = vunpack.c.l.b16 %v30
    %v409 = vunpack.c.h.b16 %v30
    %v410 = vunpack.c.l.b16 %v31
    %v411 = vunpack.c.h.b16 %v31
    %v412 = vunpack.c.l.b16 %v32
    %v413 = vunpack.c.h.b16 %v32
    %v414 = vunpack.c.l.b16 %v33
    %v415 = vunpack.c.h.b16 %v33
    %v416 = vunpack.c.l.b16 %v34
    %v417 = vunpack.c.h.b16 %v34
    %v418 = vunpack.c.l.b16 %v35
    %v419 = vunpack.c.h.b16 %v35
    %v420 = vunpack.c.l.b16 %v36
    %v421 = vunpack.c.h.b16 %v36
    %v422 = vunpack.c.l.b16 %v37
    %v423 = vunpack.c.h.b16 %v37
    %v424 = vunpack.c.l.b16 %v38
    %v425 = vunpack.c.h.b16 %v38
    %v426 = vunpack.c.l.b16 %v39
    %v427 = vunpack.c.h.b16 %v39
    %v428 = vunpack.c.l.b16 %v40
    %v429 = vunpack.c.h.b16 %v40
    %v430 = vunpack.c.l.b16 %v41
    %v431 = vunpack.c.h.b16 %v41
    %v432 = vunpack.c.l.b16 %v42
    %v433 = vunpack.c.h.b16 %v42
    %v434 = vunpack.c.l.b16 %v43
    %v435 = vunpack.c.h.b16 %v43
    %v436 = vunpack.c.l.b16 %v44
    %v437 = vunpack.c.h.b16 %v44
    %v438 = vunpack.c.l.b16 %v45
    %v439 = vunpack.c.h.b16 %v45
    %v440 = vunpack.c.l.b16 %v46
    %v441 = vunpack.c.h.b16 %v46
    %v442 = vunpack.c.l.b16 %v47
    %v443 = vunpack.c.h.b16 %v47
    %v444 = vunpack.c.l.b16 %v48
    %v445 = vunpack.c.h.b16 %v48
    %v446 = vunpack.c.l.b16 %v49
    %v447 = vunpack.c.h.b16 %v49
    %v448 = vunpack.c.l.b16 %v50
    %v449 = vunpack.c.h.b16 %v50
    %v450 = vunpack.c.l.b16 %v51
    %v451 = vunpack.c.h.b16 %v51
    %v452 = vunpack.c.l.b16 %v52
    %v453 = vunpack.c.h.b16 %v52
    %v454 = vunpack.c.l.b16 %v53
    %v455 = vunpack.c.h.b16 %v53
    %v456 = vunpack.c.l.b16 %v54
    %v457 = vunpack.c.h.b16 %v54
    %v458 = vunpack.c.l.b16 %v55
    %v459 = vunpack.c.h.b16 %v55
    %v460 = vunpack.c.l.b16 %v56
    %v461 = vunpack.c.h.b16 %v56
    %v462 = vunpack.c.l.b16 %v57
    %v463 = vunpack.c.h.b16 %v57
    %v464 = vunpack.c.l.b16 %v58
    %v465 = vunpack.c.h.b16 %v58
    %v466 = vunpack.c.l.b16 %v59
    %v467 = vunpack.c.h.b16 %v59
    %v468 = vunpack.c.l.b16 %v60
    %v469 = vunpack.c.h.b16 %v60
    %v470 = vunpack.c.l.b16 %v61
    %v471 = vunpack.c.h.b16 %v61
    %v472 = vunpack.c.l.b16 %v62
    %v473 = vunpack.c.h.b16 %v62
    %v474 = vunpack.c.l.b16 %v63
    %v475 = vunpack.c.h.b16 %v63
    %v476 = vunpack.c.l.b16 %v64
    %v477 = vunpack.c.h.b16 %v64
    %v478 = vunpack.c.l.b16 %v65
    %v479 = vunpack.c.h.b16 %v65
    %v480 = vunpack.c.l.b16 %v66
    %v481 = vunpack.c.h.b16 %v66
    %v482 = vunpack.c.l.b16 %v67
    %v483 = vunpack.c.h.b16 %v67
    %v484 = vunpack.c.l.b16 %v68
    %v485 = vunpack.c.h.b16 %v68
    %v486 = vunpack.c.l.b16 %v69
    %v487 = vunpack.c.h.b16 %v69
    %v488 = vunpack.c.l.b16 %v70
    %v489 = vunpack.c.h.b16 %v70
    %v490 = vunpack.c.l.b16 %v71
    %v491 = vunpack.c.h.b16 %v71
    %v492 = vunpack.c.l.b16 %v72
    %v493 = vunpack.c.h.b16 %v72
    %v494 = vunpack.c.l.b16 %v73
    %v495 = vunpack.c.h.b16 %v73
    %v496 = vunpack.c.l.b16 %v74
    %v497 = vunpack.c.h.b16 %v74
    %v498 = vunpack.c.l.b16 %v75
    %v499 = vunpack.c.h.b16 %v75
    %v500 = vunpack.c.l.b16 %v76
    %v501 = vunpack.c.h.b16 %v76
    %v502 = vunpack.c.l.b16 %v77
    %v503 = vunpack.c.h.b16 %v77
    %v504 = vunpack.c.l.b16 %v78
    %v505 = vunpack.c.h.b16 %v78
    %v506 = vunpack.c.l.b16 %v79
    %v507 = vunpack.c.h.b16 %v79
    %v508 = vunpack.c.l.b16 %v80
    %v509 = vunpack.c.h.b16 %v80
    %v510 = vunpack.c.l.b16 %v81
    %v511 = vunpack.c.h.b16 %v81
    %v512 = vunpack.c.l.b16 %v82
    %v513 = vunpack.c.h.b16 %v82
    %v514 = vunpack.c.l.b16 %v83
    %v515 = vunpack.c.h.b16 %v83
    %v516 = vunpack.c.l.b16 %v84
    %v517 = vunpack.c.h.b16 %v84
    %v518 = vunpack.c.l.b16 %v85
    %v519 = vunpack.c.h.b16 %v85
    %v520 = vunpack.c.l.b16 %v86
    %v521 = vunpack.c.h.b16 %v86
    %v522 = vunpack.c.l.b16 %v87
    %v523 = vunpack.c.h.b16 %v87
    %v524 = vunpack.c.l.b16 %v88
    %v525 = vunpack.c.h.b16 %v88
    %v526 = vunpack.c.l.b16 %v89
    %v527 = vunpack.c.h.b16 %v89
    %v528 = vunpack.c.l.b16 %v90
    %v529 = vunpack.c.h.b16 %v90
    %v530 = vunpack.c.l.b16 %v91
    %v531 = vunpack.c.h.b16 %v91
    %v532 = vunpack.c.l.b16 %v92
    %v533 = vunpack.c.h.b16 %v92
    %v534 = vunpack.c.l.b16 %v93
    %v535 = vunpack.c.h.b16 %v93
    %v536 = vunpack.c.l.b16 %v94
    %v537 = vunpack.c.h.b16 %v94
    %v538 = vunpack.c.l.b16 %v95
    %v539 = vunpack.c.h.b16 %v95
    %v540 = vunpack.c.l.b16 %v96
    %v541 = vunpack.c.h.b16 %v96
    %v542 = vunpack.c.l.b16 %v97
    %v543 = vunpack.c.h.b16 %v97
    %v544 = vunpack.c.l.b16 %v98
    %v545 = vunpack.c.h.b16 %v98
    %v546 = vunpack.c.l.b16 %v99
    %v547 = vunpack.c.h.b16 %v99
    %v548 = vunpack.c.l.b16 %v100
    %v549 = vunpack.c.h.b16 %v100
    %v550 = vunpack.c.l.b16 %v101
    %v551 = vunpack.c.h.b16 %v101
    %v552 = vunpack.c.l.b16 %v102
    %v553 = vunpack.c.h.b16 %v102
    %v554 = vunpack.c.l.b16 %v103
    %v555 = vunpack.c.h.b16 %v103
    %v556 = vunpack.c.l.b16 %v104
    %v557 = vunpack.c.h.b16 %v104
    %v558 = vunpack.c.l.b16 %v105
    %v559 = vunpack.c.h.b16 %v105
    %v560 = vunpack.c.l.b16 %v106
    %v561 = vunpack.c.h.b16 %v106
    %v562 = vunpack.c.l.b16 %v107
    %v563 = vunpack.c.h.b16 %v107
    %v564 = vunpack.c.l.b16 %v108
    %v565 = vunpack.c.h.b16 %v108
    %v566 = vunpack.c.l.b16 %v109
    %v567 = vunpack.c.h.b16 %v109
    %v568 = vunpack.c.l.b16 %v110
    %v569 = vunpack.c.h.b16 %v110
    %v570 = vunpack.c.l.b16 %v111
    %v571 = vunpack.c.h.b16 %v111
    %v572 = vunpack.c.l.b16 %v112
    %v573 = vunpack.c.h.b16 %v112
    %v574 = vunpack.c.l.b16 %v113
    %v575 = vunpack.c.h.b16 %v113
    %v576 = vunpack.c.l.b16 %v114
    %v577 = vunpack.c.h.b16 %v114
    %v578 = vunpack.c.l.b16 %v115
    %v579 = vunpack.c.h.b16 %v115
    %v580 = vunpack.c.l.b16 %v116
    %v581 = vunpack.c.h.b16 %v116
    %v582 = vunpack.c.l.b16 %v117
    %v583 = vunpack.c.h.b16 %v117
    %v584 = vunpack.c.l.b16 %v118
    %v585 = vunpack.c.h.b16 %v118
    %v586 = vunpack.c.l.b16 %v119
    %v587 = vunpack.c.h.b16 %v119
    %v588 = vunpack.c.l.b16 %v120
    %v589 = vunpack.c.h.b16 %v120
    %v590 = vunpack.c.l.b16 %v121
    %v591 = vunpack.c.h.b16 %v121
    %v592 = vunpack.c.l.b16 %v122
    %v593 = vunpack.c.h.b16 %v122
    %v594 = vunpack.c.l.b16 %v123
    %v595 = vunpack.c.h.b16 %v123
    %v596 = vunpack.c.l.b16 %v124
    %v597 = vunpack.c.h.b16 %v124
    %v598 = vunpack.c.l.b16 %v125
    %v599 = vunpack.c.h.b16 %v125
    %v600 = vunpack.c.l.b16 %v126
    %v601 = vunpack.c.h.b16 %v126
    %v602 = vunpack.c.l.b16 %v127
    %v603 = vunpack.c.h.b16 %v127
    %v604 = vunpack.c.l.b16 %v128
    %v605 = vunpack.c.h.b16 %v128
    %v606 = vunpack.c.l.b16 %v129
    %v607 = vunpack.c.h.b16 %v129
    %v608 = vunpack.c.l.b16 %v130
    %v609 = vunpack.c.h.b16 %v130
    %v610 = vunpack.c.l.b16 %v131
    %v611 = vunpack.c.h.b16 %v131
    %v612 = vunpack.c.l.b16 %v132
    %v613 = vunpack.c.h.b16 %v132
    %v614 = vunpack.c.l.b16 %v133
    %v615 = vunpack.c.h.b16 %v133
    %v616 = vunpack.c.l.b16 %v134
    %v617 = vunpack.c.h.b16 %v134
    %v618 = vunpack.c.l.b16 %v135
    %v619 = vunpack.c.h.b16 %v135
    %v620 = vunpack.c.l.b16 %v136
    %v621 = vunpack.c.h.b16 %v136
    %v622 = vunpack.c.l.b16 %v137
    %v623 = vunpack.c.h.b16 %v137
    %v624 = vunpack.c.l.b16 %v138
    %v625 = vunpack.c.h.b16 %v138
    %v626 = vunpack.c.l.b16 %v139
    %v627 = vunpack.c.h.b16 %v139
    %v628 = vunpack.c.l.b16 %v140
    %v629 = vunpack.c.h.b16 %v140
    %v630 = vunpack.c.l.b16 %v141
    %v631 = vunpack.c.h.b16 %v141
    %v632 = vunpack.c.l.b16 %v142
    %v633 = vunpack.c.h.b16 %v142
    %v634 = vunpack.c.l.b16 %v143
    %v635 = vunpack.c.h.b16 %v143
    %v636 = vunpack.c.l.b16 %v144
    %v637 = vunpack.c.h.b16 %v144
    %v638 = vunpack.c.l.b16 %v145
    %v639 = vunpack.c.h.b16 %v145
    %v640 = vunpack.c.l.b16 %v146
    %v641 = vunpack.c.h.b16 %v146
    %v642 = vunpack.c.l.b16 %v147
    %v643 = vunpack.c.h.b16 %v147
    %v644 = vunpack.c.l.b16 %v148
    %v645 = vunpack.c.h.b16 %v148
    %v646 = vunpack.c.l.b16 %v149
    %v647 = vunpack.c.h.b16 %v149
    %v648 = vunpack.c.l.b16 %v150
    %v649 = vunpack.c.h.b16 %v150
    %v650 = vunpack.c.l.b16 %v151
    %v651 = vunpack.c.h.b16 %v151
    %v652 = vpack.c.b16 %v412, %v396
    %v653 = vpack.c.b16 %v413, %v397
    %v654 = vpack.c.b16 %v414, %v398
    %v655 = vpack.c.b16 %v415, %v399
    %v656 = vpack.c.b16 %v416, %v400
    %v657 = vpack.c.b16 %v417, %v401
    %v658 = vpack.c.b16 %v418, %v402
    %v659 = vpack.c.b16 %v419, %v403
    %v660 = vpack.c.b16 %v420, %v404
    %v661 = vpack.c.b16 %v421, %v405
    %v662 = vpack.c.b16 %v422, %v406
    %v663 = vpack.c.b16 %v423, %v407
    %v664 = vpack.c.b16 %v424, %v408
    %v665 = vpack.c.b16 %v425, %v409
    %v666 = vpack.c.b16 %v426, %v410
    %v667 = vpack.c.b16 %v427, %v411
    %v668 = vpack.c.b16 %v444, %v428
    %v669 = vpack.c.b16 %v445, %v429
    %v670 = vpack.c.b16 %v446, %v430
    %v671 = vpack.c.b16 %v447, %v431
    %v672 = vpack.c.b16 %v448, %v432
    %v673 = vpack.c.b16 %v449, %v433
    %v674 = vpack.c.b16 %v450, %v434
    %v675 = vpack.c.b16 %v451, %v435
    %v676 = vpack.c.b16 %v452, %v436
    %v677 = vpack.c.b16 %v453, %v437
    %v678 = vpack.c.b16 %v454, %v438
    %v679 = vpack.c.b16 %v455, %v439
    %v680 = vpack.c.b16 %v456, %v440
    %v681 = vpack.c.b16 %v457, %v441
    %v682 = vpack.c.b16 %v458, %v442
    %v683 = vpack.c.b16 %v459, %v443
    %v684 = vpack.c.b16 %v476, %v460
    %v685 = vpack.c.b16 %v477, %v461
    %v686 = vpack.c.b16 %v478, %v462
    %v687 = vpack.c.b16 %v479, %v463
    %v688 = vpack.c.b16 %v480, %v464
    %v689 = vpack.c.b16 %v481, %v465
    %v690 = vpack.c.b16 %v482, %v466
    %v691 = vpack.c.b16 %v483, %v467
    %v692 = vpack.c.b16 %v484, %v468
    %v693 = vpack.c.b16 %v485, %v469
    %v694 = vpack.c.b16 %v486, %v470
    %v695 = vpack.c.b16 %v487, %v471
    %v696 = vpack.c.b16 %v488, %v472
    %v697 = vpack.c.b16 %v489, %v473
    %v698 = vpack.c.b16 %v490, %v474
    %v699 = vpack.c.b16 %v491, %v475
    %v700 = vpack.c.b16 %v508, %v492
    %v701 = vpack.c.b16 %v509, %v493
    %v702 = vpack.c.b16 %v510, %v494
    %v703 = vpack.c.b16 %v511, %v495
    %v704 = vpack.c.b16 %v512, %v496
    %v705 = vpack.c.b16 %v513, %v497
    %v706 = vpack.c.b16 %v514, %v498
    %v707 = vpack.c.b16 %v515, %v499
    %v708 = vpack.c.b16 %v516, %v500
    %v709 = vpack.c.b16 %v517, %v501
    %v710 = vpack.c.b16 %v518, %v502
    %v711 = vpack.c.b16 %v519, %v503
    %v712 = vpack.c.b16 %v520, %v504
    %v713 = vpack.c.b16 %v521, %v505
    %v714 = vpack.c.b16 %v522, %v506
    %v715 = vpack.c.b16 %v523, %v507
    %v716 = vpack.c.b16 %v540, %v524
    %v717 = vpack.c.b16 %v541, %v525
    %v718 = vpack.c.b16 %v542, %v526
    %v719 = vpack.c.b16 %v543, %v527
    %v720 = vpack.c.b16 %v544, %v528
    %v721 = vpack.c.b16 %v545, %v529
    %v722 = vpack.c.b16 %v546, %v530
    %v723 = vpack.c.b16 %v547, %v531
    %v724 = vpack.c.b16 %v548, %v532
    %v725 = vpack.c.b16 %v549, %v533
    %v726 = vpack.c.b16 %v550, %v534
    %v727 = vpack.c.b16 %v551, %v535
    %v728 = vpack.c.b16 %v552, %v536
    %v729 = vpack.c.b16 %v553, %v537
    %v730 = vpack.c.b16 %v554, %v538
    %v731 = vpack.c.b16 %v555, %v539
    %v732 = vpack.c.b16 %v572, %v556
    %v733 = vpack.c.b16 %v573, %v557
    %v734 = vpack.c.b16 %v574, %v558
    %v735 = vpack.c.b16 %v575, %v559
    %v736 = vpack.c.b16 %v576, %v560
    %v737 = vpack.c.b16 %v577, %v561
    %v738 = vpack.c.b16 %v578, %v562
    %v739 = vpack.c.b16 %v579, %v563
    %v740 = vpack.c.b16 %v580, %v564
    %v741 = vpack.c.b16 %v581, %v565
    %v742 = vpack.c.b16 %v582, %v566
    %v743 = vpack.c.b16 %v583, %v567
    %v744 = vpack.c.b16 %v584, %v568
    %v745 = vpack.c.b16 %v585, %v569
    %v746 = vpack.c.b16 %v586, %v570
    %v747 = vpack.c.b16 %v587, %v571
    %v748 = vpack.c.b16 %v604, %v588
    %v749 = vpack.c.b16 %v605, %v589
    %v750 = vpack.c.b16 %v606, %v590
    %v751 = vpack.c.b16 %v607, %v591
    %v752 = vpack.c.b16 %v608, %v592
    %v753 = vpack.c.b16 %v609, %v593
    %v754 = vpack.c.b16 %v610, %v594
    %v755 = vpack.c.b16 %v611, %v595
    %v756 = vpack.c.b16 %v612, %v596
    %v757 = vpack.c.b16 %v613, %v597
    %v758 = vpack.c.b16 %v614, %v598
    %v759 = vpack.c.b16 %v615, %v599
    %v760 = vpack.c.b16 %v616, %v600
    %v761 = vpack.c.b16 %v617, %v601
    %v762 = vpack.c.b16 %v618, %v602
    %v763 = vpack.c.b16 %v619, %v603
    %v764 = vpack.c.b16 %v636, %v620
    %v765 = vpack.c.b16 %v637, %v621
    %v766 = vpack.c.b16 %v638, %v622
    %v767 = vpack.c.b16 %v639, %v623
    %v768 = vpack.c.b16 %v640, %v624
    %v769 = vpack.c.b16 %v641, %v625
    %v770 = vpack.c.b16 %v642, %v626
    %v771 = vpack.c.b16 %v643, %v627
    %v772 = vpack.c.b16 %v644, %v628
    %v773 = vpack.c.b16 %v645, %v629
    %v774 = vpack.c.b16 %v646, %v630
    %v775 = vpack.c.b16 %v647, %v631
    %v776 = vpack.c.b16 %v648, %v632
    %v777 = vpack.c.b16 %v649, %v633
    %v778 = vpack.c.b16 %v650, %v634
    %v779 = vpack.c.b16 %v651, %v635
    %908 = vmatprep.subr.bf16.mxu0 %v765
    %909 = vmatpush1.bf16.xpose.msra.mxu0 %v764
    %910 = vmatprep.subr.bf16.mxu0 %v749
    %911 = vmatpush1.bf16.xpose.msra.mxu0 %v748
    %912 = vmatprep.subr.bf16.mxu0 %v733
    %913 = vmatpush1.bf16.xpose.msra.mxu0 %v732
    %914 = vmatprep.subr.bf16.mxu0 %v717
    %915 = vmatpush1.bf16.xpose.msra.mxu0 %v716
    %916 = vmatprep.subr.bf16.mxu0 %v701
    %917 = vmatpush1.bf16.xpose.msra.mxu0 %v700
    %918 = vmatprep.subr.bf16.mxu0 %v685
    %919 = vmatpush1.bf16.xpose.msra.mxu0 %v684
    %920 = vmatprep.subr.bf16.mxu0 %v669
    %921 = vmatpush1.bf16.xpose.msra.mxu0 %v668
    %922 = vmatprep.subr.bf16.mxu0 %v653
    %923 = vmatpush1.bf16.xpose.msra.mxu0 %v652
    %924 = vmatprep.subr.bf16.mxu0 0
    %925 = vmatpush2.bf16.xpose.msra.mxu0 0
    %926 = vmatprep.subr.bf16.mxu0 0
    %927 = vmatpush2.bf16.xpose.msra.mxu0 0
    %928 = vmatprep.subr.bf16.mxu0 0
    %929 = vmatpush2.bf16.xpose.msra.mxu0 0
    %930 = vmatprep.subr.bf16.mxu0 0
    %931 = vmatpush2.bf16.xpose.msra.mxu0 0
    %932 = vmatprep.subr.bf16.mxu0 0
    %933 = vmatpush2.bf16.xpose.msra.mxu0 0
    %934 = vmatprep.subr.bf16.mxu0 0
    %935 = vmatpush2.bf16.xpose.msra.mxu0 0
    %936 = vmatprep.subr.bf16.mxu0 0
    %937 = vmatpush2.bf16.xpose.msra.mxu0 0
    %938 = vmatprep.subr.bf16.mxu0 0
    %939 = vmatpush2.bf16.xpose.msra.mxu0 0
    %940 = vmatprep.mubr.bf16.mxu0 %v191
    %941 = vmatmul.mubr.bf16.gmra.mxu0 %v177
    %v942 = vpop.f32.mrf.mxu0
    %v943 = vadd.f32 0.0, %v942
    %v944 = vpop.f32.mrf.mxu0
    %v945 = vpop.f32.mrf.mxu0
    %v946 = vpop.f32.mrf.mxu0
    %947 = vdwg.mxu0
    %948 = vmatprep.subr.bf16.mxu0 %v767
    %949 = vmatpush1.bf16.xpose.msra.mxu0 %v766
    %950 = vmatprep.subr.bf16.mxu0 %v751
    %951 = vmatpush1.bf16.xpose.msra.mxu0 %v750
    %952 = vmatprep.subr.bf16.mxu0 %v735
    %953 = vmatpush1.bf16.xpose.msra.mxu0 %v734
    %954 = vmatprep.subr.bf16.mxu0 %v719
    %955 = vmatpush1.bf16.xpose.msra.mxu0 %v718
    %956 = vmatprep.subr.bf16.mxu0 %v703
    %957 = vmatpush1.bf16.xpose.msra.mxu0 %v702
    %958 = vmatprep.subr.bf16.mxu0 %v687
    %959 = vmatpush1.bf16.xpose.msra.mxu0 %v686
    %960 = vmatprep.subr.bf16.mxu0 %v671
    %961 = vmatpush1.bf16.xpose.msra.mxu0 %v670
    %962 = vmatprep.subr.bf16.mxu0 %v655
    %963 = vmatpush1.bf16.xpose.msra.mxu0 %v654
    %964 = vmatprep.subr.bf16.mxu0 0
    %965 = vmatpush2.bf16.xpose.msra.mxu0 0
    %966 = vmatprep.subr.bf16.mxu0 0
    %967 = vmatpush2.bf16.xpose.msra.mxu0 0
    %968 = vmatprep.subr.bf16.mxu0 0
    %969 = vmatpush2.bf16.xpose.msra.mxu0 0
    %970 = vmatprep.subr.bf16.mxu0 0
    %971 = vmatpush2.bf16.xpose.msra.mxu0 0
    %972 = vmatprep.subr.bf16.mxu0 0
    %973 = vmatpush2.bf16.xpose.msra.mxu0 0
    %974 = vmatprep.subr.bf16.mxu0 0
    %975 = vmatpush2.bf16.xpose.msra.mxu0 0
    %976 = vmatprep.subr.bf16.mxu0 0
    %977 = vmatpush2.bf16.xpose.msra.mxu0 0
    %978 = vmatprep.subr.bf16.mxu0 0
    %979 = vmatpush2.bf16.xpose.msra.mxu0 0
    %980 = vmatprep.mubr.bf16.mxu0 %v201
    %981 = vmatmul.mubr.bf16.gmra.mxu0 %v199
    %v982 = vpop.f32.mrf.mxu0
    %v983 = vadd.f32 %v943, %v982
    %v984 = vpop.f32.mrf.mxu0
    %v985 = vpop.f32.mrf.mxu0
    %v986 = vpop.f32.mrf.mxu0
    %987 = vdwg.mxu0
    %988 = vmatprep.subr.bf16.mxu0 %v769
    %989 = vmatpush1.bf16.xpose.msra.mxu0 %v768
    %990 = vmatprep.subr.bf16.mxu0 %v753
    %991 = vmatpush1.bf16.xpose.msra.mxu0 %v752
    %992 = vmatprep.subr.bf16.mxu0 %v737
    %993 = vmatpush1.bf16.xpose.msra.mxu0 %v736
    %994 = vmatprep.subr.bf16.mxu0 %v721
    %995 = vmatpush1.bf16.xpose.msra.mxu0 %v720
    %996 = vmatprep.subr.bf16.mxu0 %v705
    %997 = vmatpush1.bf16.xpose.msra.mxu0 %v704
    %998 = vmatprep.subr.bf16.mxu0 %v689
    %999 = vmatpush1.bf16.xpose.msra.mxu0 %v688
    %1000 = vmatprep.subr.bf16.mxu0 %v673
    %1001 = vmatpush1.bf16.xpose.msra.mxu0 %v672
    %1002 = vmatprep.subr.bf16.mxu0 %v657
    %1003 = vmatpush1.bf16.xpose.msra.mxu0 %v656
    %1004 = vmatprep.subr.bf16.mxu0 0
    %1005 = vmatpush2.bf16.xpose.msra.mxu0 0
    %1006 = vmatprep.subr.bf16.mxu0 0
    %1007 = vmatpush2.bf16.xpose.msra.mxu0 0
    %1008 = vmatprep.subr.bf16.mxu0 0
    %1009 = vmatpush2.bf16.xpose.msra.mxu0 0
    %1010 = vmatprep.subr.bf16.mxu0 0
    %1011 = vmatpush2.bf16.xpose.msra.mxu0 0
    %1012 = vmatprep.subr.bf16.mxu0 0
    %1013 = vmatpush2.bf16.xpose.msra.mxu0 0
    %1014 = vmatprep.subr.bf16.mxu0 0
    %1015 = vmatpush2.bf16.xpose.msra.mxu0 0
    %1016 = vmatprep.subr.bf16.mxu0 0
    %1017 = vmatpush2.bf16.xpose.msra.mxu0 0
    %1018 = vmatprep.subr.bf16.mxu0 0
    %1019 = vmatpush2.bf16.xpose.msra.mxu0 0
    %1020 = vmatprep.mubr.bf16.mxu0 %v198
    %1021 = vmatmul.mubr.bf16.gmra.mxu0 %v184
    %v1022 = vpop.f32.mrf.mxu0
    %v1023 = vadd.f32 %v983, %v1022
    %v1024 = vpop.f32.mrf.mxu0
    %v1025 = vpop.f32.mrf.mxu0
    %v1026 = vpop.f32.mrf.mxu0
    %1027 = vdwg.mxu0
    %1028 = vmatprep.subr.bf16.mxu0 %v771
    %1029 = vmatpush1.bf16.xpose.msra.mxu0 %v770
    %1030 = vmatprep.subr.bf16.mxu0 %v755
    %1031 = vmatpush1.bf16.xpose.msra.mxu0 %v754
    %1032 = vmatprep.subr.bf16.mxu0 %v739
    %1033 = vmatpush1.bf16.xpose.msra.mxu0 %v738
    %1034 = vmatprep.subr.bf16.mxu0 %v723
    %1035 = vmatpush1.bf16.xpose.msra.mxu0 %v722
    %1036 = vmatprep.subr.bf16.mxu0 %v707
    %1037 = vmatpush1.bf16.xpose.msra.mxu0 %v706
    %1038 = vmatprep.subr.bf16.mxu0 %v691
    %1039 = vmatpush1.bf16.xpose.msra.mxu0 %v690
    %1040 = vmatprep.subr.bf16.mxu0 %v675
    %1041 = vmatpush1.bf16.xpose.msra.mxu0 %v674
    %1042 = vmatprep.subr.bf16.mxu0 %v659
    %1043 = vmatpush1.bf16.xpose.msra.mxu0 %v658
    %1044 = vmatprep.subr.bf16.mxu0 0
    %1045 = vmatpush2.bf16.xpose.msra.mxu0 0
    %1046 = vmatprep.subr.bf16.mxu0 0
    %1047 = vmatpush2.bf16.xpose.msra.mxu0 0
    %1048 = vmatprep.subr.bf16.mxu0 0
    %1049 = vmatpush2.bf16.xpose.msra.mxu0 0
    %1050 = vmatprep.subr.bf16.mxu0 0
    %1051 = vmatpush2.bf16.xpose.msra.mxu0 0
    %1052 = vmatprep.subr.bf16.mxu0 0
    %1053 = vmatpush2.bf16.xpose.msra.mxu0 0
    %1054 = vmatprep.subr.bf16.mxu0 0
    %1055 = vmatpush2.bf16.xpose.msra.mxu0 0
    %1056 = vmatprep.subr.bf16.mxu0 0
    %1057 = vmatpush2.bf16.xpose.msra.mxu0 0
    %1058 = vmatprep.subr.bf16.mxu0 0
    %1059 = vmatpush2.bf16.xpose.msra.mxu0 0
    %1060 = vmatprep.mubr.bf16.mxu0 %v202
    %1061 = vmatmul.mubr.bf16.gmra.mxu0 %v200
    %v1062 = vpop.f32.mrf.mxu0
    %v1063 = vadd.f32 %v1023, %v1062
    %v1064 = vpop.f32.mrf.mxu0
    %v1065 = vpop.f32.mrf.mxu0
    %v1066 = vpop.f32.mrf.mxu0
    %1067 = vdwg.mxu0
    %1068 = vmatprep.subr.bf16.mxu0 %v773
    %1069 = vmatpush1.bf16.xpose.msra.mxu0 %v772
    %1070 = vmatprep.subr.bf16.mxu0 %v757
    %1071 = vmatpush1.bf16.xpose.msra.mxu0 %v756
    %1072 = vmatprep.subr.bf16.mxu0 %v741
    %1073 = vmatpush1.bf16.xpose.msra.mxu0 %v740
    %1074 = vmatprep.subr.bf16.mxu0 %v725
    %1075 = vmatpush1.bf16.xpose.msra.mxu0 %v724
    %1076 = vmatprep.subr.bf16.mxu0 %v709
    %1077 = vmatpush1.bf16.xpose.msra.mxu0 %v708
    %1078 = vmatprep.subr.bf16.mxu0 %v693
    %1079 = vmatpush1.bf16.xpose.msra.mxu0 %v692
    %1080 = vmatprep.subr.bf16.mxu0 %v677
    %1081 = vmatpush1.bf16.xpose.msra.mxu0 %v676
    %1082 = vmatprep.subr.bf16.mxu0 %v661
    %1083 = vmatpush1.bf16.xpose.msra.mxu0 %v660
    %1084 = vmatprep.subr.bf16.mxu0 0
    %1085 = vmatpush2.bf16.xpose.msra.mxu0 0
    %1086 = vmatprep.subr.bf16.mxu0 0
    %1087 = vmatpush2.bf16.xpose.msra.mxu0 0
    %1088 = vmatprep.subr.bf16.mxu0 0
    %1089 = vmatpush2.bf16.xpose.msra.mxu0 0
    %1090 = vmatprep.subr.bf16.mxu0 0
    %1091 = vmatpush2.bf16.xpose.msra.mxu0 0
    %1092 = vmatprep.subr.bf16.mxu0 0
    %1093 = vmatpush2.bf16.xpose.msra.mxu0 0
    %1094 = vmatprep.subr.bf16.mxu0 0
    %1095 = vmatpush2.bf16.xpose.msra.mxu0 0
    %1096 = vmatprep.subr.bf16.mxu0 0
    %1097 = vmatpush2.bf16.xpose.msra.mxu0 0
    %1098 = vmatprep.subr.bf16.mxu0 0
    %1099 = vmatpush2.bf16.xpose.msra.mxu0 0
    %1100 = vmatprep.mubr.bf16.mxu0 %v240
    %1101 = vmatmul.mubr.bf16.gmra.mxu0 %v226
    %v1102 = vpop.f32.mrf.mxu0
    %v1103 = vadd.f32 %v1063, %v1102
    %v1104 = vpop.f32.mrf.mxu0
    %v1105 = vpop.f32.mrf.mxu0
    %v1106 = vpop.f32.mrf.mxu0
    %1107 = vdwg.mxu0
    %1108 = vmatprep.subr.bf16.mxu0 %v775
    %1109 = vmatpush1.bf16.xpose.msra.mxu0 %v774
    %1110 = vmatprep.subr.bf16.mxu0 %v759
    %1111 = vmatpush1.bf16.xpose.msra.mxu0 %v758
    %1112 = vmatprep.subr.bf16.mxu0 %v743
    %1113 = vmatpush1.bf16.xpose.msra.mxu0 %v742
    %1114 = vmatprep.subr.bf16.mxu0 %v727
    %1115 = vmatpush1.bf16.xpose.msra.mxu0 %v726
    %1116 = vmatprep.subr.bf16.mxu0 %v711
    %1117 = vmatpush1.bf16.xpose.msra.mxu0 %v710
    %1118 = vmatprep.subr.bf16.mxu0 %v695
    %1119 = vmatpush1.bf16.xpose.msra.mxu0 %v694
    %1120 = vmatprep.subr.bf16.mxu0 %v679
    %1121 = vmatpush1.bf16.xpose.msra.mxu0 %v678
    %1122 = vmatprep.subr.bf16.mxu0 %v663
    %1123 = vmatpush1.bf16.xpose.msra.mxu0 %v662
    %1124 = vmatprep.subr.bf16.mxu0 0
    %1125 = vmatpush2.bf16.xpose.msra.mxu0 0
    %1126 = vmatprep.subr.bf16.mxu0 0
    %1127 = vmatpush2.bf16.xpose.msra.mxu0 0
    %1128 = vmatprep.subr.bf16.mxu0 0
    %1129 = vmatpush2.bf16.xpose.msra.mxu0 0
    %1130 = vmatprep.subr.bf16.mxu0 0
    %1131 = vmatpush2.bf16.xpose.msra.mxu0 0
    %1132 = vmatprep.subr.bf16.mxu0 0
    %1133 = vmatpush2.bf16.xpose.msra.mxu0 0
    %1134 = vmatprep.subr.bf16.mxu0 0
    %1135 = vmatpush2.bf16.xpose.msra.mxu0 0
    %1136 = vmatprep.subr.bf16.mxu0 0
    %1137 = vmatpush2.bf16.xpose.msra.mxu0 0
    %1138 = vmatprep.subr.bf16.mxu0 0
    %1139 = vmatpush2.bf16.xpose.msra.mxu0 0
    %1140 = vmatprep.mubr.bf16.mxu0 %v250
    %1141 = vmatmul.mubr.bf16.gmra.mxu0 %v248
    %v1142 = vpop.f32.mrf.mxu0
    %v1143 = vadd.f32 %v1103, %v1142
    %v1144 = vpop.f32.mrf.mxu0
    %v1145 = vpop.f32.mrf.mxu0
    %v1146 = vpop.f32.mrf.mxu0
    %1147 = vdwg.mxu0
    %1148 = vmatprep.subr.bf16.mxu0 %v777
    %1149 = vmatpush1.bf16.xpose.msra.mxu0 %v776
    %1150 = vmatprep.subr.bf16.mxu0 %v761
    %1151 = vmatpush1.bf16.xpose.msra.mxu0 %v760
    %1152 = vmatprep.subr.bf16.mxu0 %v745
    %1153 = vmatpush1.bf16.xpose.msra.mxu0 %v744
    %1154 = vmatprep.subr.bf16.mxu0 %v729
    %1155 = vmatpush1.bf16.xpose.msra.mxu0 %v728
    %1156 = vmatprep.subr.bf16.mxu0 %v713
    %1157 = vmatpush1.bf16.xpose.msra.mxu0 %v712
    %1158 = vmatprep.subr.bf16.mxu0 %v697
    %1159 = vmatpush1.bf16.xpose.msra.mxu0 %v696
    %1160 = vmatprep.subr.bf16.mxu0 %v681
    %1161 = vmatpush1.bf16.xpose.msra.mxu0 %v680
    %1162 = vmatprep.subr.bf16.mxu0 %v665
    %1163 = vmatpush1.bf16.xpose.msra.mxu0 %v664
    %1164 = vmatprep.subr.bf16.mxu0 0
    %1165 = vmatpush2.bf16.xpose.msra.mxu0 0
    %1166 = vmatprep.subr.bf16.mxu0 0
    %1167 = vmatpush2.bf16.xpose.msra.mxu0 0
    %1168 = vmatprep.subr.bf16.mxu0 0
    %1169 = vmatpush2.bf16.xpose.msra.mxu0 0
    %1170 = vmatprep.subr.bf16.mxu0 0
    %1171 = vmatpush2.bf16.xpose.msra.mxu0 0
    %1172 = vmatprep.subr.bf16.mxu0 0
    %1173 = vmatpush2.bf16.xpose.msra.mxu0 0
    %1174 = vmatprep.subr.bf16.mxu0 0
    %1175 = vmatpush2.bf16.xpose.msra.mxu0 0
    %1176 = vmatprep.subr.bf16.mxu0 0
    %1177 = vmatpush2.bf16.xpose.msra.mxu0 0
    %1178 = vmatprep.subr.bf16.mxu0 0
    %1179 = vmatpush2.bf16.xpose.msra.mxu0 0
    %1180 = vmatprep.mubr.bf16.mxu0 %v247
    %1181 = vmatmul.mubr.bf16.gmra.mxu0 %v233
    %v1182 = vpop.f32.mrf.mxu0
    %v1183 = vadd.f32 %v1143, %v1182
    %v1184 = vpop.f32.mrf.mxu0
    %v1185 = vpop.f32.mrf.mxu0
    %v1186 = vpop.f32.mrf.mxu0
    %1187 = vdwg.mxu0
    %1188 = vmatprep.subr.bf16.mxu0 %v779
    %1189 = vmatpush1.bf16.xpose.msra.mxu0 %v778
    %1190 = vmatprep.subr.bf16.mxu0 %v763
    %1191 = vmatpush1.bf16.xpose.msra.mxu0 %v762
    %1192 = vmatprep.subr.bf16.mxu0 %v747
    %1193 = vmatpush1.bf16.xpose.msra.mxu0 %v746
    %1194 = vmatprep.subr.bf16.mxu0 %v731
    %1195 = vmatpush1.bf16.xpose.msra.mxu0 %v730
    %1196 = vmatprep.subr.bf16.mxu0 %v715
    %1197 = vmatpush1.bf16.xpose.msra.mxu0 %v714
    %1198 = vmatprep.subr.bf16.mxu0 %v699
    %1199 = vmatpush1.bf16.xpose.msra.mxu0 %v698
    %1200 = vmatprep.subr.bf16.mxu0 %v683
    %1201 = vmatpush1.bf16.xpose.msra.mxu0 %v682
    %1202 = vmatprep.subr.bf16.mxu0 %v667
    %1203 = vmatpush1.bf16.xpose.msra.mxu0 %v666
    %1204 = vmatprep.subr.bf16.mxu0 0
    %1205 = vmatpush2.bf16.xpose.msra.mxu0 0
    %1206 = vmatprep.subr.bf16.mxu0 0
    %1207 = vmatpush2.bf16.xpose.msra.mxu0 0
    %1208 = vmatprep.subr.bf16.mxu0 0
    %1209 = vmatpush2.bf16.xpose.msra.mxu0 0
    %1210 = vmatprep.subr.bf16.mxu0 0
    %1211 = vmatpush2.bf16.xpose.msra.mxu0 0
    %1212 = vmatprep.subr.bf16.mxu0 0
    %1213 = vmatpush2.bf16.xpose.msra.mxu0 0
    %1214 = vmatprep.subr.bf16.mxu0 0
    %1215 = vmatpush2.bf16.xpose.msra.mxu0 0
    %1216 = vmatprep.subr.bf16.mxu0 0
    %1217 = vmatpush2.bf16.xpose.msra.mxu0 0
    %1218 = vmatprep.subr.bf16.mxu0 0
    %1219 = vmatpush2.bf16.xpose.msra.mxu0 0
    %1220 = vmatprep.mubr.bf16.mxu0 %v251
    %1221 = vmatmul.mubr.bf16.gmra.mxu0 %v249
    %v1222 = vpop.f32.mrf.mxu0
    %v1223 = vadd.f32 %v1183, %v1222
    %v1224 = vpop.f32.mrf.mxu0
    %v1225 = vpop.f32.mrf.mxu0
    %v1226 = vpop.f32.mrf.mxu0
    %1227 = vdwg.mxu0
    %v1228 = vadd.f32 %v21, %v1223
    %1229 = vst [vmem:[#allocation2] sm:$0x3] %v1228
    // Predicated region
    $region18: #{alexnet_forward.3} parent=1 // pred_check
      %p1230 = pneg %p16
    $region19: #{alexnet_forward.3} parent=1 // pred_check_branch
      %1232 = sbr.rel (%p1230) target = $region21
    $region20: #{alexnet_forward.3} parent=1 // pred_region
      %v1233 = vld [vmem:[#allocation2] sm:$0x3]
      %v1234 = vld [vmem:[%s2] sm:$0x1]
      %v1236 = vlaneseq
      %v1237 = vshrl.u32 %v1236, 7
      %v1238 = vsub.s32 0, %v1237
      %v1239 = vrot.slane %v1234, %v1238
      %v1241 = vadd.f32 %v1233, %v1239
      %1242 = vst [vmem:[#allocation3] sm:$0x3] %v1241
    $region21: #{alexnet_forward.3} parent=1 // pred_fallthru
      _
    // Predicated region
    $region22: #{alexnet_forward.3} parent=1 // pred_check
      _
    $region23: #{alexnet_forward.3} parent=1 // pred_check_branch
      %1244 = sbr.rel (0) target = $region25
    $region24: #{alexnet_forward.3} parent=1 // pred_region
      %s1246 = ssub.s32 32, 32
      %1247 = vsyncadd [#allocation4], %s1246
      %s1249 = sshll.u32 [#allocation3], 4
      %s1250 = int_to_ptr.vmem [resolvable:$true] %s1249
      %1252 = dma.vmem_to_hbm [thread:$0]  %s1250, 32, %s3, [#allocation4]
    $region25: #{alexnet_forward.3} parent=1 // pred_fallthru
      _
    // Predicated region
    $region26: #{alexnet_forward.3} parent=1 // pred_check
      _
    $region27: #{alexnet_forward.3} parent=1 // pred_check_branch
      %1254 = sbr.rel (0) target = $region29
    $region28: #{alexnet_forward.3} parent=1 // pred_region
      %1255 = dma.done [#allocation4], 32
    $region29: #{alexnet_forward.3} parent=1 // pred_fallthru
      _
    %1256 = vsyncpa [#allocation4], 1

// kernel: alexnet_forward.2
$region0: #{alexnet_forward.2}
  #allocation0 [shape = 'u32[]', space=smem, size = 0x4, offset = 0x4, fixed_abs, tag = 'smem constant byte address 0x4 - core index']
  #allocation1 [shape = 'u32[144,128]{1,0:T(1,128)}', space=vmem, size = 0x12000, scoped, tag = 'internal scratch']
  %s0 = inlined_call_operand.vmem [shape: bf16[2,18,18,4], index: 0, kind: input, shape index: {}]
  %s1 = inlined_call_operand.vmem [shape: bf16[36,8], index: 1, kind: input, shape index: {}]
  %s2 = inlined_call_operand.vmem [shape: f32[1,8], index: 2, kind: input, shape index: {}]
  %s3 = inlined_call_operand.vmem [shape: bf16[2,256,8], index: 3, kind: output, shape index: {}]
  %s4 = sld [smem:[#allocation0]]
  $region45: #{alexnet_forward.2} parent=0
    _
  %s6 = ssub.s32 1, %s4
  %s7 = scalar_select 0, %s6, %s4
  loop: start=0, step=1, limit=4
  $region2: #{alexnet_forward.2} parent=0 // loop_pre_header
    _
  $region3: #{alexnet_forward.2} parent=0 // loop_header
    %s9 = sphi 0, %s13
    %p10 = scmp.ge.s32.totalorder %s9, 4
    %s19 = sphi 0, %s21
    %s22 = sphi 0, %s19
    %s23 = sphi 0, %s22
    %s39 = sphi 0, %s23
    %s43 = sphi 0, %s43
    %s45 = sphi 0, %s43
    %s46 = sphi 0, %s45
    %s60 = sphi 0, %s46
    %s64 = sphi 0, %s64
    %s66 = sphi 0, %s64
    %s67 = sphi 0, %s66
    %s81 = sphi 0, %s67
    %s87 = sphi 0, %s89
    %s90 = sphi 0, %s87
    %s91 = sphi 0, %s90
    %s107 = sphi 0, %s91
  $region4: #{alexnet_forward.2} parent=0 // loop_header_branch
    %12 = sbr.rel (%p10) target = $region8
  $region5: #{alexnet_forward.2} parent=0 // loop_body
    %s14 = ssub.s32 %s9, 1
    %s15 = ssub.s32 %s9, 2
    %s16 = sadd.s32 %s9, 1
    %s17 = ssub.s32 %s9, %s16
    %p18 = scmp.eq.s32.totalorder %s17, 0
    %s20 = sadd.s32 %s19, 1
    %s21 = scalar_select %p18, %s19, %s20
    %p24 = pneg %p18
    %p25 = scmp.eq.s32.totalorder %s9, 1
    %p26 = por %p24, %p25
    %p27 = scmp.ne.s32.totalorder %s19, %s22
    %p28 = scmp.eq.s32.totalorder %s9, 0
    %p29 = por %p27, %p28
    %p30 = scmp.ne.s32.totalorder %s19, %s22
    %p31 = scmp.eq.s32.totalorder %s14, 1
    %p32 = por %p30, %p31
    %p33 = scmp.ne.s32.totalorder %s22, %s23
    %p34 = scmp.eq.s32.totalorder %s14, 0
    %p35 = por %p33, %p34
    %p36 = scmp.ne.s32.totalorder %s22, %s23
    %p37 = scmp.eq.s32.totalorder %s15, 1
    %p38 = por %p36, %p37
    %p40 = scmp.ne.s32.totalorder %s23, %s39
    %p41 = scmp.eq.s32.totalorder %s15, 0
    %p42 = por %p40, %p41
    %s44 = sadd.s32 %s43, 1
    %p47 = scmp.eq.s32.totalorder %s9, 1
    %p48 = scmp.ne.s32.totalorder %s43, %s45
    %p49 = scmp.eq.s32.totalorder %s9, 0
    %p50 = por %p48, %p49
    %p51 = scmp.ne.s32.totalorder %s43, %s45
    %p52 = scmp.eq.s32.totalorder %s14, 1
    %p53 = por %p51, %p52
    %p54 = scmp.ne.s32.totalorder %s45, %s46
    %p55 = scmp.eq.s32.totalorder %s14, 0
    %p56 = por %p54, %p55
    %p57 = scmp.ne.s32.totalorder %s45, %s46
    %p58 = scmp.eq.s32.totalorder %s15, 1
    %p59 = por %p57, %p58
    %p61 = scmp.ne.s32.totalorder %s46, %s60
    %p62 = scmp.eq.s32.totalorder %s15, 0
    %p63 = por %p61, %p62
    %s65 = sadd.s32 %s64, 1
    %p68 = scmp.eq.s32.totalorder %s9, 1
    %p69 = scmp.ne.s32.totalorder %s64, %s66
    %p70 = scmp.eq.s32.totalorder %s9, 0
    %p71 = por %p69, %p70
    %p72 = scmp.ne.s32.totalorder %s64, %s66
    %p73 = scmp.eq.s32.totalorder %s14, 1
    %p74 = por %p72, %p73
    %p75 = scmp.ne.s32.totalorder %s66, %s67
    %p76 = scmp.eq.s32.totalorder %s14, 0
    %p77 = por %p75, %p76
    %p78 = scmp.ne.s32.totalorder %s66, %s67
    %p79 = scmp.eq.s32.totalorder %s15, 1
    %p80 = por %p78, %p79
    %p82 = scmp.ne.s32.totalorder %s67, %s81
    %p83 = scmp.eq.s32.totalorder %s15, 0
    %p84 = por %p82, %p83
    %s85 = ssub.s32 %s9, %s16
    %p86 = scmp.eq.s32.totalorder %s85, 0
    %s88 = sadd.s32 %s87, 1
    %s89 = scalar_select %p86, %s87, %s88
    %p92 = pneg %p86
    %p93 = scmp.eq.s32.totalorder %s9, 1
    %p94 = por %p92, %p93
    %p95 = scmp.ne.s32.totalorder %s87, %s90
    %p96 = scmp.eq.s32.totalorder %s9, 0
    %p97 = por %p95, %p96
    %p98 = scmp.ne.s32.totalorder %s87, %s90
    %p99 = scmp.eq.s32.totalorder %s14, 1
    %p100 = por %p98, %p99
    %p101 = scmp.ne.s32.totalorder %s90, %s91
    %p102 = scmp.eq.s32.totalorder %s14, 0
    %p103 = por %p101, %p102
    %p104 = scmp.ne.s32.totalorder %s90, %s91
    %p105 = scmp.eq.s32.totalorder %s15, 1
    %p106 = por %p104, %p105
    %p108 = scmp.ne.s32.totalorder %s91, %s107
    %p109 = scmp.eq.s32.totalorder %s15, 0
    %p110 = por %p108, %p109
    %p111 = scmp.le.s32.totalorder 1, %s9
    %p112 = scmp.lt.s32.totalorder %s9, 3
    %p113 = pnand %p111, %p112
    %p114 = pneg %p113
    // Predicated region
    $region9: #{alexnet_forward.2} parent=5 // pred_check
      _
    $region10: #{alexnet_forward.2} parent=5 // pred_check_branch
      %116 = sbr.rel (%p113) target = $region12
    $region11: #{alexnet_forward.2} parent=5 // pred_region
      %s117 = ssub.s32 %s9, 1
      // Predicated region
      $region13: #{alexnet_forward.2} parent=11 // pred_check
        %p118 = pneg %p56
      $region14: #{alexnet_forward.2} parent=11 // pred_check_branch
        %120 = sbr.rel (%p118) target = $region16
      $region15: #{alexnet_forward.2} parent=11 // pred_region
        _
      $region16: #{alexnet_forward.2} parent=11 // pred_fallthru
        _
      // Predicated region
      $region17: #{alexnet_forward.2} parent=11 // pred_check
        %p121 = pneg %p77
      $region18: #{alexnet_forward.2} parent=11 // pred_check_branch
        %123 = sbr.rel (%p121) target = $region20
      $region19: #{alexnet_forward.2} parent=11 // pred_region
        _
      $region20: #{alexnet_forward.2} parent=11 // pred_fallthru
        _
    $region12: #{alexnet_forward.2} parent=5 // pred_fallthru
      _
    %p124 = scmp.lt.s32.totalorder %s9, 2
    // Predicated region
    $region21: #{alexnet_forward.2} parent=5 // pred_check
      %p125 = pneg %p124
    $region22: #{alexnet_forward.2} parent=5 // pred_check_branch
      %127 = sbr.rel (%p125) target = $region24
    $region23: #{alexnet_forward.2} parent=5 // pred_region
      // Predicated region
      $region25: #{alexnet_forward.2} parent=23 // pred_check
        %p128 = pneg %p29
      $region26: #{alexnet_forward.2} parent=23 // pred_check_branch
        %130 = sbr.rel (%p128) target = $region28
      $region27: #{alexnet_forward.2} parent=23 // pred_region
        %p131 = scmp.lt.s32.totalorder %s9, 1
        %s132 = scalar_select %p131, %s9, 1
        %s133 = smul.addr %s132, 54
        %s134 = smul.addr %s133, 4
        %s135 = scalar_lea.vmem %s0, %s134
      $region28: #{alexnet_forward.2} parent=23 // pred_fallthru
        _
    $region24: #{alexnet_forward.2} parent=5 // pred_fallthru
      _
    %p136 = scmp.le.s32.totalorder 1, %s9
    %p137 = scmp.lt.s32.totalorder %s9, 3
    %p138 = pnand %p136, %p137
    %p139 = pneg %p138
    // Predicated region
    $region29: #{alexnet_forward.2} parent=5 // pred_check
      _
    $region30: #{alexnet_forward.2} parent=5 // pred_check_branch
      %141 = sbr.rel (%p138) target = $region32
    $region31: #{alexnet_forward.2} parent=5 // pred_region
      %s142 = ssub.s32 %s9, 1
      %p143 = scmp.lt.s32.totalorder %s14, 1
      %s144 = scalar_select %p143, %s14, 1
      %s145 = smul.addr %s144, 54
      %s146 = smul.addr %s145, 4
      %s147 = scalar_lea.vmem %s0, %s146
      %p148 = pneg %p35
      %p149 = pneg %p32
      %p150 = pneg %p56
      %p151 = pneg %p53
      %p152 = pneg %p77
      %p153 = pneg %p74
      %p154 = pneg %p103
      %p155 = pneg %p100
      %p156 = scmp.lt.s32.totalorder %s14, 1
      %s157 = scalar_select %p156, %s14, 1
      %s158 = smul.addr %s157, 32
      %s159 = smul.addr %s158, 4
      %s160 = scalar_lea.vmem %s3, %s159
      %p161 = scmp.lt.s32.totalorder %s14, 1
      %s162 = scalar_select %p161, %s14, 1
      %s163 = smul.addr %s162, 54
      %s164 = smul.addr %s163, 4
      %s165 = scalar_lea.vmem %s0, %s164
      %p166 = scmp.lt.s32.totalorder %s14, 1
      %s167 = scalar_select %p166, %s14, 1
      %s168 = smul.addr %s167, 32
      %s169 = smul.addr %s168, 4
      %s170 = scalar_lea.vmem %s3, %s169
      %v172 = vld [vmem:[%s165] sm:$0xf]
      %v173 = vld [vmem:[%s165 + $0x4] sm:$0xf]
      %v174 = vld [vmem:[%s165 + $0xc] sm:$0xf]
      %v175 = vld [vmem:[%s165 + $0x10] sm:$0xf]
      %v176 = vld [vmem:[%s165 + $0x18] sm:$0xf]
      %v177 = vld [vmem:[%s165 + $0x1c] sm:$0xf]
      %v178 = vld [vmem:[%s165 + $0x24] sm:$0xf]
      %v179 = vld [vmem:[%s165 + $0x28] sm:$0xf]
      %v180 = vld [vmem:[%s165 + $0x30] sm:$0xf]
      %v181 = vld [vmem:[%s165 + $0x34] sm:$0xf]
      %v182 = vld [vmem:[%s165 + $0x3c] sm:$0xf]
      %v183 = vld [vmem:[%s165 + $0x40] sm:$0xf]
      %v184 = vld [vmem:[%s165 + $0x48] sm:$0xf]
      %v185 = vld [vmem:[%s165 + $0x4c] sm:$0xf]
      %v186 = vld [vmem:[%s165 + $0x54] sm:$0xf]
      %v187 = vld [vmem:[%s165 + $0x58] sm:$0xf]
      %v188 = vld [vmem:[%s165 + $0x60] sm:$0xf]
      %v189 = vld [vmem:[%s165 + $0x64] sm:$0xf]
      %v190 = vld [vmem:[%s165 + $0x6c] sm:$0xf]
      %v191 = vld [vmem:[%s165 + $0x70] sm:$0xf]
      %v192 = vld [vmem:[%s165 + $0x78] sm:$0xf]
      %v193 = vld [vmem:[%s165 + $0x7c] sm:$0xf]
      %v194 = vld [vmem:[%s165 + $0x84] sm:$0xf]
      %v195 = vld [vmem:[%s165 + $0x88] sm:$0xf]
      %v196 = vld [vmem:[%s165 + $0x90] sm:$0xf]
      %v197 = vld [vmem:[%s165 + $0x94] sm:$0xf]
      %v198 = vld [vmem:[%s165 + $0x9c] sm:$0xf]
      %v199 = vld [vmem:[%s165 + $0xa0] sm:$0xf]
      %v200 = vld [vmem:[%s165 + $0xa8] sm:$0xf]
      %v201 = vld [vmem:[%s165 + $0xac] sm:$0xf]
      %v202 = vld [vmem:[%s165 + $0xb4] sm:$0xf]
      %v203 = vld [vmem:[%s165 + $0xb8] sm:$0xf]
      %v204 = vld [vmem:[%s165 + $0x8] sm:$0x1]
      %v205 = vld [vmem:[%s165 + $0x14] sm:$0x1]
      %v206 = vld [vmem:[%s165 + $0x20] sm:$0x1]
      %v207 = vld [vmem:[%s165 + $0x2c] sm:$0x1]
      %v208 = vld [vmem:[%s165 + $0x38] sm:$0x1]
      %v209 = vld [vmem:[%s165 + $0x44] sm:$0x1]
      %v210 = vld [vmem:[%s165 + $0x50] sm:$0x1]
      %v211 = vld [vmem:[%s165 + $0x5c] sm:$0x1]
      %v212 = vld [vmem:[%s165 + $0x68] sm:$0x1]
      %v213 = vld [vmem:[%s165 + $0x74] sm:$0x1]
      %v214 = vld [vmem:[%s165 + $0x80] sm:$0x1]
      %v215 = vld [vmem:[%s165 + $0x8c] sm:$0x1]
      %v216 = vld [vmem:[%s165 + $0x98] sm:$0x1]
      %v217 = vld [vmem:[%s165 + $0xa4] sm:$0x1]
      %v218 = vld [vmem:[%s165 + $0xb0] sm:$0x1]
      %v219 = vld [vmem:[%s165 + $0xbc] sm:$0x1]
      %vm220 = vsmask.f32 3328
      %vm221 = vsmask.f32 7440
      %vm222 = vmor %vm220, %vm221
      %v224 = vshrl.u32 %v172, 16
      %v226 = vrot.slane %v224, 4
      %v227 = vshll.u32 %v172, 16
      %v229 = vrot.slane %v227, 5
      %v230 = vor.u32 %v226, %v229
      %v231 = vrot.slane %v230, 4
      %v233 = vshll.u32 %v173, 16
      %v235 = vrot.slane %v233, 5
      %v236 = vsel %vm222, %v231, %v235
      %v237 = vshrl.u32 %v173, 16
      %v239 = vrot.slane %v237, 4
      %v240 = vor.u32 %v239, %v235
      %v241 = vrot.slane %v240, 4
      %v243 = vshll.u32 %v204, 16
      %v245 = vrot.slane %v243, 5
      %v246 = vsel %vm222, %v241, %v245
      %v248 = vshrl.u32 %v174, 16
      %v250 = vrot.slane %v248, 4
      %v251 = vshll.u32 %v174, 16
      %v253 = vrot.slane %v251, 5
      %v254 = vor.u32 %v250, %v253
      %v255 = vrot.slane %v254, 4
      %v257 = vshll.u32 %v175, 16
      %v259 = vrot.slane %v257, 5
      %v260 = vsel %vm222, %v255, %v259
      %v261 = vshrl.u32 %v175, 16
      %v263 = vrot.slane %v261, 4
      %v264 = vor.u32 %v263, %v259
      %v265 = vrot.slane %v264, 4
      %v267 = vshll.u32 %v205, 16
      %v269 = vrot.slane %v267, 5
      %v270 = vsel %vm222, %v265, %v269
      %v272 = vshrl.u32 %v176, 16
      %v274 = vrot.slane %v272, 4
      %v275 = vshll.u32 %v176, 16
      %v277 = vrot.slane %v275, 5
      %v278 = vor.u32 %v274, %v277
      %v279 = vrot.slane %v278, 4
      %v281 = vshll.u32 %v177, 16
      %v283 = vrot.slane %v281, 5
      %v284 = vsel %vm222, %v279, %v283
      %v285 = vshrl.u32 %v177, 16
      %v287 = vrot.slane %v285, 4
      %v288 = vor.u32 %v287, %v283
      %v289 = vrot.slane %v288, 4
      %v291 = vshll.u32 %v206, 16
      %v293 = vrot.slane %v291, 5
      %v294 = vsel %vm222, %v289, %v293
      %v296 = vshrl.u32 %v178, 16
      %v298 = vrot.slane %v296, 4
      %v299 = vshll.u32 %v178, 16
      %v301 = vrot.slane %v299, 5
      %v302 = vor.u32 %v298, %v301
      %v303 = vrot.slane %v302, 4
      %v305 = vshll.u32 %v179, 16
      %v307 = vrot.slane %v305, 5
      %v308 = vsel %vm222, %v303, %v307
      %v309 = vshrl.u32 %v179, 16
      %v311 = vrot.slane %v309, 4
      %v312 = vor.u32 %v311, %v307
      %v313 = vrot.slane %v312, 4
      %v315 = vshll.u32 %v207, 16
      %v317 = vrot.slane %v315, 5
      %v318 = vsel %vm222, %v313, %v317
      %v320 = vshrl.u32 %v180, 16
      %v322 = vrot.slane %v320, 4
      %v323 = vshll.u32 %v180, 16
      %v325 = vrot.slane %v323, 5
      %v326 = vor.u32 %v322, %v325
      %v327 = vrot.slane %v326, 4
      %v329 = vshll.u32 %v181, 16
      %v331 = vrot.slane %v329, 5
      %v332 = vsel %vm222, %v327, %v331
      %v333 = vshrl.u32 %v181, 16
      %v335 = vrot.slane %v333, 4
      %v336 = vor.u32 %v335, %v331
      %v337 = vrot.slane %v336, 4
      %v339 = vshll.u32 %v208, 16
      %v341 = vrot.slane %v339, 5
      %v342 = vsel %vm222, %v337, %v341
      %v344 = vshrl.u32 %v182, 16
      %v346 = vrot.slane %v344, 4
      %v347 = vshll.u32 %v182, 16
      %v349 = vrot.slane %v347, 5
      %v350 = vor.u32 %v346, %v349
      %v351 = vrot.slane %v350, 4
      %v353 = vshll.u32 %v183, 16
      %v355 = vrot.slane %v353, 5
      %v356 = vsel %vm222, %v351, %v355
      %v357 = vshrl.u32 %v183, 16
      %v359 = vrot.slane %v357, 4
      %v360 = vor.u32 %v359, %v355
      %v361 = vrot.slane %v360, 4
      %v363 = vshll.u32 %v209, 16
      %v365 = vrot.slane %v363, 5
      %v366 = vsel %vm222, %v361, %v365
      %v368 = vshrl.u32 %v184, 16
      %v370 = vrot.slane %v368, 4
      %v371 = vshll.u32 %v184, 16
      %v373 = vrot.slane %v371, 5
      %v374 = vor.u32 %v370, %v373
      %v375 = vrot.slane %v374, 4
      %v377 = vshll.u32 %v185, 16
      %v379 = vrot.slane %v377, 5
      %v380 = vsel %vm222, %v375, %v379
      %v381 = vshrl.u32 %v185, 16
      %v383 = vrot.slane %v381, 4
      %v384 = vor.u32 %v383, %v379
      %v385 = vrot.slane %v384, 4
      %v387 = vshll.u32 %v210, 16
      %v389 = vrot.slane %v387, 5
      %v390 = vsel %vm222, %v385, %v389
      %v392 = vshrl.u32 %v186, 16
      %v394 = vrot.slane %v392, 4
      %v395 = vshll.u32 %v186, 16
      %v397 = vrot.slane %v395, 5
      %v398 = vor.u32 %v394, %v397
      %v399 = vrot.slane %v398, 4
      %v401 = vshll.u32 %v187, 16
      %v403 = vrot.slane %v401, 5
      %v404 = vsel %vm222, %v399, %v403
      %v405 = vshrl.u32 %v187, 16
      %v407 = vrot.slane %v405, 4
      %v408 = vor.u32 %v407, %v403
      %v409 = vrot.slane %v408, 4
      %v411 = vshll.u32 %v211, 16
      %v413 = vrot.slane %v411, 5
      %v414 = vsel %vm222, %v409, %v413
      %v416 = vshrl.u32 %v188, 16
      %v418 = vrot.slane %v416, 4
      %v419 = vshll.u32 %v188, 16
      %v421 = vrot.slane %v419, 5
      %v422 = vor.u32 %v418, %v421
      %v423 = vrot.slane %v422, 4
      %v425 = vshll.u32 %v189, 16
      %v427 = vrot.slane %v425, 5
      %v428 = vsel %vm222, %v423, %v427
      %v429 = vshrl.u32 %v189, 16
      %v431 = vrot.slane %v429, 4
      %v432 = vor.u32 %v431, %v427
      %v433 = vrot.slane %v432, 4
      %v435 = vshll.u32 %v212, 16
      %v437 = vrot.slane %v435, 5
      %v438 = vsel %vm222, %v433, %v437
      %v440 = vshrl.u32 %v190, 16
      %v442 = vrot.slane %v440, 4
      %v443 = vshll.u32 %v190, 16
      %v445 = vrot.slane %v443, 5
      %v446 = vor.u32 %v442, %v445
      %v447 = vrot.slane %v446, 4
      %v449 = vshll.u32 %v191, 16
      %v451 = vrot.slane %v449, 5
      %v452 = vsel %vm222, %v447, %v451
      %v453 = vshrl.u32 %v191, 16
      %v455 = vrot.slane %v453, 4
      %v456 = vor.u32 %v455, %v451
      %v457 = vrot.slane %v456, 4
      %v459 = vshll.u32 %v213, 16
      %v461 = vrot.slane %v459, 5
      %v462 = vsel %vm222, %v457, %v461
      %v464 = vshrl.u32 %v192, 16
      %v466 = vrot.slane %v464, 4
      %v467 = vshll.u32 %v192, 16
      %v469 = vrot.slane %v467, 5
      %v470 = vor.u32 %v466, %v469
      %v471 = vrot.slane %v470, 4
      %v473 = vshll.u32 %v193, 16
      %v475 = vrot.slane %v473, 5
      %v476 = vsel %vm222, %v471, %v475
      %v477 = vshrl.u32 %v193, 16
      %v479 = vrot.slane %v477, 4
      %v480 = vor.u32 %v479, %v475
      %v481 = vrot.slane %v480, 4
      %v483 = vshll.u32 %v214, 16
      %v485 = vrot.slane %v483, 5
      %v486 = vsel %vm222, %v481, %v485
      %v488 = vshrl.u32 %v194, 16
      %v490 = vrot.slane %v488, 4
      %v491 = vshll.u32 %v194, 16
      %v493 = vrot.slane %v491, 5
      %v494 = vor.u32 %v490, %v493
      %v495 = vrot.slane %v494, 4
      %v497 = vshll.u32 %v195, 16
      %v499 = vrot.slane %v497, 5
      %v500 = vsel %vm222, %v495, %v499
      %v501 = vshrl.u32 %v195, 16
      %v503 = vrot.slane %v501, 4
      %v504 = vor.u32 %v503, %v499
      %v505 = vrot.slane %v504, 4
      %v507 = vshll.u32 %v215, 16
      %v509 = vrot.slane %v507, 5
      %v510 = vsel %vm222, %v505, %v509
      %v512 = vshrl.u32 %v196, 16
      %v514 = vrot.slane %v512, 4
      %v515 = vshll.u32 %v196, 16
      %v517 = vrot.slane %v515, 5
      %v518 = vor.u32 %v514, %v517
      %v519 = vrot.slane %v518, 4
      %v521 = vshll.u32 %v197, 16
      %v523 = vrot.slane %v521, 5
      %v524 = vsel %vm222, %v519, %v523
      %v525 = vshrl.u32 %v197, 16
      %v527 = vrot.slane %v525, 4
      %v528 = vor.u32 %v527, %v523
      %v529 = vrot.slane %v528, 4
      %v531 = vshll.u32 %v216, 16
      %v533 = vrot.slane %v531, 5
      %v534 = vsel %vm222, %v529, %v533
      %v536 = vshrl.u32 %v198, 16
      %v538 = vrot.slane %v536, 4
      %v539 = vshll.u32 %v198, 16
      %v541 = vrot.slane %v539, 5
      %v542 = vor.u32 %v538, %v541
      %v543 = vrot.slane %v542, 4
      %v545 = vshll.u32 %v199, 16
      %v547 = vrot.slane %v545, 5
      %v548 = vsel %vm222, %v543, %v547
      %v549 = vshrl.u32 %v199, 16
      %v551 = vrot.slane %v549, 4
      %v552 = vor.u32 %v551, %v547
      %v553 = vrot.slane %v552, 4
      %v555 = vshll.u32 %v217, 16
      %v557 = vrot.slane %v555, 5
      %v558 = vsel %vm222, %v553, %v557
      %v560 = vshrl.u32 %v200, 16
      %v562 = vrot.slane %v560, 4
      %v563 = vshll.u32 %v200, 16
      %v565 = vrot.slane %v563, 5
      %v566 = vor.u32 %v562, %v565
      %v567 = vrot.slane %v566, 4
      %v569 = vshll.u32 %v201, 16
      %v571 = vrot.slane %v569, 5
      %v572 = vsel %vm222, %v567, %v571
      %v573 = vshrl.u32 %v201, 16
      %v575 = vrot.slane %v573, 4
      %v576 = vor.u32 %v575, %v571
      %v577 = vrot.slane %v576, 4
      %v579 = vshll.u32 %v218, 16
      %v581 = vrot.slane %v579, 5
      %v582 = vsel %vm222, %v577, %v581
      %v584 = vshrl.u32 %v202, 16
      %v586 = vrot.slane %v584, 4
      %v587 = vshll.u32 %v202, 16
      %v589 = vrot.slane %v587, 5
      %v590 = vor.u32 %v586, %v589
      %v591 = vrot.slane %v590, 4
      %v593 = vshll.u32 %v203, 16
      %v595 = vrot.slane %v593, 5
      %v596 = vsel %vm222, %v591, %v595
      %v597 = vshrl.u32 %v203, 16
      %v599 = vrot.slane %v597, 4
      %v600 = vor.u32 %v599, %v595
      %v601 = vrot.slane %v600, 4
      %v603 = vshll.u32 %v219, 16
      %v605 = vrot.slane %v603, 5
      %v606 = vsel %vm222, %v601, %v605
      %v607 = vld [vmem:[%s165] sm:$0xe]
      %v608 = vld [vmem:[%s165 + $0xc] sm:$0xe]
      %v609 = vld [vmem:[%s165 + $0x18] sm:$0xe]
      %v610 = vld [vmem:[%s165 + $0x24] sm:$0xe]
      %v611 = vld [vmem:[%s165 + $0x30] sm:$0xe]
      %v612 = vld [vmem:[%s165 + $0x3c] sm:$0xe]
      %v613 = vld [vmem:[%s165 + $0x48] sm:$0xe]
      %v614 = vld [vmem:[%s165 + $0x54] sm:$0xe]
      %v615 = vld [vmem:[%s165 + $0x60] sm:$0xe]
      %v616 = vld [vmem:[%s165 + $0x6c] sm:$0xe]
      %v617 = vld [vmem:[%s165 + $0x78] sm:$0xe]
      %v618 = vld [vmem:[%s165 + $0x84] sm:$0xe]
      %v619 = vld [vmem:[%s165 + $0x90] sm:$0xe]
      %v620 = vld [vmem:[%s165 + $0x9c] sm:$0xe]
      %v621 = vld [vmem:[%s165 + $0xa8] sm:$0xe]
      %v622 = vld [vmem:[%s165 + $0xb4] sm:$0xe]
      %vm671 = vcmask 1042432
      %vm672 = vcmask 1046532
      %vm673 = vmor %vm671, %vm672
      %v674 = vrot.slane %v607, 5
      %v675 = vrot.slane %v674, 4
      %v676 = vrot.slane %v173, 5
      %v677 = vsel %vm673, %v675, %v676
      %v678 = vrot.slane %v676, 4
      %v679 = vrot.slane %v204, 5
      %v680 = vsel %vm673, %v678, %v679
      %v681 = vrot.slane %v608, 5
      %v682 = vrot.slane %v681, 4
      %v683 = vrot.slane %v175, 5
      %v684 = vsel %vm673, %v682, %v683
      %v685 = vrot.slane %v683, 4
      %v686 = vrot.slane %v205, 5
      %v687 = vsel %vm673, %v685, %v686
      %v688 = vrot.slane %v609, 5
      %v689 = vrot.slane %v688, 4
      %v690 = vrot.slane %v177, 5
      %v691 = vsel %vm673, %v689, %v690
      %v692 = vrot.slane %v690, 4
      %v693 = vrot.slane %v206, 5
      %v694 = vsel %vm673, %v692, %v693
      %v695 = vrot.slane %v610, 5
      %v696 = vrot.slane %v695, 4
      %v697 = vrot.slane %v179, 5
      %v698 = vsel %vm673, %v696, %v697
      %v699 = vrot.slane %v697, 4
      %v700 = vrot.slane %v207, 5
      %v701 = vsel %vm673, %v699, %v700
      %v702 = vrot.slane %v611, 5
      %v703 = vrot.slane %v702, 4
      %v704 = vrot.slane %v181, 5
      %v705 = vsel %vm673, %v703, %v704
      %v706 = vrot.slane %v704, 4
      %v707 = vrot.slane %v208, 5
      %v708 = vsel %vm673, %v706, %v707
      %v709 = vrot.slane %v612, 5
      %v710 = vrot.slane %v709, 4
      %v711 = vrot.slane %v183, 5
      %v712 = vsel %vm673, %v710, %v711
      %v713 = vrot.slane %v711, 4
      %v714 = vrot.slane %v209, 5
      %v715 = vsel %vm673, %v713, %v714
      %v716 = vrot.slane %v613, 5
      %v717 = vrot.slane %v716, 4
      %v718 = vrot.slane %v185, 5
      %v719 = vsel %vm673, %v717, %v718
      %v720 = vrot.slane %v718, 4
      %v721 = vrot.slane %v210, 5
      %v722 = vsel %vm673, %v720, %v721
      %v723 = vrot.slane %v614, 5
      %v724 = vrot.slane %v723, 4
      %v725 = vrot.slane %v187, 5
      %v726 = vsel %vm673, %v724, %v725
      %v727 = vrot.slane %v725, 4
      %v728 = vrot.slane %v211, 5
      %v729 = vsel %vm673, %v727, %v728
      %v730 = vrot.slane %v615, 5
      %v731 = vrot.slane %v730, 4
      %v732 = vrot.slane %v189, 5
      %v733 = vsel %vm673, %v731, %v732
      %v734 = vrot.slane %v732, 4
      %v735 = vrot.slane %v212, 5
      %v736 = vsel %vm673, %v734, %v735
      %v737 = vrot.slane %v616, 5
      %v738 = vrot.slane %v737, 4
      %v739 = vrot.slane %v191, 5
      %v740 = vsel %vm673, %v738, %v739
      %v741 = vrot.slane %v739, 4
      %v742 = vrot.slane %v213, 5
      %v743 = vsel %vm673, %v741, %v742
      %v744 = vrot.slane %v617, 5
      %v745 = vrot.slane %v744, 4
      %v746 = vrot.slane %v193, 5
      %v747 = vsel %vm673, %v745, %v746
      %v748 = vrot.slane %v746, 4
      %v749 = vrot.slane %v214, 5
      %v750 = vsel %vm673, %v748, %v749
      %v751 = vrot.slane %v618, 5
      %v752 = vrot.slane %v751, 4
      %v753 = vrot.slane %v195, 5
      %v754 = vsel %vm673, %v752, %v753
      %v755 = vrot.slane %v753, 4
      %v756 = vrot.slane %v215, 5
      %v757 = vsel %vm673, %v755, %v756
      %v758 = vrot.slane %v619, 5
      %v759 = vrot.slane %v758, 4
      %v760 = vrot.slane %v197, 5
      %v761 = vsel %vm673, %v759, %v760
      %v762 = vrot.slane %v760, 4
      %v763 = vrot.slane %v216, 5
      %v764 = vsel %vm673, %v762, %v763
      %v765 = vrot.slane %v620, 5
      %v766 = vrot.slane %v765, 4
      %v767 = vrot.slane %v199, 5
      %v768 = vsel %vm673, %v766, %v767
      %v769 = vrot.slane %v767, 4
      %v770 = vrot.slane %v217, 5
      %v771 = vsel %vm673, %v769, %v770
      %v772 = vrot.slane %v621, 5
      %v773 = vrot.slane %v772, 4
      %v774 = vrot.slane %v201, 5
      %v775 = vsel %vm673, %v773, %v774
      %v776 = vrot.slane %v774, 4
      %v777 = vrot.slane %v218, 5
      %v778 = vsel %vm673, %v776, %v777
      %v779 = vrot.slane %v622, 5
      %v780 = vrot.slane %v779, 4
      %v781 = vrot.slane %v203, 5
      %v782 = vsel %vm673, %v780, %v781
      %v783 = vrot.slane %v781, 4
      %v784 = vrot.slane %v219, 5
      %v785 = vsel %vm673, %v783, %v784
      %s786 = scalar_lea.vmem %s165, 12
      %v787 = vld [vmem:[%s786] sm:$0xf]
      %v788 = vld [vmem:[%s786 + $0x4] sm:$0xf]
      %v789 = vld [vmem:[%s786 + $0xc] sm:$0xf]
      %v790 = vld [vmem:[%s786 + $0x10] sm:$0xf]
      %v791 = vld [vmem:[%s786 + $0x18] sm:$0xf]
      %v792 = vld [vmem:[%s786 + $0x1c] sm:$0xf]
      %v793 = vld [vmem:[%s786 + $0x24] sm:$0xf]
      %v794 = vld [vmem:[%s786 + $0x28] sm:$0xf]
      %v795 = vld [vmem:[%s786 + $0x30] sm:$0xf]
      %v796 = vld [vmem:[%s786 + $0x34] sm:$0xf]
      %v797 = vld [vmem:[%s786 + $0x3c] sm:$0xf]
      %v798 = vld [vmem:[%s786 + $0x40] sm:$0xf]
      %v799 = vld [vmem:[%s786 + $0x48] sm:$0xf]
      %v800 = vld [vmem:[%s786 + $0x4c] sm:$0xf]
      %v801 = vld [vmem:[%s786 + $0x54] sm:$0xf]
      %v802 = vld [vmem:[%s786 + $0x58] sm:$0xf]
      %v803 = vld [vmem:[%s786 + $0x60] sm:$0xf]
      %v804 = vld [vmem:[%s786 + $0x64] sm:$0xf]
      %v805 = vld [vmem:[%s786 + $0x6c] sm:$0xf]
      %v806 = vld [vmem:[%s786 + $0x70] sm:$0xf]
      %v807 = vld [vmem:[%s786 + $0x78] sm:$0xf]
      %v808 = vld [vmem:[%s786 + $0x7c] sm:$0xf]
      %v809 = vld [vmem:[%s786 + $0x84] sm:$0xf]
      %v810 = vld [vmem:[%s786 + $0x88] sm:$0xf]
      %v811 = vld [vmem:[%s786 + $0x90] sm:$0xf]
      %v812 = vld [vmem:[%s786 + $0x94] sm:$0xf]
      %v813 = vld [vmem:[%s786 + $0x9c] sm:$0xf]
      %v814 = vld [vmem:[%s786 + $0xa0] sm:$0xf]
      %v815 = vld [vmem:[%s786 + $0xa8] sm:$0xf]
      %v816 = vld [vmem:[%s786 + $0xac] sm:$0xf]
      %v817 = vld [vmem:[%s786 + $0xb4] sm:$0xf]
      %v818 = vld [vmem:[%s786 + $0xb8] sm:$0xf]
      %v819 = vld [vmem:[%s786 + $0x8] sm:$0x1]
      %v820 = vld [vmem:[%s786 + $0x14] sm:$0x1]
      %v821 = vld [vmem:[%s786 + $0x20] sm:$0x1]
      %v822 = vld [vmem:[%s786 + $0x2c] sm:$0x1]
      %v823 = vld [vmem:[%s786 + $0x38] sm:$0x1]
      %v824 = vld [vmem:[%s786 + $0x44] sm:$0x1]
      %v825 = vld [vmem:[%s786 + $0x50] sm:$0x1]
      %v826 = vld [vmem:[%s786 + $0x5c] sm:$0x1]
      %v827 = vld [vmem:[%s786 + $0x68] sm:$0x1]
      %v828 = vld [vmem:[%s786 + $0x74] sm:$0x1]
      %v829 = vld [vmem:[%s786 + $0x80] sm:$0x1]
      %v830 = vld [vmem:[%s786 + $0x8c] sm:$0x1]
      %v831 = vld [vmem:[%s786 + $0x98] sm:$0x1]
      %v832 = vld [vmem:[%s786 + $0xa4] sm:$0x1]
      %v833 = vld [vmem:[%s786 + $0xb0] sm:$0x1]
      %v834 = vld [vmem:[%s786 + $0xbc] sm:$0x1]
      %v836 = vshrl.u32 %v787, 16
      %v838 = vrot.slane %v836, 4
      %v839 = vshll.u32 %v787, 16
      %v841 = vrot.slane %v839, 5
      %v842 = vor.u32 %v838, %v841
      %v843 = vrot.slane %v842, 4
      %v845 = vshll.u32 %v788, 16
      %v847 = vrot.slane %v845, 5
      %v848 = vsel %vm222, %v843, %v847
      %v849 = vshrl.u32 %v788, 16
      %v851 = vrot.slane %v849, 4
      %v852 = vor.u32 %v851, %v847
      %v853 = vrot.slane %v852, 4
      %v855 = vshll.u32 %v819, 16
      %v857 = vrot.slane %v855, 5
      %v858 = vsel %vm222, %v853, %v857
      %v860 = vshrl.u32 %v789, 16
      %v862 = vrot.slane %v860, 4
      %v863 = vshll.u32 %v789, 16
      %v865 = vrot.slane %v863, 5
      %v866 = vor.u32 %v862, %v865
      %v867 = vrot.slane %v866, 4
      %v869 = vshll.u32 %v790, 16
      %v871 = vrot.slane %v869, 5
      %v872 = vsel %vm222, %v867, %v871
      %v873 = vshrl.u32 %v790, 16
      %v875 = vrot.slane %v873, 4
      %v876 = vor.u32 %v875, %v871
      %v877 = vrot.slane %v876, 4
      %v879 = vshll.u32 %v820, 16
      %v881 = vrot.slane %v879, 5
      %v882 = vsel %vm222, %v877, %v881
      %v884 = vshrl.u32 %v791, 16
      %v886 = vrot.slane %v884, 4
      %v887 = vshll.u32 %v791, 16
      %v889 = vrot.slane %v887, 5
      %v890 = vor.u32 %v886, %v889
      %v891 = vrot.slane %v890, 4
      %v893 = vshll.u32 %v792, 16
      %v895 = vrot.slane %v893, 5
      %v896 = vsel %vm222, %v891, %v895
      %v897 = vshrl.u32 %v792, 16
      %v899 = vrot.slane %v897, 4
      %v900 = vor.u32 %v899, %v895
      %v901 = vrot.slane %v900, 4
      %v903 = vshll.u32 %v821, 16
      %v905 = vrot.slane %v903, 5
      %v906 = vsel %vm222, %v901, %v905
      %v908 = vshrl.u32 %v793, 16
      %v910 = vrot.slane %v908, 4
      %v911 = vshll.u32 %v793, 16
      %v913 = vrot.slane %v911, 5
      %v914 = vor.u32 %v910, %v913
      %v915 = vrot.slane %v914, 4
      %v917 = vshll.u32 %v794, 16
      %v919 = vrot.slane %v917, 5
      %v920 = vsel %vm222, %v915, %v919
      %v921 = vshrl.u32 %v794, 16
      %v923 = vrot.slane %v921, 4
      %v924 = vor.u32 %v923, %v919
      %v925 = vrot.slane %v924, 4
      %v927 = vshll.u32 %v822, 16
      %v929 = vrot.slane %v927, 5
      %v930 = vsel %vm222, %v925, %v929
      %v932 = vshrl.u32 %v795, 16
      %v934 = vrot.slane %v932, 4
      %v935 = vshll.u32 %v795, 16
      %v937 = vrot.slane %v935, 5
      %v938 = vor.u32 %v934, %v937
      %v939 = vrot.slane %v938, 4
      %v941 = vshll.u32 %v796, 16
      %v943 = vrot.slane %v941, 5
      %v944 = vsel %vm222, %v939, %v943
      %v945 = vshrl.u32 %v796, 16
      %v947 = vrot.slane %v945, 4
      %v948 = vor.u32 %v947, %v943
      %v949 = vrot.slane %v948, 4
      %v951 = vshll.u32 %v823, 16
      %v953 = vrot.slane %v951, 5
      %v954 = vsel %vm222, %v949, %v953
      %v956 = vshrl.u32 %v797, 16
      %v958 = vrot.slane %v956, 4
      %v959 = vshll.u32 %v797, 16
      %v961 = vrot.slane %v959, 5
      %v962 = vor.u32 %v958, %v961
      %v963 = vrot.slane %v962, 4
      %v965 = vshll.u32 %v798, 16
      %v967 = vrot.slane %v965, 5
      %v968 = vsel %vm222, %v963, %v967
      %v969 = vshrl.u32 %v798, 16
      %v971 = vrot.slane %v969, 4
      %v972 = vor.u32 %v971, %v967
      %v973 = vrot.slane %v972, 4
      %v975 = vshll.u32 %v824, 16
      %v977 = vrot.slane %v975, 5
      %v978 = vsel %vm222, %v973, %v977
      %v980 = vshrl.u32 %v799, 16
      %v982 = vrot.slane %v980, 4
      %v983 = vshll.u32 %v799, 16
      %v985 = vrot.slane %v983, 5
      %v986 = vor.u32 %v982, %v985
      %v987 = vrot.slane %v986, 4
      %v989 = vshll.u32 %v800, 16
      %v991 = vrot.slane %v989, 5
      %v992 = vsel %vm222, %v987, %v991
      %v993 = vshrl.u32 %v800, 16
      %v995 = vrot.slane %v993, 4
      %v996 = vor.u32 %v995, %v991
      %v997 = vrot.slane %v996, 4
      %v999 = vshll.u32 %v825, 16
      %v1001 = vrot.slane %v999, 5
      %v1002 = vsel %vm222, %v997, %v1001
      %v1004 = vshrl.u32 %v801, 16
      %v1006 = vrot.slane %v1004, 4
      %v1007 = vshll.u32 %v801, 16
      %v1009 = vrot.slane %v1007, 5
      %v1010 = vor.u32 %v1006, %v1009
      %v1011 = vrot.slane %v1010, 4
      %v1013 = vshll.u32 %v802, 16
      %v1015 = vrot.slane %v1013, 5
      %v1016 = vsel %vm222, %v1011, %v1015
      %v1017 = vshrl.u32 %v802, 16
      %v1019 = vrot.slane %v1017, 4
      %v1020 = vor.u32 %v1019, %v1015
      %v1021 = vrot.slane %v1020, 4
      %v1023 = vshll.u32 %v826, 16
      %v1025 = vrot.slane %v1023, 5
      %v1026 = vsel %vm222, %v1021, %v1025
      %v1028 = vshrl.u32 %v803, 16
      %v1030 = vrot.slane %v1028, 4
      %v1031 = vshll.u32 %v803, 16
      %v1033 = vrot.slane %v1031, 5
      %v1034 = vor.u32 %v1030, %v1033
      %v1035 = vrot.slane %v1034, 4
      %v1037 = vshll.u32 %v804, 16
      %v1039 = vrot.slane %v1037, 5
      %v1040 = vsel %vm222, %v1035, %v1039
      %v1041 = vshrl.u32 %v804, 16
      %v1043 = vrot.slane %v1041, 4
      %v1044 = vor.u32 %v1043, %v1039
      %v1045 = vrot.slane %v1044, 4
      %v1047 = vshll.u32 %v827, 16
      %v1049 = vrot.slane %v1047, 5
      %v1050 = vsel %vm222, %v1045, %v1049
      %v1052 = vshrl.u32 %v805, 16
      %v1054 = vrot.slane %v1052, 4
      %v1055 = vshll.u32 %v805, 16
      %v1057 = vrot.slane %v1055, 5
      %v1058 = vor.u32 %v1054, %v1057
      %v1059 = vrot.slane %v1058, 4
      %v1061 = vshll.u32 %v806, 16
      %v1063 = vrot.slane %v1061, 5
      %v1064 = vsel %vm222, %v1059, %v1063
      %v1065 = vshrl.u32 %v806, 16
      %v1067 = vrot.slane %v1065, 4
      %v1068 = vor.u32 %v1067, %v1063
      %v1069 = vrot.slane %v1068, 4
      %v1071 = vshll.u32 %v828, 16
      %v1073 = vrot.slane %v1071, 5
      %v1074 = vsel %vm222, %v1069, %v1073
      %v1076 = vshrl.u32 %v807, 16
      %v1078 = vrot.slane %v1076, 4
      %v1079 = vshll.u32 %v807, 16
      %v1081 = vrot.slane %v1079, 5
      %v1082 = vor.u32 %v1078, %v1081
      %v1083 = vrot.slane %v1082, 4
      %v1085 = vshll.u32 %v808, 16
      %v1087 = vrot.slane %v1085, 5
      %v1088 = vsel %vm222, %v1083, %v1087
      %v1089 = vshrl.u32 %v808, 16
      %v1091 = vrot.slane %v1089, 4
      %v1092 = vor.u32 %v1091, %v1087
      %v1093 = vrot.slane %v1092, 4
      %v1095 = vshll.u32 %v829, 16
      %v1097 = vrot.slane %v1095, 5
      %v1098 = vsel %vm222, %v1093, %v1097
      %v1100 = vshrl.u32 %v809, 16
      %v1102 = vrot.slane %v1100, 4
      %v1103 = vshll.u32 %v809, 16
      %v1105 = vrot.slane %v1103, 5
      %v1106 = vor.u32 %v1102, %v1105
      %v1107 = vrot.slane %v1106, 4
      %v1109 = vshll.u32 %v810, 16
      %v1111 = vrot.slane %v1109, 5
      %v1112 = vsel %vm222, %v1107, %v1111
      %v1113 = vshrl.u32 %v810, 16
      %v1115 = vrot.slane %v1113, 4
      %v1116 = vor.u32 %v1115, %v1111
      %v1117 = vrot.slane %v1116, 4
      %v1119 = vshll.u32 %v830, 16
      %v1121 = vrot.slane %v1119, 5
      %v1122 = vsel %vm222, %v1117, %v1121
      %v1124 = vshrl.u32 %v811, 16
      %v1126 = vrot.slane %v1124, 4
      %v1127 = vshll.u32 %v811, 16
      %v1129 = vrot.slane %v1127, 5
      %v1130 = vor.u32 %v1126, %v1129
      %v1131 = vrot.slane %v1130, 4
      %v1133 = vshll.u32 %v812, 16
      %v1135 = vrot.slane %v1133, 5
      %v1136 = vsel %vm222, %v1131, %v1135
      %v1137 = vshrl.u32 %v812, 16
      %v1139 = vrot.slane %v1137, 4
      %v1140 = vor.u32 %v1139, %v1135
      %v1141 = vrot.slane %v1140, 4
      %v1143 = vshll.u32 %v831, 16
      %v1145 = vrot.slane %v1143, 5
      %v1146 = vsel %vm222, %v1141, %v1145
      %v1148 = vshrl.u32 %v813, 16
      %v1150 = vrot.slane %v1148, 4
      %v1151 = vshll.u32 %v813, 16
      %v1153 = vrot.slane %v1151, 5
      %v1154 = vor.u32 %v1150, %v1153
      %v1155 = vrot.slane %v1154, 4
      %v1157 = vshll.u32 %v814, 16
      %v1159 = vrot.slane %v1157, 5
      %v1160 = vsel %vm222, %v1155, %v1159
      %v1161 = vshrl.u32 %v814, 16
      %v1163 = vrot.slane %v1161, 4
      %v1164 = vor.u32 %v1163, %v1159
      %v1165 = vrot.slane %v1164, 4
      %v1167 = vshll.u32 %v832, 16
      %v1169 = vrot.slane %v1167, 5
      %v1170 = vsel %vm222, %v1165, %v1169
      %v1172 = vshrl.u32 %v815, 16
      %v1174 = vrot.slane %v1172, 4
      %v1175 = vshll.u32 %v815, 16
      %v1177 = vrot.slane %v1175, 5
      %v1178 = vor.u32 %v1174, %v1177
      %v1179 = vrot.slane %v1178, 4
      %v1181 = vshll.u32 %v816, 16
      %v1183 = vrot.slane %v1181, 5
      %v1184 = vsel %vm222, %v1179, %v1183
      %v1185 = vshrl.u32 %v816, 16
      %v1187 = vrot.slane %v1185, 4
      %v1188 = vor.u32 %v1187, %v1183
      %v1189 = vrot.slane %v1188, 4
      %v1191 = vshll.u32 %v833, 16
      %v1193 = vrot.slane %v1191, 5
      %v1194 = vsel %vm222, %v1189, %v1193
      %v1196 = vshrl.u32 %v817, 16
      %v1198 = vrot.slane %v1196, 4
      %v1199 = vshll.u32 %v817, 16
      %v1201 = vrot.slane %v1199, 5
      %v1202 = vor.u32 %v1198, %v1201
      %v1203 = vrot.slane %v1202, 4
      %v1205 = vshll.u32 %v818, 16
      %v1207 = vrot.slane %v1205, 5
      %v1208 = vsel %vm222, %v1203, %v1207
      %v1209 = vshrl.u32 %v818, 16
      %v1211 = vrot.slane %v1209, 4
      %v1212 = vor.u32 %v1211, %v1207
      %v1213 = vrot.slane %v1212, 4
      %v1215 = vshll.u32 %v834, 16
      %v1217 = vrot.slane %v1215, 5
      %v1218 = vsel %vm222, %v1213, %v1217
      %v1219 = vld [vmem:[%s786] sm:$0xe]
      %v1220 = vld [vmem:[%s786 + $0xc] sm:$0xe]
      %v1221 = vld [vmem:[%s786 + $0x18] sm:$0xe]
      %v1222 = vld [vmem:[%s786 + $0x24] sm:$0xe]
      %v1223 = vld [vmem:[%s786 + $0x30] sm:$0xe]
      %v1224 = vld [vmem:[%s786 + $0x3c] sm:$0xe]
      %v1225 = vld [vmem:[%s786 + $0x48] sm:$0xe]
      %v1226 = vld [vmem:[%s786 + $0x54] sm:$0xe]
      %v1227 = vld [vmem:[%s786 + $0x60] sm:$0xe]
      %v1228 = vld [vmem:[%s786 + $0x6c] sm:$0xe]
      %v1229 = vld [vmem:[%s786 + $0x78] sm:$0xe]
      %v1230 = vld [vmem:[%s786 + $0x84] sm:$0xe]
      %v1231 = vld [vmem:[%s786 + $0x90] sm:$0xe]
      %v1232 = vld [vmem:[%s786 + $0x9c] sm:$0xe]
      %v1233 = vld [vmem:[%s786 + $0xa8] sm:$0xe]
      %v1234 = vld [vmem:[%s786 + $0xb4] sm:$0xe]
      %v1283 = vrot.slane %v1219, 5
      %v1284 = vrot.slane %v1283, 4
      %v1285 = vrot.slane %v788, 5
      %v1286 = vsel %vm673, %v1284, %v1285
      %v1287 = vrot.slane %v1285, 4
      %v1288 = vrot.slane %v819, 5
      %v1289 = vsel %vm673, %v1287, %v1288
      %v1290 = vrot.slane %v1220, 5
      %v1291 = vrot.slane %v1290, 4
      %v1292 = vrot.slane %v790, 5
      %v1293 = vsel %vm673, %v1291, %v1292
      %v1294 = vrot.slane %v1292, 4
      %v1295 = vrot.slane %v820, 5
      %v1296 = vsel %vm673, %v1294, %v1295
      %v1297 = vrot.slane %v1221, 5
      %v1298 = vrot.slane %v1297, 4
      %v1299 = vrot.slane %v792, 5
      %v1300 = vsel %vm673, %v1298, %v1299
      %v1301 = vrot.slane %v1299, 4
      %v1302 = vrot.slane %v821, 5
      %v1303 = vsel %vm673, %v1301, %v1302
      %v1304 = vrot.slane %v1222, 5
      %v1305 = vrot.slane %v1304, 4
      %v1306 = vrot.slane %v794, 5
      %v1307 = vsel %vm673, %v1305, %v1306
      %v1308 = vrot.slane %v1306, 4
      %v1309 = vrot.slane %v822, 5
      %v1310 = vsel %vm673, %v1308, %v1309
      %v1311 = vrot.slane %v1223, 5
      %v1312 = vrot.slane %v1311, 4
      %v1313 = vrot.slane %v796, 5
      %v1314 = vsel %vm673, %v1312, %v1313
      %v1315 = vrot.slane %v1313, 4
      %v1316 = vrot.slane %v823, 5
      %v1317 = vsel %vm673, %v1315, %v1316
      %v1318 = vrot.slane %v1224, 5
      %v1319 = vrot.slane %v1318, 4
      %v1320 = vrot.slane %v798, 5
      %v1321 = vsel %vm673, %v1319, %v1320
      %v1322 = vrot.slane %v1320, 4
      %v1323 = vrot.slane %v824, 5
      %v1324 = vsel %vm673, %v1322, %v1323
      %v1325 = vrot.slane %v1225, 5
      %v1326 = vrot.slane %v1325, 4
      %v1327 = vrot.slane %v800, 5
      %v1328 = vsel %vm673, %v1326, %v1327
      %v1329 = vrot.slane %v1327, 4
      %v1330 = vrot.slane %v825, 5
      %v1331 = vsel %vm673, %v1329, %v1330
      %v1332 = vrot.slane %v1226, 5
      %v1333 = vrot.slane %v1332, 4
      %v1334 = vrot.slane %v802, 5
      %v1335 = vsel %vm673, %v1333, %v1334
      %v1336 = vrot.slane %v1334, 4
      %v1337 = vrot.slane %v826, 5
      %v1338 = vsel %vm673, %v1336, %v1337
      %v1339 = vrot.slane %v1227, 5
      %v1340 = vrot.slane %v1339, 4
      %v1341 = vrot.slane %v804, 5
      %v1342 = vsel %vm673, %v1340, %v1341
      %v1343 = vrot.slane %v1341, 4
      %v1344 = vrot.slane %v827, 5
      %v1345 = vsel %vm673, %v1343, %v1344
      %v1346 = vrot.slane %v1228, 5
      %v1347 = vrot.slane %v1346, 4
      %v1348 = vrot.slane %v806, 5
      %v1349 = vsel %vm673, %v1347, %v1348
      %v1350 = vrot.slane %v1348, 4
      %v1351 = vrot.slane %v828, 5
      %v1352 = vsel %vm673, %v1350, %v1351
      %v1353 = vrot.slane %v1229, 5
      %v1354 = vrot.slane %v1353, 4
      %v1355 = vrot.slane %v808, 5
      %v1356 = vsel %vm673, %v1354, %v1355
      %v1357 = vrot.slane %v1355, 4
      %v1358 = vrot.slane %v829, 5
      %v1359 = vsel %vm673, %v1357, %v1358
      %v1360 = vrot.slane %v1230, 5
      %v1361 = vrot.slane %v1360, 4
      %v1362 = vrot.slane %v810, 5
      %v1363 = vsel %vm673, %v1361, %v1362
      %v1364 = vrot.slane %v1362, 4
      %v1365 = vrot.slane %v830, 5
      %v1366 = vsel %vm673, %v1364, %v1365
      %v1367 = vrot.slane %v1231, 5
      %v1368 = vrot.slane %v1367, 4
      %v1369 = vrot.slane %v812, 5
      %v1370 = vsel %vm673, %v1368, %v1369
      %v1371 = vrot.slane %v1369, 4
      %v1372 = vrot.slane %v831, 5
      %v1373 = vsel %vm673, %v1371, %v1372
      %v1374 = vrot.slane %v1232, 5
      %v1375 = vrot.slane %v1374, 4
      %v1376 = vrot.slane %v814, 5
      %v1377 = vsel %vm673, %v1375, %v1376
      %v1378 = vrot.slane %v1376, 4
      %v1379 = vrot.slane %v832, 5
      %v1380 = vsel %vm673, %v1378, %v1379
      %v1381 = vrot.slane %v1233, 5
      %v1382 = vrot.slane %v1381, 4
      %v1383 = vrot.slane %v816, 5
      %v1384 = vsel %vm673, %v1382, %v1383
      %v1385 = vrot.slane %v1383, 4
      %v1386 = vrot.slane %v833, 5
      %v1387 = vsel %vm673, %v1385, %v1386
      %v1388 = vrot.slane %v1234, 5
      %v1389 = vrot.slane %v1388, 4
      %v1390 = vrot.slane %v818, 5
      %v1391 = vsel %vm673, %v1389, %v1390
      %v1392 = vrot.slane %v1390, 4
      %v1393 = vrot.slane %v834, 5
      %v1394 = vsel %vm673, %v1392, %v1393
      %s1395 = scalar_lea.vmem %s165, 24
      %v1396 = vld [vmem:[%s1395] sm:$0xf]
      %v1397 = vld [vmem:[%s1395 + $0x4] sm:$0xf]
      %v1398 = vld [vmem:[%s1395 + $0xc] sm:$0xf]
      %v1399 = vld [vmem:[%s1395 + $0x10] sm:$0xf]
      %v1400 = vld [vmem:[%s1395 + $0x18] sm:$0xf]
      %v1401 = vld [vmem:[%s1395 + $0x1c] sm:$0xf]
      %v1402 = vld [vmem:[%s1395 + $0x24] sm:$0xf]
      %v1403 = vld [vmem:[%s1395 + $0x28] sm:$0xf]
      %v1404 = vld [vmem:[%s1395 + $0x30] sm:$0xf]
      %v1405 = vld [vmem:[%s1395 + $0x34] sm:$0xf]
      %v1406 = vld [vmem:[%s1395 + $0x3c] sm:$0xf]
      %v1407 = vld [vmem:[%s1395 + $0x40] sm:$0xf]
      %v1408 = vld [vmem:[%s1395 + $0x48] sm:$0xf]
      %v1409 = vld [vmem:[%s1395 + $0x4c] sm:$0xf]
      %v1410 = vld [vmem:[%s1395 + $0x54] sm:$0xf]
      %v1411 = vld [vmem:[%s1395 + $0x58] sm:$0xf]
      %v1412 = vld [vmem:[%s1395 + $0x60] sm:$0xf]
      %v1413 = vld [vmem:[%s1395 + $0x64] sm:$0xf]
      %v1414 = vld [vmem:[%s1395 + $0x6c] sm:$0xf]
      %v1415 = vld [vmem:[%s1395 + $0x70] sm:$0xf]
      %v1416 = vld [vmem:[%s1395 + $0x78] sm:$0xf]
      %v1417 = vld [vmem:[%s1395 + $0x7c] sm:$0xf]
      %v1418 = vld [vmem:[%s1395 + $0x84] sm:$0xf]
      %v1419 = vld [vmem:[%s1395 + $0x88] sm:$0xf]
      %v1420 = vld [vmem:[%s1395 + $0x90] sm:$0xf]
      %v1421 = vld [vmem:[%s1395 + $0x94] sm:$0xf]
      %v1422 = vld [vmem:[%s1395 + $0x9c] sm:$0xf]
      %v1423 = vld [vmem:[%s1395 + $0xa0] sm:$0xf]
      %v1424 = vld [vmem:[%s1395 + $0xa8] sm:$0xf]
      %v1425 = vld [vmem:[%s1395 + $0xac] sm:$0xf]
      %v1426 = vld [vmem:[%s1395 + $0xb4] sm:$0xf]
      %v1427 = vld [vmem:[%s1395 + $0xb8] sm:$0xf]
      %v1428 = vld [vmem:[%s1395 + $0x8] sm:$0x1]
      %v1429 = vld [vmem:[%s1395 + $0x14] sm:$0x1]
      %v1430 = vld [vmem:[%s1395 + $0x20] sm:$0x1]
      %v1431 = vld [vmem:[%s1395 + $0x2c] sm:$0x1]
      %v1432 = vld [vmem:[%s1395 + $0x38] sm:$0x1]
      %v1433 = vld [vmem:[%s1395 + $0x44] sm:$0x1]
      %v1434 = vld [vmem:[%s1395 + $0x50] sm:$0x1]
      %v1435 = vld [vmem:[%s1395 + $0x5c] sm:$0x1]
      %v1436 = vld [vmem:[%s1395 + $0x68] sm:$0x1]
      %v1437 = vld [vmem:[%s1395 + $0x74] sm:$0x1]
      %v1438 = vld [vmem:[%s1395 + $0x80] sm:$0x1]
      %v1439 = vld [vmem:[%s1395 + $0x8c] sm:$0x1]
      %v1440 = vld [vmem:[%s1395 + $0x98] sm:$0x1]
      %v1441 = vld [vmem:[%s1395 + $0xa4] sm:$0x1]
      %v1442 = vld [vmem:[%s1395 + $0xb0] sm:$0x1]
      %v1443 = vld [vmem:[%s1395 + $0xbc] sm:$0x1]
      %v1445 = vshrl.u32 %v1396, 16
      %v1447 = vrot.slane %v1445, 4
      %v1448 = vshll.u32 %v1396, 16
      %v1450 = vrot.slane %v1448, 5
      %v1451 = vor.u32 %v1447, %v1450
      %v1452 = vrot.slane %v1451, 4
      %v1454 = vshll.u32 %v1397, 16
      %v1456 = vrot.slane %v1454, 5
      %v1457 = vsel %vm222, %v1452, %v1456
      %v1458 = vshrl.u32 %v1397, 16
      %v1460 = vrot.slane %v1458, 4
      %v1461 = vor.u32 %v1460, %v1456
      %v1462 = vrot.slane %v1461, 4
      %v1464 = vshll.u32 %v1428, 16
      %v1466 = vrot.slane %v1464, 5
      %v1467 = vsel %vm222, %v1462, %v1466
      %v1469 = vshrl.u32 %v1398, 16
      %v1471 = vrot.slane %v1469, 4
      %v1472 = vshll.u32 %v1398, 16
      %v1474 = vrot.slane %v1472, 5
      %v1475 = vor.u32 %v1471, %v1474
      %v1476 = vrot.slane %v1475, 4
      %v1478 = vshll.u32 %v1399, 16
      %v1480 = vrot.slane %v1478, 5
      %v1481 = vsel %vm222, %v1476, %v1480
      %v1482 = vshrl.u32 %v1399, 16
      %v1484 = vrot.slane %v1482, 4
      %v1485 = vor.u32 %v1484, %v1480
      %v1486 = vrot.slane %v1485, 4
      %v1488 = vshll.u32 %v1429, 16
      %v1490 = vrot.slane %v1488, 5
      %v1491 = vsel %vm222, %v1486, %v1490
      %v1493 = vshrl.u32 %v1400, 16
      %v1495 = vrot.slane %v1493, 4
      %v1496 = vshll.u32 %v1400, 16
      %v1498 = vrot.slane %v1496, 5
      %v1499 = vor.u32 %v1495, %v1498
      %v1500 = vrot.slane %v1499, 4
      %v1502 = vshll.u32 %v1401, 16
      %v1504 = vrot.slane %v1502, 5
      %v1505 = vsel %vm222, %v1500, %v1504
      %v1506 = vshrl.u32 %v1401, 16
      %v1508 = vrot.slane %v1506, 4
      %v1509 = vor.u32 %v1508, %v1504
      %v1510 = vrot.slane %v1509, 4
      %v1512 = vshll.u32 %v1430, 16
      %v1514 = vrot.slane %v1512, 5
      %v1515 = vsel %vm222, %v1510, %v1514
      %v1517 = vshrl.u32 %v1402, 16
      %v1519 = vrot.slane %v1517, 4
      %v1520 = vshll.u32 %v1402, 16
      %v1522 = vrot.slane %v1520, 5
      %v1523 = vor.u32 %v1519, %v1522
      %v1524 = vrot.slane %v1523, 4
      %v1526 = vshll.u32 %v1403, 16
      %v1528 = vrot.slane %v1526, 5
      %v1529 = vsel %vm222, %v1524, %v1528
      %v1530 = vshrl.u32 %v1403, 16
      %v1532 = vrot.slane %v1530, 4
      %v1533 = vor.u32 %v1532, %v1528
      %v1534 = vrot.slane %v1533, 4
      %v1536 = vshll.u32 %v1431, 16
      %v1538 = vrot.slane %v1536, 5
      %v1539 = vsel %vm222, %v1534, %v1538
      %v1541 = vshrl.u32 %v1404, 16
      %v1543 = vrot.slane %v1541, 4
      %v1544 = vshll.u32 %v1404, 16
      %v1546 = vrot.slane %v1544, 5
      %v1547 = vor.u32 %v1543, %v1546
      %v1548 = vrot.slane %v1547, 4
      %v1550 = vshll.u32 %v1405, 16
      %v1552 = vrot.slane %v1550, 5
      %v1553 = vsel %vm222, %v1548, %v1552
      %v1554 = vshrl.u32 %v1405, 16
      %v1556 = vrot.slane %v1554, 4
      %v1557 = vor.u32 %v1556, %v1552
      %v1558 = vrot.slane %v1557, 4
      %v1560 = vshll.u32 %v1432, 16
      %v1562 = vrot.slane %v1560, 5
      %v1563 = vsel %vm222, %v1558, %v1562
      %v1565 = vshrl.u32 %v1406, 16
      %v1567 = vrot.slane %v1565, 4
      %v1568 = vshll.u32 %v1406, 16
      %v1570 = vrot.slane %v1568, 5
      %v1571 = vor.u32 %v1567, %v1570
      %v1572 = vrot.slane %v1571, 4
      %v1574 = vshll.u32 %v1407, 16
      %v1576 = vrot.slane %v1574, 5
      %v1577 = vsel %vm222, %v1572, %v1576
      %v1578 = vshrl.u32 %v1407, 16
      %v1580 = vrot.slane %v1578, 4
      %v1581 = vor.u32 %v1580, %v1576
      %v1582 = vrot.slane %v1581, 4
      %v1584 = vshll.u32 %v1433, 16
      %v1586 = vrot.slane %v1584, 5
      %v1587 = vsel %vm222, %v1582, %v1586
      %v1589 = vshrl.u32 %v1408, 16
      %v1591 = vrot.slane %v1589, 4
      %v1592 = vshll.u32 %v1408, 16
      %v1594 = vrot.slane %v1592, 5
      %v1595 = vor.u32 %v1591, %v1594
      %v1596 = vrot.slane %v1595, 4
      %v1598 = vshll.u32 %v1409, 16
      %v1600 = vrot.slane %v1598, 5
      %v1601 = vsel %vm222, %v1596, %v1600
      %v1602 = vshrl.u32 %v1409, 16
      %v1604 = vrot.slane %v1602, 4
      %v1605 = vor.u32 %v1604, %v1600
      %v1606 = vrot.slane %v1605, 4
      %v1608 = vshll.u32 %v1434, 16
      %v1610 = vrot.slane %v1608, 5
      %v1611 = vsel %vm222, %v1606, %v1610
      %v1613 = vshrl.u32 %v1410, 16
      %v1615 = vrot.slane %v1613, 4
      %v1616 = vshll.u32 %v1410, 16
      %v1618 = vrot.slane %v1616, 5
      %v1619 = vor.u32 %v1615, %v1618
      %v1620 = vrot.slane %v1619, 4
      %v1622 = vshll.u32 %v1411, 16
      %v1624 = vrot.slane %v1622, 5
      %v1625 = vsel %vm222, %v1620, %v1624
      %v1626 = vshrl.u32 %v1411, 16
      %v1628 = vrot.slane %v1626, 4
      %v1629 = vor.u32 %v1628, %v1624
      %v1630 = vrot.slane %v1629, 4
      %v1632 = vshll.u32 %v1435, 16
      %v1634 = vrot.slane %v1632, 5
      %v1635 = vsel %vm222, %v1630, %v1634
      %v1637 = vshrl.u32 %v1412, 16
      %v1639 = vrot.slane %v1637, 4
      %v1640 = vshll.u32 %v1412, 16
      %v1642 = vrot.slane %v1640, 5
      %v1643 = vor.u32 %v1639, %v1642
      %v1644 = vrot.slane %v1643, 4
      %v1646 = vshll.u32 %v1413, 16
      %v1648 = vrot.slane %v1646, 5
      %v1649 = vsel %vm222, %v1644, %v1648
      %v1650 = vshrl.u32 %v1413, 16
      %v1652 = vrot.slane %v1650, 4
      %v1653 = vor.u32 %v1652, %v1648
      %v1654 = vrot.slane %v1653, 4
      %v1656 = vshll.u32 %v1436, 16
      %v1658 = vrot.slane %v1656, 5
      %v1659 = vsel %vm222, %v1654, %v1658
      %v1661 = vshrl.u32 %v1414, 16
      %v1663 = vrot.slane %v1661, 4
      %v1664 = vshll.u32 %v1414, 16
      %v1666 = vrot.slane %v1664, 5
      %v1667 = vor.u32 %v1663, %v1666
      %v1668 = vrot.slane %v1667, 4
      %v1670 = vshll.u32 %v1415, 16
      %v1672 = vrot.slane %v1670, 5
      %v1673 = vsel %vm222, %v1668, %v1672
      %v1674 = vshrl.u32 %v1415, 16
      %v1676 = vrot.slane %v1674, 4
      %v1677 = vor.u32 %v1676, %v1672
      %v1678 = vrot.slane %v1677, 4
      %v1680 = vshll.u32 %v1437, 16
      %v1682 = vrot.slane %v1680, 5
      %v1683 = vsel %vm222, %v1678, %v1682
      %v1685 = vshrl.u32 %v1416, 16
      %v1687 = vrot.slane %v1685, 4
      %v1688 = vshll.u32 %v1416, 16
      %v1690 = vrot.slane %v1688, 5
      %v1691 = vor.u32 %v1687, %v1690
      %v1692 = vrot.slane %v1691, 4
      %v1694 = vshll.u32 %v1417, 16
      %v1696 = vrot.slane %v1694, 5
      %v1697 = vsel %vm222, %v1692, %v1696
      %v1698 = vshrl.u32 %v1417, 16
      %v1700 = vrot.slane %v1698, 4
      %v1701 = vor.u32 %v1700, %v1696
      %v1702 = vrot.slane %v1701, 4
      %v1704 = vshll.u32 %v1438, 16
      %v1706 = vrot.slane %v1704, 5
      %v1707 = vsel %vm222, %v1702, %v1706
      %v1709 = vshrl.u32 %v1418, 16
      %v1711 = vrot.slane %v1709, 4
      %v1712 = vshll.u32 %v1418, 16
      %v1714 = vrot.slane %v1712, 5
      %v1715 = vor.u32 %v1711, %v1714
      %v1716 = vrot.slane %v1715, 4
      %v1718 = vshll.u32 %v1419, 16
      %v1720 = vrot.slane %v1718, 5
      %v1721 = vsel %vm222, %v1716, %v1720
      %v1722 = vshrl.u32 %v1419, 16
      %v1724 = vrot.slane %v1722, 4
      %v1725 = vor.u32 %v1724, %v1720
      %v1726 = vrot.slane %v1725, 4
      %v1728 = vshll.u32 %v1439, 16
      %v1730 = vrot.slane %v1728, 5
      %v1731 = vsel %vm222, %v1726, %v1730
      %v1733 = vshrl.u32 %v1420, 16
      %v1735 = vrot.slane %v1733, 4
      %v1736 = vshll.u32 %v1420, 16
      %v1738 = vrot.slane %v1736, 5
      %v1739 = vor.u32 %v1735, %v1738
      %v1740 = vrot.slane %v1739, 4
      %v1742 = vshll.u32 %v1421, 16
      %v1744 = vrot.slane %v1742, 5
      %v1745 = vsel %vm222, %v1740, %v1744
      %v1746 = vshrl.u32 %v1421, 16
      %v1748 = vrot.slane %v1746, 4
      %v1749 = vor.u32 %v1748, %v1744
      %v1750 = vrot.slane %v1749, 4
      %v1752 = vshll.u32 %v1440, 16
      %v1754 = vrot.slane %v1752, 5
      %v1755 = vsel %vm222, %v1750, %v1754
      %v1757 = vshrl.u32 %v1422, 16
      %v1759 = vrot.slane %v1757, 4
      %v1760 = vshll.u32 %v1422, 16
      %v1762 = vrot.slane %v1760, 5
      %v1763 = vor.u32 %v1759, %v1762
      %v1764 = vrot.slane %v1763, 4
      %v1766 = vshll.u32 %v1423, 16
      %v1768 = vrot.slane %v1766, 5
      %v1769 = vsel %vm222, %v1764, %v1768
      %v1770 = vshrl.u32 %v1423, 16
      %v1772 = vrot.slane %v1770, 4
      %v1773 = vor.u32 %v1772, %v1768
      %v1774 = vrot.slane %v1773, 4
      %v1776 = vshll.u32 %v1441, 16
      %v1778 = vrot.slane %v1776, 5
      %v1779 = vsel %vm222, %v1774, %v1778
      %v1781 = vshrl.u32 %v1424, 16
      %v1783 = vrot.slane %v1781, 4
      %v1784 = vshll.u32 %v1424, 16
      %v1786 = vrot.slane %v1784, 5
      %v1787 = vor.u32 %v1783, %v1786
      %v1788 = vrot.slane %v1787, 4
      %v1790 = vshll.u32 %v1425, 16
      %v1792 = vrot.slane %v1790, 5
      %v1793 = vsel %vm222, %v1788, %v1792
      %v1794 = vshrl.u32 %v1425, 16
      %v1796 = vrot.slane %v1794, 4
      %v1797 = vor.u32 %v1796, %v1792
      %v1798 = vrot.slane %v1797, 4
      %v1800 = vshll.u32 %v1442, 16
      %v1802 = vrot.slane %v1800, 5
      %v1803 = vsel %vm222, %v1798, %v1802
      %v1805 = vshrl.u32 %v1426, 16
      %v1807 = vrot.slane %v1805, 4
      %v1808 = vshll.u32 %v1426, 16
      %v1810 = vrot.slane %v1808, 5
      %v1811 = vor.u32 %v1807, %v1810
      %v1812 = vrot.slane %v1811, 4
      %v1814 = vshll.u32 %v1427, 16
      %v1816 = vrot.slane %v1814, 5
      %v1817 = vsel %vm222, %v1812, %v1816
      %v1818 = vshrl.u32 %v1427, 16
      %v1820 = vrot.slane %v1818, 4
      %v1821 = vor.u32 %v1820, %v1816
      %v1822 = vrot.slane %v1821, 4
      %v1824 = vshll.u32 %v1443, 16
      %v1826 = vrot.slane %v1824, 5
      %v1827 = vsel %vm222, %v1822, %v1826
      %v1828 = vld [vmem:[%s1395] sm:$0xe]
      %v1829 = vld [vmem:[%s1395 + $0xc] sm:$0xe]
      %v1830 = vld [vmem:[%s1395 + $0x18] sm:$0xe]
      %v1831 = vld [vmem:[%s1395 + $0x24] sm:$0xe]
      %v1832 = vld [vmem:[%s1395 + $0x30] sm:$0xe]
      %v1833 = vld [vmem:[%s1395 + $0x3c] sm:$0xe]
      %v1834 = vld [vmem:[%s1395 + $0x48] sm:$0xe]
      %v1835 = vld [vmem:[%s1395 + $0x54] sm:$0xe]
      %v1836 = vld [vmem:[%s1395 + $0x60] sm:$0xe]
      %v1837 = vld [vmem:[%s1395 + $0x6c] sm:$0xe]
      %v1838 = vld [vmem:[%s1395 + $0x78] sm:$0xe]
      %v1839 = vld [vmem:[%s1395 + $0x84] sm:$0xe]
      %v1840 = vld [vmem:[%s1395 + $0x90] sm:$0xe]
      %v1841 = vld [vmem:[%s1395 + $0x9c] sm:$0xe]
      %v1842 = vld [vmem:[%s1395 + $0xa8] sm:$0xe]
      %v1843 = vld [vmem:[%s1395 + $0xb4] sm:$0xe]
      %v1892 = vrot.slane %v1828, 5
      %v1893 = vrot.slane %v1892, 4
      %v1894 = vrot.slane %v1397, 5
      %v1895 = vsel %vm673, %v1893, %v1894
      %v1896 = vrot.slane %v1894, 4
      %v1897 = vrot.slane %v1428, 5
      %v1898 = vsel %vm673, %v1896, %v1897
      %v1899 = vrot.slane %v1829, 5
      %v1900 = vrot.slane %v1899, 4
      %v1901 = vrot.slane %v1399, 5
      %v1902 = vsel %vm673, %v1900, %v1901
      %v1903 = vrot.slane %v1901, 4
      %v1904 = vrot.slane %v1429, 5
      %v1905 = vsel %vm673, %v1903, %v1904
      %v1906 = vrot.slane %v1830, 5
      %v1907 = vrot.slane %v1906, 4
      %v1908 = vrot.slane %v1401, 5
      %v1909 = vsel %vm673, %v1907, %v1908
      %v1910 = vrot.slane %v1908, 4
      %v1911 = vrot.slane %v1430, 5
      %v1912 = vsel %vm673, %v1910, %v1911
      %v1913 = vrot.slane %v1831, 5
      %v1914 = vrot.slane %v1913, 4
      %v1915 = vrot.slane %v1403, 5
      %v1916 = vsel %vm673, %v1914, %v1915
      %v1917 = vrot.slane %v1915, 4
      %v1918 = vrot.slane %v1431, 5
      %v1919 = vsel %vm673, %v1917, %v1918
      %v1920 = vrot.slane %v1832, 5
      %v1921 = vrot.slane %v1920, 4
      %v1922 = vrot.slane %v1405, 5
      %v1923 = vsel %vm673, %v1921, %v1922
      %v1924 = vrot.slane %v1922, 4
      %v1925 = vrot.slane %v1432, 5
      %v1926 = vsel %vm673, %v1924, %v1925
      %v1927 = vrot.slane %v1833, 5
      %v1928 = vrot.slane %v1927, 4
      %v1929 = vrot.slane %v1407, 5
      %v1930 = vsel %vm673, %v1928, %v1929
      %v1931 = vrot.slane %v1929, 4
      %v1932 = vrot.slane %v1433, 5
      %v1933 = vsel %vm673, %v1931, %v1932
      %v1934 = vrot.slane %v1834, 5
      %v1935 = vrot.slane %v1934, 4
      %v1936 = vrot.slane %v1409, 5
      %v1937 = vsel %vm673, %v1935, %v1936
      %v1938 = vrot.slane %v1936, 4
      %v1939 = vrot.slane %v1434, 5
      %v1940 = vsel %vm673, %v1938, %v1939
      %v1941 = vrot.slane %v1835, 5
      %v1942 = vrot.slane %v1941, 4
      %v1943 = vrot.slane %v1411, 5
      %v1944 = vsel %vm673, %v1942, %v1943
      %v1945 = vrot.slane %v1943, 4
      %v1946 = vrot.slane %v1435, 5
      %v1947 = vsel %vm673, %v1945, %v1946
      %v1948 = vrot.slane %v1836, 5
      %v1949 = vrot.slane %v1948, 4
      %v1950 = vrot.slane %v1413, 5
      %v1951 = vsel %vm673, %v1949, %v1950
      %v1952 = vrot.slane %v1950, 4
      %v1953 = vrot.slane %v1436, 5
      %v1954 = vsel %vm673, %v1952, %v1953
      %v1955 = vrot.slane %v1837, 5
      %v1956 = vrot.slane %v1955, 4
      %v1957 = vrot.slane %v1415, 5
      %v1958 = vsel %vm673, %v1956, %v1957
      %v1959 = vrot.slane %v1957, 4
      %v1960 = vrot.slane %v1437, 5
      %v1961 = vsel %vm673, %v1959, %v1960
      %v1962 = vrot.slane %v1838, 5
      %v1963 = vrot.slane %v1962, 4
      %v1964 = vrot.slane %v1417, 5
      %v1965 = vsel %vm673, %v1963, %v1964
      %v1966 = vrot.slane %v1964, 4
      %v1967 = vrot.slane %v1438, 5
      %v1968 = vsel %vm673, %v1966, %v1967
      %v1969 = vrot.slane %v1839, 5
      %v1970 = vrot.slane %v1969, 4
      %v1971 = vrot.slane %v1419, 5
      %v1972 = vsel %vm673, %v1970, %v1971
      %v1973 = vrot.slane %v1971, 4
      %v1974 = vrot.slane %v1439, 5
      %v1975 = vsel %vm673, %v1973, %v1974
      %v1976 = vrot.slane %v1840, 5
      %v1977 = vrot.slane %v1976, 4
      %v1978 = vrot.slane %v1421, 5
      %v1979 = vsel %vm673, %v1977, %v1978
      %v1980 = vrot.slane %v1978, 4
      %v1981 = vrot.slane %v1440, 5
      %v1982 = vsel %vm673, %v1980, %v1981
      %v1983 = vrot.slane %v1841, 5
      %v1984 = vrot.slane %v1983, 4
      %v1985 = vrot.slane %v1423, 5
      %v1986 = vsel %vm673, %v1984, %v1985
      %v1987 = vrot.slane %v1985, 4
      %v1988 = vrot.slane %v1441, 5
      %v1989 = vsel %vm673, %v1987, %v1988
      %v1990 = vrot.slane %v1842, 5
      %v1991 = vrot.slane %v1990, 4
      %v1992 = vrot.slane %v1425, 5
      %v1993 = vsel %vm673, %v1991, %v1992
      %v1994 = vrot.slane %v1992, 4
      %v1995 = vrot.slane %v1442, 5
      %v1996 = vsel %vm673, %v1994, %v1995
      %v1997 = vrot.slane %v1843, 5
      %v1998 = vrot.slane %v1997, 4
      %v1999 = vrot.slane %v1427, 5
      %v2000 = vsel %vm673, %v1998, %v1999
      %v2001 = vrot.slane %v1999, 4
      %v2002 = vrot.slane %v1443, 5
      %v2003 = vsel %vm673, %v2001, %v2002
      %v2020 = vunpack.c.l.b16 %v172
      %v2021 = vunpack.c.l.b16 %v173
      %v2022 = vunpack.c.l.b16 %v174
      %v2023 = vunpack.c.l.b16 %v175
      %v2024 = vunpack.c.l.b16 %v176
      %v2025 = vunpack.c.l.b16 %v177
      %v2026 = vunpack.c.l.b16 %v178
      %v2027 = vunpack.c.l.b16 %v179
      %v2028 = vunpack.c.l.b16 %v180
      %v2029 = vunpack.c.l.b16 %v181
      %v2030 = vunpack.c.l.b16 %v182
      %v2031 = vunpack.c.l.b16 %v183
      %v2032 = vunpack.c.l.b16 %v184
      %v2033 = vunpack.c.l.b16 %v185
      %v2034 = vunpack.c.l.b16 %v186
      %v2035 = vunpack.c.l.b16 %v187
      %v2036 = vunpack.c.l.b16 %v188
      %v2037 = vunpack.c.l.b16 %v189
      %v2038 = vunpack.c.l.b16 %v190
      %v2039 = vunpack.c.l.b16 %v191
      %v2040 = vunpack.c.l.b16 %v192
      %v2041 = vunpack.c.l.b16 %v193
      %v2042 = vunpack.c.l.b16 %v194
      %v2043 = vunpack.c.l.b16 %v195
      %v2044 = vunpack.c.l.b16 %v196
      %v2045 = vunpack.c.l.b16 %v197
      %v2046 = vunpack.c.l.b16 %v198
      %v2047 = vunpack.c.l.b16 %v199
      %v2048 = vunpack.c.l.b16 %v200
      %v2049 = vunpack.c.l.b16 %v201
      %v2050 = vunpack.c.l.b16 %v202
      %v2051 = vunpack.c.l.b16 %v203
      %v2052 = vpack.c.b16 %v2021, %v2020
      %v2053 = vpack.c.b16 %v2023, %v2022
      %v2054 = vpack.c.b16 %v2025, %v2024
      %v2055 = vpack.c.b16 %v2027, %v2026
      %v2056 = vpack.c.b16 %v2029, %v2028
      %v2057 = vpack.c.b16 %v2031, %v2030
      %v2058 = vpack.c.b16 %v2033, %v2032
      %v2059 = vpack.c.b16 %v2035, %v2034
      %v2060 = vpack.c.b16 %v2037, %v2036
      %v2061 = vpack.c.b16 %v2039, %v2038
      %v2062 = vpack.c.b16 %v2041, %v2040
      %v2063 = vpack.c.b16 %v2043, %v2042
      %v2064 = vpack.c.b16 %v2045, %v2044
      %v2065 = vpack.c.b16 %v2047, %v2046
      %v2066 = vpack.c.b16 %v2049, %v2048
      %v2067 = vpack.c.b16 %v2051, %v2050
      %v2068 = vunpack.c.l.b16 %v236
      %v2069 = vunpack.c.l.b16 %v246
      %v2070 = vunpack.c.l.b16 %v260
      %v2071 = vunpack.c.l.b16 %v270
      %v2072 = vunpack.c.l.b16 %v284
      %v2073 = vunpack.c.l.b16 %v294
      %v2074 = vunpack.c.l.b16 %v308
      %v2075 = vunpack.c.l.b16 %v318
      %v2076 = vunpack.c.l.b16 %v332
      %v2077 = vunpack.c.l.b16 %v342
      %v2078 = vunpack.c.l.b16 %v356
      %v2079 = vunpack.c.l.b16 %v366
      %v2080 = vunpack.c.l.b16 %v380
      %v2081 = vunpack.c.l.b16 %v390
      %v2082 = vunpack.c.l.b16 %v404
      %v2083 = vunpack.c.l.b16 %v414
      %v2084 = vunpack.c.l.b16 %v428
      %v2085 = vunpack.c.l.b16 %v438
      %v2086 = vunpack.c.l.b16 %v452
      %v2087 = vunpack.c.l.b16 %v462
      %v2088 = vunpack.c.l.b16 %v476
      %v2089 = vunpack.c.l.b16 %v486
      %v2090 = vunpack.c.l.b16 %v500
      %v2091 = vunpack.c.l.b16 %v510
      %v2092 = vunpack.c.l.b16 %v524
      %v2093 = vunpack.c.l.b16 %v534
      %v2094 = vunpack.c.l.b16 %v548
      %v2095 = vunpack.c.l.b16 %v558
      %v2096 = vunpack.c.l.b16 %v572
      %v2097 = vunpack.c.l.b16 %v582
      %v2098 = vunpack.c.l.b16 %v596
      %v2099 = vunpack.c.l.b16 %v606
      %v2100 = vpack.c.b16 %v2069, %v2068
      %v2101 = vpack.c.b16 %v2071, %v2070
      %v2102 = vpack.c.b16 %v2073, %v2072
      %v2103 = vpack.c.b16 %v2075, %v2074
      %v2104 = vpack.c.b16 %v2077, %v2076
      %v2105 = vpack.c.b16 %v2079, %v2078
      %v2106 = vpack.c.b16 %v2081, %v2080
      %v2107 = vpack.c.b16 %v2083, %v2082
      %v2108 = vpack.c.b16 %v2085, %v2084
      %v2109 = vpack.c.b16 %v2087, %v2086
      %v2110 = vpack.c.b16 %v2089, %v2088
      %v2111 = vpack.c.b16 %v2091, %v2090
      %v2112 = vpack.c.b16 %v2093, %v2092
      %v2113 = vpack.c.b16 %v2095, %v2094
      %v2114 = vpack.c.b16 %v2097, %v2096
      %v2115 = vpack.c.b16 %v2099, %v2098
      %2116 = vrot.lane.b32.xlu0 %v2100, 4
      %v2117 = vpop.permute.xlu0 %2116
      %2118 = vrot.lane.b32.xlu0 %v2101, 4
      %v2119 = vpop.permute.xlu0 %2118
      %2120 = vrot.lane.b32.xlu0 %v2102, 4
      %v2121 = vpop.permute.xlu0 %2120
      %2122 = vrot.lane.b32.xlu0 %v2103, 4
      %v2123 = vpop.permute.xlu0 %2122
      %2124 = vrot.lane.b32.xlu0 %v2104, 4
      %v2125 = vpop.permute.xlu0 %2124
      %2126 = vrot.lane.b32.xlu0 %v2105, 4
      %v2127 = vpop.permute.xlu0 %2126
      %2128 = vrot.lane.b32.xlu0 %v2106, 4
      %v2129 = vpop.permute.xlu0 %2128
      %2130 = vrot.lane.b32.xlu0 %v2107, 4
      %v2131 = vpop.permute.xlu0 %2130
      %2132 = vrot.lane.b32.xlu0 %v2108, 4
      %v2133 = vpop.permute.xlu0 %2132
      %2134 = vrot.lane.b32.xlu0 %v2109, 4
      %v2135 = vpop.permute.xlu0 %2134
      %2136 = vrot.lane.b32.xlu0 %v2110, 4
      %v2137 = vpop.permute.xlu0 %2136
      %2138 = vrot.lane.b32.xlu0 %v2111, 4
      %v2139 = vpop.permute.xlu0 %2138
      %2140 = vrot.lane.b32.xlu0 %v2112, 4
      %v2141 = vpop.permute.xlu0 %2140
      %2142 = vrot.lane.b32.xlu0 %v2113, 4
      %v2143 = vpop.permute.xlu0 %2142
      %2144 = vrot.lane.b32.xlu0 %v2114, 4
      %v2145 = vpop.permute.xlu0 %2144
      %2146 = vrot.lane.b32.xlu0 %v2115, 4
      %v2147 = vpop.permute.xlu0 %2146
      %v2148 = vunpack.c.l.b16 %v677
      %v2149 = vunpack.c.l.b16 %v680
      %v2150 = vunpack.c.l.b16 %v684
      %v2151 = vunpack.c.l.b16 %v687
      %v2152 = vunpack.c.l.b16 %v691
      %v2153 = vunpack.c.l.b16 %v694
      %v2154 = vunpack.c.l.b16 %v698
      %v2155 = vunpack.c.l.b16 %v701
      %v2156 = vunpack.c.l.b16 %v705
      %v2157 = vunpack.c.l.b16 %v708
      %v2158 = vunpack.c.l.b16 %v712
      %v2159 = vunpack.c.l.b16 %v715
      %v2160 = vunpack.c.l.b16 %v719
      %v2161 = vunpack.c.l.b16 %v722
      %v2162 = vunpack.c.l.b16 %v726
      %v2163 = vunpack.c.l.b16 %v729
      %v2164 = vunpack.c.l.b16 %v733
      %v2165 = vunpack.c.l.b16 %v736
      %v2166 = vunpack.c.l.b16 %v740
      %v2167 = vunpack.c.l.b16 %v743
      %v2168 = vunpack.c.l.b16 %v747
      %v2169 = vunpack.c.l.b16 %v750
      %v2170 = vunpack.c.l.b16 %v754
      %v2171 = vunpack.c.l.b16 %v757
      %v2172 = vunpack.c.l.b16 %v761
      %v2173 = vunpack.c.l.b16 %v764
      %v2174 = vunpack.c.l.b16 %v768
      %v2175 = vunpack.c.l.b16 %v771
      %v2176 = vunpack.c.l.b16 %v775
      %v2177 = vunpack.c.l.b16 %v778
      %v2178 = vunpack.c.l.b16 %v782
      %v2179 = vunpack.c.l.b16 %v785
      %v2180 = vpack.c.b16 %v2149, %v2148
      %v2181 = vpack.c.b16 %v2151, %v2150
      %v2182 = vpack.c.b16 %v2153, %v2152
      %v2183 = vpack.c.b16 %v2155, %v2154
      %v2184 = vpack.c.b16 %v2157, %v2156
      %v2185 = vpack.c.b16 %v2159, %v2158
      %v2186 = vpack.c.b16 %v2161, %v2160
      %v2187 = vpack.c.b16 %v2163, %v2162
      %v2188 = vpack.c.b16 %v2165, %v2164
      %v2189 = vpack.c.b16 %v2167, %v2166
      %v2190 = vpack.c.b16 %v2169, %v2168
      %v2191 = vpack.c.b16 %v2171, %v2170
      %v2192 = vpack.c.b16 %v2173, %v2172
      %v2193 = vpack.c.b16 %v2175, %v2174
      %v2194 = vpack.c.b16 %v2177, %v2176
      %v2195 = vpack.c.b16 %v2179, %v2178
      %2196 = vrot.lane.b32.xlu0 %v2180, 8
      %v2197 = vpop.permute.xlu0 %2196
      %2198 = vrot.lane.b32.xlu0 %v2181, 8
      %v2199 = vpop.permute.xlu0 %2198
      %2200 = vrot.lane.b32.xlu0 %v2182, 8
      %v2201 = vpop.permute.xlu0 %2200
      %2202 = vrot.lane.b32.xlu0 %v2183, 8
      %v2203 = vpop.permute.xlu0 %2202
      %2204 = vrot.lane.b32.xlu0 %v2184, 8
      %v2205 = vpop.permute.xlu0 %2204
      %2206 = vrot.lane.b32.xlu0 %v2185, 8
      %v2207 = vpop.permute.xlu0 %2206
      %2208 = vrot.lane.b32.xlu0 %v2186, 8
      %v2209 = vpop.permute.xlu0 %2208
      %2210 = vrot.lane.b32.xlu0 %v2187, 8
      %v2211 = vpop.permute.xlu0 %2210
      %2212 = vrot.lane.b32.xlu0 %v2188, 8
      %v2213 = vpop.permute.xlu0 %2212
      %2214 = vrot.lane.b32.xlu0 %v2189, 8
      %v2215 = vpop.permute.xlu0 %2214
      %2216 = vrot.lane.b32.xlu0 %v2190, 8
      %v2217 = vpop.permute.xlu0 %2216
      %2218 = vrot.lane.b32.xlu0 %v2191, 8
      %v2219 = vpop.permute.xlu0 %2218
      %2220 = vrot.lane.b32.xlu0 %v2192, 8
      %v2221 = vpop.permute.xlu0 %2220
      %2222 = vrot.lane.b32.xlu0 %v2193, 8
      %v2223 = vpop.permute.xlu0 %2222
      %2224 = vrot.lane.b32.xlu0 %v2194, 8
      %v2225 = vpop.permute.xlu0 %2224
      %2226 = vrot.lane.b32.xlu0 %v2195, 8
      %v2227 = vpop.permute.xlu0 %2226
      %v2244 = vunpack.c.l.b16 %v787
      %v2245 = vunpack.c.l.b16 %v788
      %v2246 = vunpack.c.l.b16 %v789
      %v2247 = vunpack.c.l.b16 %v790
      %v2248 = vunpack.c.l.b16 %v791
      %v2249 = vunpack.c.l.b16 %v792
      %v2250 = vunpack.c.l.b16 %v793
      %v2251 = vunpack.c.l.b16 %v794
      %v2252 = vunpack.c.l.b16 %v795
      %v2253 = vunpack.c.l.b16 %v796
      %v2254 = vunpack.c.l.b16 %v797
      %v2255 = vunpack.c.l.b16 %v798
      %v2256 = vunpack.c.l.b16 %v799
      %v2257 = vunpack.c.l.b16 %v800
      %v2258 = vunpack.c.l.b16 %v801
      %v2259 = vunpack.c.l.b16 %v802
      %v2260 = vunpack.c.l.b16 %v803
      %v2261 = vunpack.c.l.b16 %v804
      %v2262 = vunpack.c.l.b16 %v805
      %v2263 = vunpack.c.l.b16 %v806
      %v2264 = vunpack.c.l.b16 %v807
      %v2265 = vunpack.c.l.b16 %v808
      %v2266 = vunpack.c.l.b16 %v809
      %v2267 = vunpack.c.l.b16 %v810
      %v2268 = vunpack.c.l.b16 %v811
      %v2269 = vunpack.c.l.b16 %v812
      %v2270 = vunpack.c.l.b16 %v813
      %v2271 = vunpack.c.l.b16 %v814
      %v2272 = vunpack.c.l.b16 %v815
      %v2273 = vunpack.c.l.b16 %v816
      %v2274 = vunpack.c.l.b16 %v817
      %v2275 = vunpack.c.l.b16 %v818
      %v2276 = vpack.c.b16 %v2245, %v2244
      %v2277 = vpack.c.b16 %v2247, %v2246
      %v2278 = vpack.c.b16 %v2249, %v2248
      %v2279 = vpack.c.b16 %v2251, %v2250
      %v2280 = vpack.c.b16 %v2253, %v2252
      %v2281 = vpack.c.b16 %v2255, %v2254
      %v2282 = vpack.c.b16 %v2257, %v2256
      %v2283 = vpack.c.b16 %v2259, %v2258
      %v2284 = vpack.c.b16 %v2261, %v2260
      %v2285 = vpack.c.b16 %v2263, %v2262
      %v2286 = vpack.c.b16 %v2265, %v2264
      %v2287 = vpack.c.b16 %v2267, %v2266
      %v2288 = vpack.c.b16 %v2269, %v2268
      %v2289 = vpack.c.b16 %v2271, %v2270
      %v2290 = vpack.c.b16 %v2273, %v2272
      %v2291 = vpack.c.b16 %v2275, %v2274
      %2292 = vrot.lane.b32.xlu0 %v2276, 12
      %v2293 = vpop.permute.xlu0 %2292
      %2294 = vrot.lane.b32.xlu0 %v2277, 12
      %v2295 = vpop.permute.xlu0 %2294
      %2296 = vrot.lane.b32.xlu0 %v2278, 12
      %v2297 = vpop.permute.xlu0 %2296
      %2298 = vrot.lane.b32.xlu0 %v2279, 12
      %v2299 = vpop.permute.xlu0 %2298
      %2300 = vrot.lane.b32.xlu0 %v2280, 12
      %v2301 = vpop.permute.xlu0 %2300
      %2302 = vrot.lane.b32.xlu0 %v2281, 12
      %v2303 = vpop.permute.xlu0 %2302
      %2304 = vrot.lane.b32.xlu0 %v2282, 12
      %v2305 = vpop.permute.xlu0 %2304
      %2306 = vrot.lane.b32.xlu0 %v2283, 12
      %v2307 = vpop.permute.xlu0 %2306
      %2308 = vrot.lane.b32.xlu0 %v2284, 12
      %v2309 = vpop.permute.xlu0 %2308
      %2310 = vrot.lane.b32.xlu0 %v2285, 12
      %v2311 = vpop.permute.xlu0 %2310
      %2312 = vrot.lane.b32.xlu0 %v2286, 12
      %v2313 = vpop.permute.xlu0 %2312
      %2314 = vrot.lane.b32.xlu0 %v2287, 12
      %v2315 = vpop.permute.xlu0 %2314
      %2316 = vrot.lane.b32.xlu0 %v2288, 12
      %v2317 = vpop.permute.xlu0 %2316
      %2318 = vrot.lane.b32.xlu0 %v2289, 12
      %v2319 = vpop.permute.xlu0 %2318
      %2320 = vrot.lane.b32.xlu0 %v2290, 12
      %v2321 = vpop.permute.xlu0 %2320
      %2322 = vrot.lane.b32.xlu0 %v2291, 12
      %v2323 = vpop.permute.xlu0 %2322
      %v2324 = vunpack.c.l.b16 %v848
      %v2325 = vunpack.c.l.b16 %v858
      %v2326 = vunpack.c.l.b16 %v872
      %v2327 = vunpack.c.l.b16 %v882
      %v2328 = vunpack.c.l.b16 %v896
      %v2329 = vunpack.c.l.b16 %v906
      %v2330 = vunpack.c.l.b16 %v920
      %v2331 = vunpack.c.l.b16 %v930
      %v2332 = vunpack.c.l.b16 %v944
      %v2333 = vunpack.c.l.b16 %v954
      %v2334 = vunpack.c.l.b16 %v968
      %v2335 = vunpack.c.l.b16 %v978
      %v2336 = vunpack.c.l.b16 %v992
      %v2337 = vunpack.c.l.b16 %v1002
      %v2338 = vunpack.c.l.b16 %v1016
      %v2339 = vunpack.c.l.b16 %v1026
      %v2340 = vunpack.c.l.b16 %v1040
      %v2341 = vunpack.c.l.b16 %v1050
      %v2342 = vunpack.c.l.b16 %v1064
      %v2343 = vunpack.c.l.b16 %v1074
      %v2344 = vunpack.c.l.b16 %v1088
      %v2345 = vunpack.c.l.b16 %v1098
      %v2346 = vunpack.c.l.b16 %v1112
      %v2347 = vunpack.c.l.b16 %v1122
      %v2348 = vunpack.c.l.b16 %v1136
      %v2349 = vunpack.c.l.b16 %v1146
      %v2350 = vunpack.c.l.b16 %v1160
      %v2351 = vunpack.c.l.b16 %v1170
      %v2352 = vunpack.c.l.b16 %v1184
      %v2353 = vunpack.c.l.b16 %v1194
      %v2354 = vunpack.c.l.b16 %v1208
      %v2355 = vunpack.c.l.b16 %v1218
      %v2356 = vpack.c.b16 %v2325, %v2324
      %v2357 = vpack.c.b16 %v2327, %v2326
      %v2358 = vpack.c.b16 %v2329, %v2328
      %v2359 = vpack.c.b16 %v2331, %v2330
      %v2360 = vpack.c.b16 %v2333, %v2332
      %v2361 = vpack.c.b16 %v2335, %v2334
      %v2362 = vpack.c.b16 %v2337, %v2336
      %v2363 = vpack.c.b16 %v2339, %v2338
      %v2364 = vpack.c.b16 %v2341, %v2340
      %v2365 = vpack.c.b16 %v2343, %v2342
      %v2366 = vpack.c.b16 %v2345, %v2344
      %v2367 = vpack.c.b16 %v2347, %v2346
      %v2368 = vpack.c.b16 %v2349, %v2348
      %v2369 = vpack.c.b16 %v2351, %v2350
      %v2370 = vpack.c.b16 %v2353, %v2352
      %v2371 = vpack.c.b16 %v2355, %v2354
      %2372 = vrot.lane.b32.xlu0 %v2356, 16
      %v2373 = vpop.permute.xlu0 %2372
      %2374 = vrot.lane.b32.xlu0 %v2357, 16
      %v2375 = vpop.permute.xlu0 %2374
      %2376 = vrot.lane.b32.xlu0 %v2358, 16
      %v2377 = vpop.permute.xlu0 %2376
      %2378 = vrot.lane.b32.xlu0 %v2359, 16
      %v2379 = vpop.permute.xlu0 %2378
      %2380 = vrot.lane.b32.xlu0 %v2360, 16
      %v2381 = vpop.permute.xlu0 %2380
      %2382 = vrot.lane.b32.xlu0 %v2361, 16
      %v2383 = vpop.permute.xlu0 %2382
      %2384 = vrot.lane.b32.xlu0 %v2362, 16
      %v2385 = vpop.permute.xlu0 %2384
      %2386 = vrot.lane.b32.xlu0 %v2363, 16
      %v2387 = vpop.permute.xlu0 %2386
      %2388 = vrot.lane.b32.xlu0 %v2364, 16
      %v2389 = vpop.permute.xlu0 %2388
      %2390 = vrot.lane.b32.xlu0 %v2365, 16
      %v2391 = vpop.permute.xlu0 %2390
      %2392 = vrot.lane.b32.xlu0 %v2366, 16
      %v2393 = vpop.permute.xlu0 %2392
      %2394 = vrot.lane.b32.xlu0 %v2367, 16
      %v2395 = vpop.permute.xlu0 %2394
      %2396 = vrot.lane.b32.xlu0 %v2368, 16
      %v2397 = vpop.permute.xlu0 %2396
      %2398 = vrot.lane.b32.xlu0 %v2369, 16
      %v2399 = vpop.permute.xlu0 %2398
      %2400 = vrot.lane.b32.xlu0 %v2370, 16
      %v2401 = vpop.permute.xlu0 %2400
      %2402 = vrot.lane.b32.xlu0 %v2371, 16
      %v2403 = vpop.permute.xlu0 %2402
      %v2404 = vunpack.c.l.b16 %v1286
      %v2405 = vunpack.c.l.b16 %v1289
      %v2406 = vunpack.c.l.b16 %v1293
      %v2407 = vunpack.c.l.b16 %v1296
      %v2408 = vunpack.c.l.b16 %v1300
      %v2409 = vunpack.c.l.b16 %v1303
      %v2410 = vunpack.c.l.b16 %v1307
      %v2411 = vunpack.c.l.b16 %v1310
      %v2412 = vunpack.c.l.b16 %v1314
      %v2413 = vunpack.c.l.b16 %v1317
      %v2414 = vunpack.c.l.b16 %v1321
      %v2415 = vunpack.c.l.b16 %v1324
      %v2416 = vunpack.c.l.b16 %v1328
      %v2417 = vunpack.c.l.b16 %v1331
      %v2418 = vunpack.c.l.b16 %v1335
      %v2419 = vunpack.c.l.b16 %v1338
      %v2420 = vunpack.c.l.b16 %v1342
      %v2421 = vunpack.c.l.b16 %v1345
      %v2422 = vunpack.c.l.b16 %v1349
      %v2423 = vunpack.c.l.b16 %v1352
      %v2424 = vunpack.c.l.b16 %v1356
      %v2425 = vunpack.c.l.b16 %v1359
      %v2426 = vunpack.c.l.b16 %v1363
      %v2427 = vunpack.c.l.b16 %v1366
      %v2428 = vunpack.c.l.b16 %v1370
      %v2429 = vunpack.c.l.b16 %v1373
      %v2430 = vunpack.c.l.b16 %v1377
      %v2431 = vunpack.c.l.b16 %v1380
      %v2432 = vunpack.c.l.b16 %v1384
      %v2433 = vunpack.c.l.b16 %v1387
      %v2434 = vunpack.c.l.b16 %v1391
      %v2435 = vunpack.c.l.b16 %v1394
      %v2436 = vpack.c.b16 %v2405, %v2404
      %v2437 = vpack.c.b16 %v2407, %v2406
      %v2438 = vpack.c.b16 %v2409, %v2408
      %v2439 = vpack.c.b16 %v2411, %v2410
      %v2440 = vpack.c.b16 %v2413, %v2412
      %v2441 = vpack.c.b16 %v2415, %v2414
      %v2442 = vpack.c.b16 %v2417, %v2416
      %v2443 = vpack.c.b16 %v2419, %v2418
      %v2444 = vpack.c.b16 %v2421, %v2420
      %v2445 = vpack.c.b16 %v2423, %v2422
      %v2446 = vpack.c.b16 %v2425, %v2424
      %v2447 = vpack.c.b16 %v2427, %v2426
      %v2448 = vpack.c.b16 %v2429, %v2428
      %v2449 = vpack.c.b16 %v2431, %v2430
      %v2450 = vpack.c.b16 %v2433, %v2432
      %v2451 = vpack.c.b16 %v2435, %v2434
      %2452 = vrot.lane.b32.xlu0 %v2436, 20
      %v2453 = vpop.permute.xlu0 %2452
      %2454 = vrot.lane.b32.xlu0 %v2437, 20
      %v2455 = vpop.permute.xlu0 %2454
      %2456 = vrot.lane.b32.xlu0 %v2438, 20
      %v2457 = vpop.permute.xlu0 %2456
      %2458 = vrot.lane.b32.xlu0 %v2439, 20
      %v2459 = vpop.permute.xlu0 %2458
      %2460 = vrot.lane.b32.xlu0 %v2440, 20
      %v2461 = vpop.permute.xlu0 %2460
      %2462 = vrot.lane.b32.xlu0 %v2441, 20
      %v2463 = vpop.permute.xlu0 %2462
      %2464 = vrot.lane.b32.xlu0 %v2442, 20
      %v2465 = vpop.permute.xlu0 %2464
      %2466 = vrot.lane.b32.xlu0 %v2443, 20
      %v2467 = vpop.permute.xlu0 %2466
      %2468 = vrot.lane.b32.xlu0 %v2444, 20
      %v2469 = vpop.permute.xlu0 %2468
      %2470 = vrot.lane.b32.xlu0 %v2445, 20
      %v2471 = vpop.permute.xlu0 %2470
      %2472 = vrot.lane.b32.xlu0 %v2446, 20
      %v2473 = vpop.permute.xlu0 %2472
      %2474 = vrot.lane.b32.xlu0 %v2447, 20
      %v2475 = vpop.permute.xlu0 %2474
      %2476 = vrot.lane.b32.xlu0 %v2448, 20
      %v2477 = vpop.permute.xlu0 %2476
      %2478 = vrot.lane.b32.xlu0 %v2449, 20
      %v2479 = vpop.permute.xlu0 %2478
      %2480 = vrot.lane.b32.xlu0 %v2450, 20
      %v2481 = vpop.permute.xlu0 %2480
      %2482 = vrot.lane.b32.xlu0 %v2451, 20
      %v2483 = vpop.permute.xlu0 %2482
      %v2500 = vunpack.c.l.b16 %v1396
      %v2501 = vunpack.c.l.b16 %v1397
      %v2502 = vunpack.c.l.b16 %v1398
      %v2503 = vunpack.c.l.b16 %v1399
      %v2504 = vunpack.c.l.b16 %v1400
      %v2505 = vunpack.c.l.b16 %v1401
      %v2506 = vunpack.c.l.b16 %v1402
      %v2507 = vunpack.c.l.b16 %v1403
      %v2508 = vunpack.c.l.b16 %v1404
      %v2509 = vunpack.c.l.b16 %v1405
      %v2510 = vunpack.c.l.b16 %v1406
      %v2511 = vunpack.c.l.b16 %v1407
      %v2512 = vunpack.c.l.b16 %v1408
      %v2513 = vunpack.c.l.b16 %v1409
      %v2514 = vunpack.c.l.b16 %v1410
      %v2515 = vunpack.c.l.b16 %v1411
      %v2516 = vunpack.c.l.b16 %v1412
      %v2517 = vunpack.c.l.b16 %v1413
      %v2518 = vunpack.c.l.b16 %v1414
      %v2519 = vunpack.c.l.b16 %v1415
      %v2520 = vunpack.c.l.b16 %v1416
      %v2521 = vunpack.c.l.b16 %v1417
      %v2522 = vunpack.c.l.b16 %v1418
      %v2523 = vunpack.c.l.b16 %v1419
      %v2524 = vunpack.c.l.b16 %v1420
      %v2525 = vunpack.c.l.b16 %v1421
      %v2526 = vunpack.c.l.b16 %v1422
      %v2527 = vunpack.c.l.b16 %v1423
      %v2528 = vunpack.c.l.b16 %v1424
      %v2529 = vunpack.c.l.b16 %v1425
      %v2530 = vunpack.c.l.b16 %v1426
      %v2531 = vunpack.c.l.b16 %v1427
      %v2532 = vpack.c.b16 %v2501, %v2500
      %v2533 = vpack.c.b16 %v2503, %v2502
      %v2534 = vpack.c.b16 %v2505, %v2504
      %v2535 = vpack.c.b16 %v2507, %v2506
      %v2536 = vpack.c.b16 %v2509, %v2508
      %v2537 = vpack.c.b16 %v2511, %v2510
      %v2538 = vpack.c.b16 %v2513, %v2512
      %v2539 = vpack.c.b16 %v2515, %v2514
      %v2540 = vpack.c.b16 %v2517, %v2516
      %v2541 = vpack.c.b16 %v2519, %v2518
      %v2542 = vpack.c.b16 %v2521, %v2520
      %v2543 = vpack.c.b16 %v2523, %v2522
      %v2544 = vpack.c.b16 %v2525, %v2524
      %v2545 = vpack.c.b16 %v2527, %v2526
      %v2546 = vpack.c.b16 %v2529, %v2528
      %v2547 = vpack.c.b16 %v2531, %v2530
      %2548 = vrot.lane.b32.xlu0 %v2532, 24
      %v2549 = vpop.permute.xlu0 %2548
      %2550 = vrot.lane.b32.xlu0 %v2533, 24
      %v2551 = vpop.permute.xlu0 %2550
      %2552 = vrot.lane.b32.xlu0 %v2534, 24
      %v2553 = vpop.permute.xlu0 %2552
      %2554 = vrot.lane.b32.xlu0 %v2535, 24
      %v2555 = vpop.permute.xlu0 %2554
      %2556 = vrot.lane.b32.xlu0 %v2536, 24
      %v2557 = vpop.permute.xlu0 %2556
      %2558 = vrot.lane.b32.xlu0 %v2537, 24
      %v2559 = vpop.permute.xlu0 %2558
      %2560 = vrot.lane.b32.xlu0 %v2538, 24
      %v2561 = vpop.permute.xlu0 %2560
      %2562 = vrot.lane.b32.xlu0 %v2539, 24
      %v2563 = vpop.permute.xlu0 %2562
      %2564 = vrot.lane.b32.xlu0 %v2540, 24
      %v2565 = vpop.permute.xlu0 %2564
      %2566 = vrot.lane.b32.xlu0 %v2541, 24
      %v2567 = vpop.permute.xlu0 %2566
      %2568 = vrot.lane.b32.xlu0 %v2542, 24
      %v2569 = vpop.permute.xlu0 %2568
      %2570 = vrot.lane.b32.xlu0 %v2543, 24
      %v2571 = vpop.permute.xlu0 %2570
      %2572 = vrot.lane.b32.xlu0 %v2544, 24
      %v2573 = vpop.permute.xlu0 %2572
      %2574 = vrot.lane.b32.xlu0 %v2545, 24
      %v2575 = vpop.permute.xlu0 %2574
      %2576 = vrot.lane.b32.xlu0 %v2546, 24
      %v2577 = vpop.permute.xlu0 %2576
      %2578 = vrot.lane.b32.xlu0 %v2547, 24
      %v2579 = vpop.permute.xlu0 %2578
      %v2580 = vunpack.c.l.b16 %v1457
      %v2581 = vunpack.c.l.b16 %v1467
      %v2582 = vunpack.c.l.b16 %v1481
      %v2583 = vunpack.c.l.b16 %v1491
      %v2584 = vunpack.c.l.b16 %v1505
      %v2585 = vunpack.c.l.b16 %v1515
      %v2586 = vunpack.c.l.b16 %v1529
      %v2587 = vunpack.c.l.b16 %v1539
      %v2588 = vunpack.c.l.b16 %v1553
      %v2589 = vunpack.c.l.b16 %v1563
      %v2590 = vunpack.c.l.b16 %v1577
      %v2591 = vunpack.c.l.b16 %v1587
      %v2592 = vunpack.c.l.b16 %v1601
      %v2593 = vunpack.c.l.b16 %v1611
      %v2594 = vunpack.c.l.b16 %v1625
      %v2595 = vunpack.c.l.b16 %v1635
      %v2596 = vunpack.c.l.b16 %v1649
      %v2597 = vunpack.c.l.b16 %v1659
      %v2598 = vunpack.c.l.b16 %v1673
      %v2599 = vunpack.c.l.b16 %v1683
      %v2600 = vunpack.c.l.b16 %v1697
      %v2601 = vunpack.c.l.b16 %v1707
      %v2602 = vunpack.c.l.b16 %v1721
      %v2603 = vunpack.c.l.b16 %v1731
      %v2604 = vunpack.c.l.b16 %v1745
      %v2605 = vunpack.c.l.b16 %v1755
      %v2606 = vunpack.c.l.b16 %v1769
      %v2607 = vunpack.c.l.b16 %v1779
      %v2608 = vunpack.c.l.b16 %v1793
      %v2609 = vunpack.c.l.b16 %v1803
      %v2610 = vunpack.c.l.b16 %v1817
      %v2611 = vunpack.c.l.b16 %v1827
      %v2612 = vpack.c.b16 %v2581, %v2580
      %v2613 = vpack.c.b16 %v2583, %v2582
      %v2614 = vpack.c.b16 %v2585, %v2584
      %v2615 = vpack.c.b16 %v2587, %v2586
      %v2616 = vpack.c.b16 %v2589, %v2588
      %v2617 = vpack.c.b16 %v2591, %v2590
      %v2618 = vpack.c.b16 %v2593, %v2592
      %v2619 = vpack.c.b16 %v2595, %v2594
      %v2620 = vpack.c.b16 %v2597, %v2596
      %v2621 = vpack.c.b16 %v2599, %v2598
      %v2622 = vpack.c.b16 %v2601, %v2600
      %v2623 = vpack.c.b16 %v2603, %v2602
      %v2624 = vpack.c.b16 %v2605, %v2604
      %v2625 = vpack.c.b16 %v2607, %v2606
      %v2626 = vpack.c.b16 %v2609, %v2608
      %v2627 = vpack.c.b16 %v2611, %v2610
      %2628 = vrot.lane.b32.xlu0 %v2612, 28
      %v2629 = vpop.permute.xlu0 %2628
      %2630 = vrot.lane.b32.xlu0 %v2613, 28
      %v2631 = vpop.permute.xlu0 %2630
      %2632 = vrot.lane.b32.xlu0 %v2614, 28
      %v2633 = vpop.permute.xlu0 %2632
      %2634 = vrot.lane.b32.xlu0 %v2615, 28
      %v2635 = vpop.permute.xlu0 %2634
      %2636 = vrot.lane.b32.xlu0 %v2616, 28
      %v2637 = vpop.permute.xlu0 %2636
      %2638 = vrot.lane.b32.xlu0 %v2617, 28
      %v2639 = vpop.permute.xlu0 %2638
      %2640 = vrot.lane.b32.xlu0 %v2618, 28
      %v2641 = vpop.permute.xlu0 %2640
      %2642 = vrot.lane.b32.xlu0 %v2619, 28
      %v2643 = vpop.permute.xlu0 %2642
      %2644 = vrot.lane.b32.xlu0 %v2620, 28
      %v2645 = vpop.permute.xlu0 %2644
      %2646 = vrot.lane.b32.xlu0 %v2621, 28
      %v2647 = vpop.permute.xlu0 %2646
      %2648 = vrot.lane.b32.xlu0 %v2622, 28
      %v2649 = vpop.permute.xlu0 %2648
      %2650 = vrot.lane.b32.xlu0 %v2623, 28
      %v2651 = vpop.permute.xlu0 %2650
      %2652 = vrot.lane.b32.xlu0 %v2624, 28
      %v2653 = vpop.permute.xlu0 %2652
      %2654 = vrot.lane.b32.xlu0 %v2625, 28
      %v2655 = vpop.permute.xlu0 %2654
      %2656 = vrot.lane.b32.xlu0 %v2626, 28
      %v2657 = vpop.permute.xlu0 %2656
      %2658 = vrot.lane.b32.xlu0 %v2627, 28
      %v2659 = vpop.permute.xlu0 %2658
      %v2660 = vunpack.c.l.b16 %v1895
      %v2661 = vunpack.c.l.b16 %v1898
      %v2662 = vunpack.c.l.b16 %v1902
      %v2663 = vunpack.c.l.b16 %v1905
      %v2664 = vunpack.c.l.b16 %v1909
      %v2665 = vunpack.c.l.b16 %v1912
      %v2666 = vunpack.c.l.b16 %v1916
      %v2667 = vunpack.c.l.b16 %v1919
      %v2668 = vunpack.c.l.b16 %v1923
      %v2669 = vunpack.c.l.b16 %v1926
      %v2670 = vunpack.c.l.b16 %v1930
      %v2671 = vunpack.c.l.b16 %v1933
      %v2672 = vunpack.c.l.b16 %v1937
      %v2673 = vunpack.c.l.b16 %v1940
      %v2674 = vunpack.c.l.b16 %v1944
      %v2675 = vunpack.c.l.b16 %v1947
      %v2676 = vunpack.c.l.b16 %v1951
      %v2677 = vunpack.c.l.b16 %v1954
      %v2678 = vunpack.c.l.b16 %v1958
      %v2679 = vunpack.c.l.b16 %v1961
      %v2680 = vunpack.c.l.b16 %v1965
      %v2681 = vunpack.c.l.b16 %v1968
      %v2682 = vunpack.c.l.b16 %v1972
      %v2683 = vunpack.c.l.b16 %v1975
      %v2684 = vunpack.c.l.b16 %v1979
      %v2685 = vunpack.c.l.b16 %v1982
      %v2686 = vunpack.c.l.b16 %v1986
      %v2687 = vunpack.c.l.b16 %v1989
      %v2688 = vunpack.c.l.b16 %v1993
      %v2689 = vunpack.c.l.b16 %v1996
      %v2690 = vunpack.c.l.b16 %v2000
      %v2691 = vunpack.c.l.b16 %v2003
      %v2692 = vpack.c.b16 %v2661, %v2660
      %v2693 = vpack.c.b16 %v2663, %v2662
      %v2694 = vpack.c.b16 %v2665, %v2664
      %v2695 = vpack.c.b16 %v2667, %v2666
      %v2696 = vpack.c.b16 %v2669, %v2668
      %v2697 = vpack.c.b16 %v2671, %v2670
      %v2698 = vpack.c.b16 %v2673, %v2672
      %v2699 = vpack.c.b16 %v2675, %v2674
      %v2700 = vpack.c.b16 %v2677, %v2676
      %v2701 = vpack.c.b16 %v2679, %v2678
      %v2702 = vpack.c.b16 %v2681, %v2680
      %v2703 = vpack.c.b16 %v2683, %v2682
      %v2704 = vpack.c.b16 %v2685, %v2684
      %v2705 = vpack.c.b16 %v2687, %v2686
      %v2706 = vpack.c.b16 %v2689, %v2688
      %v2707 = vpack.c.b16 %v2691, %v2690
      %2708 = vrot.lane.b32.xlu0 %v2692, 32
      %v2709 = vpop.permute.xlu0 %2708
      %2710 = vrot.lane.b32.xlu0 %v2693, 32
      %v2711 = vpop.permute.xlu0 %2710
      %2712 = vrot.lane.b32.xlu0 %v2694, 32
      %v2713 = vpop.permute.xlu0 %2712
      %2714 = vrot.lane.b32.xlu0 %v2695, 32
      %v2715 = vpop.permute.xlu0 %2714
      %2716 = vrot.lane.b32.xlu0 %v2696, 32
      %v2717 = vpop.permute.xlu0 %2716
      %2718 = vrot.lane.b32.xlu0 %v2697, 32
      %v2719 = vpop.permute.xlu0 %2718
      %2720 = vrot.lane.b32.xlu0 %v2698, 32
      %v2721 = vpop.permute.xlu0 %2720
      %2722 = vrot.lane.b32.xlu0 %v2699, 32
      %v2723 = vpop.permute.xlu0 %2722
      %2724 = vrot.lane.b32.xlu0 %v2700, 32
      %v2725 = vpop.permute.xlu0 %2724
      %2726 = vrot.lane.b32.xlu0 %v2701, 32
      %v2727 = vpop.permute.xlu0 %2726
      %2728 = vrot.lane.b32.xlu0 %v2702, 32
      %v2729 = vpop.permute.xlu0 %2728
      %2730 = vrot.lane.b32.xlu0 %v2703, 32
      %v2731 = vpop.permute.xlu0 %2730
      %2732 = vrot.lane.b32.xlu0 %v2704, 32
      %v2733 = vpop.permute.xlu0 %2732
      %2734 = vrot.lane.b32.xlu0 %v2705, 32
      %v2735 = vpop.permute.xlu0 %2734
      %2736 = vrot.lane.b32.xlu0 %v2706, 32
      %v2737 = vpop.permute.xlu0 %2736
      %2738 = vrot.lane.b32.xlu0 %v2707, 32
      %v2739 = vpop.permute.xlu0 %2738
      %vm2740 = vcmask 31744
      %v2743 = vsel %vm2740, %v2052, %v2117
      %v2746 = vsel %vm2740, %v2053, %v2119
      %v2749 = vsel %vm2740, %v2054, %v2121
      %v2752 = vsel %vm2740, %v2055, %v2123
      %v2755 = vsel %vm2740, %v2056, %v2125
      %v2758 = vsel %vm2740, %v2057, %v2127
      %v2761 = vsel %vm2740, %v2058, %v2129
      %v2764 = vsel %vm2740, %v2059, %v2131
      %v2767 = vsel %vm2740, %v2060, %v2133
      %v2770 = vsel %vm2740, %v2061, %v2135
      %v2773 = vsel %vm2740, %v2062, %v2137
      %v2776 = vsel %vm2740, %v2063, %v2139
      %v2779 = vsel %vm2740, %v2064, %v2141
      %v2782 = vsel %vm2740, %v2065, %v2143
      %v2785 = vsel %vm2740, %v2066, %v2145
      %v2788 = vsel %vm2740, %v2067, %v2147
      %vm2789 = vcmask 64512
      %v2791 = vsel %vm2789, %v2743, %v2197
      %v2793 = vsel %vm2789, %v2746, %v2199
      %v2795 = vsel %vm2789, %v2749, %v2201
      %v2797 = vsel %vm2789, %v2752, %v2203
      %v2799 = vsel %vm2789, %v2755, %v2205
      %v2801 = vsel %vm2789, %v2758, %v2207
      %v2803 = vsel %vm2789, %v2761, %v2209
      %v2805 = vsel %vm2789, %v2764, %v2211
      %v2807 = vsel %vm2789, %v2767, %v2213
      %v2809 = vsel %vm2789, %v2770, %v2215
      %v2811 = vsel %vm2789, %v2773, %v2217
      %v2813 = vsel %vm2789, %v2776, %v2219
      %v2815 = vsel %vm2789, %v2779, %v2221
      %v2817 = vsel %vm2789, %v2782, %v2223
      %v2819 = vsel %vm2789, %v2785, %v2225
      %v2821 = vsel %vm2789, %v2788, %v2227
      %vm2822 = vcmask 97280
      %v2824 = vsel %vm2822, %v2791, %v2293
      %v2826 = vsel %vm2822, %v2793, %v2295
      %v2828 = vsel %vm2822, %v2795, %v2297
      %v2830 = vsel %vm2822, %v2797, %v2299
      %v2832 = vsel %vm2822, %v2799, %v2301
      %v2834 = vsel %vm2822, %v2801, %v2303
      %v2836 = vsel %vm2822, %v2803, %v2305
      %v2838 = vsel %vm2822, %v2805, %v2307
      %v2840 = vsel %vm2822, %v2807, %v2309
      %v2842 = vsel %vm2822, %v2809, %v2311
      %v2844 = vsel %vm2822, %v2811, %v2313
      %v2846 = vsel %vm2822, %v2813, %v2315
      %v2848 = vsel %vm2822, %v2815, %v2317
      %v2850 = vsel %vm2822, %v2817, %v2319
      %v2852 = vsel %vm2822, %v2819, %v2321
      %v2854 = vsel %vm2822, %v2821, %v2323
      %vm2855 = vcmask 130048
      %v2857 = vsel %vm2855, %v2824, %v2373
      %v2859 = vsel %vm2855, %v2826, %v2375
      %v2861 = vsel %vm2855, %v2828, %v2377
      %v2863 = vsel %vm2855, %v2830, %v2379
      %v2865 = vsel %vm2855, %v2832, %v2381
      %v2867 = vsel %vm2855, %v2834, %v2383
      %v2869 = vsel %vm2855, %v2836, %v2385
      %v2871 = vsel %vm2855, %v2838, %v2387
      %v2873 = vsel %vm2855, %v2840, %v2389
      %v2875 = vsel %vm2855, %v2842, %v2391
      %v2877 = vsel %vm2855, %v2844, %v2393
      %v2879 = vsel %vm2855, %v2846, %v2395
      %v2881 = vsel %vm2855, %v2848, %v2397
      %v2883 = vsel %vm2855, %v2850, %v2399
      %v2885 = vsel %vm2855, %v2852, %v2401
      %v2887 = vsel %vm2855, %v2854, %v2403
      %vm2888 = vcmask 162816
      %v2890 = vsel %vm2888, %v2857, %v2453
      %v2892 = vsel %vm2888, %v2859, %v2455
      %v2894 = vsel %vm2888, %v2861, %v2457
      %v2896 = vsel %vm2888, %v2863, %v2459
      %v2898 = vsel %vm2888, %v2865, %v2461
      %v2900 = vsel %vm2888, %v2867, %v2463
      %v2902 = vsel %vm2888, %v2869, %v2465
      %v2904 = vsel %vm2888, %v2871, %v2467
      %v2906 = vsel %vm2888, %v2873, %v2469
      %v2908 = vsel %vm2888, %v2875, %v2471
      %v2910 = vsel %vm2888, %v2877, %v2473
      %v2912 = vsel %vm2888, %v2879, %v2475
      %v2914 = vsel %vm2888, %v2881, %v2477
      %v2916 = vsel %vm2888, %v2883, %v2479
      %v2918 = vsel %vm2888, %v2885, %v2481
      %v2920 = vsel %vm2888, %v2887, %v2483
      %vm2921 = vcmask 195584
      %v2923 = vsel %vm2921, %v2890, %v2549
      %v2925 = vsel %vm2921, %v2892, %v2551
      %v2927 = vsel %vm2921, %v2894, %v2553
      %v2929 = vsel %vm2921, %v2896, %v2555
      %v2931 = vsel %vm2921, %v2898, %v2557
      %v2933 = vsel %vm2921, %v2900, %v2559
      %v2935 = vsel %vm2921, %v2902, %v2561
      %v2937 = vsel %vm2921, %v2904, %v2563
      %v2939 = vsel %vm2921, %v2906, %v2565
      %v2941 = vsel %vm2921, %v2908, %v2567
      %v2943 = vsel %vm2921, %v2910, %v2569
      %v2945 = vsel %vm2921, %v2912, %v2571
      %v2947 = vsel %vm2921, %v2914, %v2573
      %v2949 = vsel %vm2921, %v2916, %v2575
      %v2951 = vsel %vm2921, %v2918, %v2577
      %v2953 = vsel %vm2921, %v2920, %v2579
      %vm2954 = vcmask 228352
      %v2956 = vsel %vm2954, %v2923, %v2629
      %v2958 = vsel %vm2954, %v2925, %v2631
      %v2960 = vsel %vm2954, %v2927, %v2633
      %v2962 = vsel %vm2954, %v2929, %v2635
      %v2964 = vsel %vm2954, %v2931, %v2637
      %v2966 = vsel %vm2954, %v2933, %v2639
      %v2968 = vsel %vm2954, %v2935, %v2641
      %v2970 = vsel %vm2954, %v2937, %v2643
      %v2972 = vsel %vm2954, %v2939, %v2645
      %v2974 = vsel %vm2954, %v2941, %v2647
      %v2976 = vsel %vm2954, %v2943, %v2649
      %v2978 = vsel %vm2954, %v2945, %v2651
      %v2980 = vsel %vm2954, %v2947, %v2653
      %v2982 = vsel %vm2954, %v2949, %v2655
      %v2984 = vsel %vm2954, %v2951, %v2657
      %v2986 = vsel %vm2954, %v2953, %v2659
      %vm2987 = vcmask 261120
      %v2989 = vsel %vm2987, %v2956, %v2709
      %v2991 = vsel %vm2987, %v2958, %v2711
      %v2993 = vsel %vm2987, %v2960, %v2713
      %v2995 = vsel %vm2987, %v2962, %v2715
      %v2997 = vsel %vm2987, %v2964, %v2717
      %v2999 = vsel %vm2987, %v2966, %v2719
      %v3001 = vsel %vm2987, %v2968, %v2721
      %v3003 = vsel %vm2987, %v2970, %v2723
      %v3005 = vsel %vm2987, %v2972, %v2725
      %v3007 = vsel %vm2987, %v2974, %v2727
      %v3009 = vsel %vm2987, %v2976, %v2729
      %v3011 = vsel %vm2987, %v2978, %v2731
      %v3013 = vsel %vm2987, %v2980, %v2733
      %v3015 = vsel %vm2987, %v2982, %v2735
      %v3017 = vsel %vm2987, %v2984, %v2737
      %v3019 = vsel %vm2987, %v2986, %v2739
      %v3020 = vld [vmem:[%s1] sm:$0xf]
      %v3021 = vld [vmem:[%s1 + $0x4] sm:$0xf]
      %v3022 = vld [vmem:[%s1 + $0x8] sm:$0xf]
      %v3023 = vld [vmem:[%s1 + $0xc] sm:$0xf]
      %v3024 = vld [vmem:[%s1 + $0x10] sm:$0x3]
      %v3025 = vld [vmem:[%s2] sm:$0x1]
      %v3027 = vlaneseq
      %v3028 = vshrl.u32 %v3027, 7
      %v3029 = vsub.s32 0, %v3028
      %v3030 = vrot.slane %v3025, %v3029
      %v3037 = vunpack.c.l.b16 %v3020
      %v3038 = vunpack.c.l.b16 %v3021
      %v3039 = vunpack.c.l.b16 %v3022
      %v3040 = vunpack.c.l.b16 %v3023
      %v3041 = vunpack.c.l.b16 %v3024
      %v3042 = vpack.c.b16 %v3038, %v3037
      %v3043 = vpack.c.b16 %v3040, %v3039
      %v3044 = vpack.c.b16 %v3041, %v3041
      %vm3047 = vcmask 293888
      %v3048 = vsel %vm3047, %v2989, 0
      %v3050 = vsel %vm3047, %v2991, 0
      %v3052 = vsel %vm3047, %v2993, 0
      %v3054 = vsel %vm3047, %v2995, 0
      %v3056 = vsel %vm3047, %v2997, 0
      %v3058 = vsel %vm3047, %v2999, 0
      %v3060 = vsel %vm3047, %v3001, 0
      %v3062 = vsel %vm3047, %v3003, 0
      %v3064 = vsel %vm3047, %v3005, 0
      %v3066 = vsel %vm3047, %v3007, 0
      %v3068 = vsel %vm3047, %v3009, 0
      %v3070 = vsel %vm3047, %v3011, 0
      %v3072 = vsel %vm3047, %v3013, 0
      %v3074 = vsel %vm3047, %v3015, 0
      %v3076 = vsel %vm3047, %v3017, 0
      %v3078 = vsel %vm3047, %v3019, 0
      %vm3080 = vcmask 1041408
      %v3082 = vsel %vm3080, %v3044, 0
      %3084 = vmatprep.subr.bf16.mxu0 0
      %3085 = vmatpush1.bf16.msra.mxu0 0
      %3086 = vmatprep.subr.bf16.mxu0 0
      %3087 = vmatpush1.bf16.msra.mxu0 0
      %3088 = vmatprep.subr.bf16.mxu0 0
      %3089 = vmatpush1.bf16.msra.mxu0 0
      %3090 = vmatprep.subr.bf16.mxu0 0
      %3091 = vmatpush1.bf16.msra.mxu0 0
      %3092 = vmatprep.subr.bf16.mxu0 0
      %3093 = vmatpush1.bf16.msra.mxu0 0
      %3094 = vmatprep.subr.bf16.mxu0 0
      %3095 = vmatpush1.bf16.msra.mxu0 %v3082
      %3096 = vmatprep.subr.bf16.mxu0 0
      %3097 = vmatpush1.bf16.msra.mxu0 %v3043
      %3098 = vmatprep.subr.bf16.mxu0 0
      %3099 = vmatpush1.bf16.msra.mxu0 %v3042
      %3100 = vmatprep.subr.bf16.mxu0 0
      %3101 = vmatpush2.bf16.msra.mxu0 0
      %3102 = vmatprep.subr.bf16.mxu0 0
      %3103 = vmatpush2.bf16.msra.mxu0 0
      %3104 = vmatprep.subr.bf16.mxu0 0
      %3105 = vmatpush2.bf16.msra.mxu0 0
      %3106 = vmatprep.subr.bf16.mxu0 0
      %3107 = vmatpush2.bf16.msra.mxu0 0
      %3108 = vmatprep.subr.bf16.mxu0 0
      %3109 = vmatpush2.bf16.msra.mxu0 0
      %3110 = vmatprep.subr.bf16.mxu0 0
      %3111 = vmatpush2.bf16.msra.mxu0 0
      %3112 = vmatprep.subr.bf16.mxu0 0
      %3113 = vmatpush2.bf16.msra.mxu0 0
      %3114 = vmatprep.subr.bf16.mxu0 0
      %3115 = vmatpush2.bf16.msra.mxu0 0
      %3116 = vmatprep.mubr.bf16.mxu0 0
      %3117 = vmatmul.mubr.bf16.gmra.mxu0 %v3048
      %v3118 = vpop.f32.mrf.mxu0
      %v3119 = vadd.f32 %v3030, %v3118
      %v3120 = vpop.f32.mrf.mxu0
      %v3121 = vpop.f32.mrf.mxu0
      %v3122 = vadd.f32 %v3030, %v3121
      %v3123 = vpop.f32.mrf.mxu0
      %3124 = vmatprep.mubr.bf16.mxu0 0
      %3125 = vmatmul.mubr.bf16.gmra.mxu0 %v3050
      %v3126 = vpop.f32.mrf.mxu0
      %v3127 = vadd.f32 %v3030, %v3126
      %v3128 = vpop.f32.mrf.mxu0
      %v3129 = vpop.f32.mrf.mxu0
      %v3130 = vadd.f32 %v3030, %v3129
      %v3131 = vpop.f32.mrf.mxu0
      %3132 = vmatprep.mubr.bf16.mxu0 0
      %3133 = vmatmul.mubr.bf16.gmra.mxu0 %v3052
      %v3134 = vpop.f32.mrf.mxu0
      %v3135 = vadd.f32 %v3030, %v3134
      %v3136 = vpop.f32.mrf.mxu0
      %v3137 = vpop.f32.mrf.mxu0
      %v3138 = vadd.f32 %v3030, %v3137
      %v3139 = vpop.f32.mrf.mxu0
      %3140 = vmatprep.mubr.bf16.mxu0 0
      %3141 = vmatmul.mubr.bf16.gmra.mxu0 %v3054
      %v3142 = vpop.f32.mrf.mxu0
      %v3143 = vadd.f32 %v3030, %v3142
      %v3144 = vpop.f32.mrf.mxu0
      %v3145 = vpop.f32.mrf.mxu0
      %v3146 = vadd.f32 %v3030, %v3145
      %v3147 = vpop.f32.mrf.mxu0
      %3148 = vmatprep.mubr.bf16.mxu0 0
      %3149 = vmatmul.mubr.bf16.gmra.mxu0 %v3056
      %v3150 = vpop.f32.mrf.mxu0
      %v3151 = vadd.f32 %v3030, %v3150
      %v3152 = vpop.f32.mrf.mxu0
      %v3153 = vpop.f32.mrf.mxu0
      %v3154 = vadd.f32 %v3030, %v3153
      %v3155 = vpop.f32.mrf.mxu0
      %3156 = vmatprep.mubr.bf16.mxu0 0
      %3157 = vmatmul.mubr.bf16.gmra.mxu0 %v3058
      %v3158 = vpop.f32.mrf.mxu0
      %v3159 = vadd.f32 %v3030, %v3158
      %v3160 = vpop.f32.mrf.mxu0
      %v3161 = vpop.f32.mrf.mxu0
      %v3162 = vadd.f32 %v3030, %v3161
      %v3163 = vpop.f32.mrf.mxu0
      %3164 = vmatprep.mubr.bf16.mxu0 0
      %3165 = vmatmul.mubr.bf16.gmra.mxu0 %v3060
      %v3166 = vpop.f32.mrf.mxu0
      %v3167 = vadd.f32 %v3030, %v3166
      %v3168 = vpop.f32.mrf.mxu0
      %v3169 = vpop.f32.mrf.mxu0
      %v3170 = vadd.f32 %v3030, %v3169
      %v3171 = vpop.f32.mrf.mxu0
      %3172 = vmatprep.mubr.bf16.mxu0 0
      %3173 = vmatmul.mubr.bf16.gmra.mxu0 %v3062
      %v3174 = vpop.f32.mrf.mxu0
      %v3175 = vadd.f32 %v3030, %v3174
      %v3176 = vpop.f32.mrf.mxu0
      %v3177 = vpop.f32.mrf.mxu0
      %v3178 = vadd.f32 %v3030, %v3177
      %v3179 = vpop.f32.mrf.mxu0
      %3180 = vmatprep.mubr.bf16.mxu0 0
      %3181 = vmatmul.mubr.bf16.gmra.mxu0 %v3064
      %v3182 = vpop.f32.mrf.mxu0
      %v3183 = vadd.f32 %v3030, %v3182
      %v3184 = vpop.f32.mrf.mxu0
      %v3185 = vpop.f32.mrf.mxu0
      %v3186 = vadd.f32 %v3030, %v3185
      %v3187 = vpop.f32.mrf.mxu0
      %3188 = vmatprep.mubr.bf16.mxu0 0
      %3189 = vmatmul.mubr.bf16.gmra.mxu0 %v3066
      %v3190 = vpop.f32.mrf.mxu0
      %v3191 = vadd.f32 %v3030, %v3190
      %v3192 = vpop.f32.mrf.mxu0
      %v3193 = vpop.f32.mrf.mxu0
      %v3194 = vadd.f32 %v3030, %v3193
      %v3195 = vpop.f32.mrf.mxu0
      %3196 = vmatprep.mubr.bf16.mxu0 0
      %3197 = vmatmul.mubr.bf16.gmra.mxu0 %v3068
      %v3198 = vpop.f32.mrf.mxu0
      %v3199 = vadd.f32 %v3030, %v3198
      %v3200 = vpop.f32.mrf.mxu0
      %v3201 = vpop.f32.mrf.mxu0
      %v3202 = vadd.f32 %v3030, %v3201
      %v3203 = vpop.f32.mrf.mxu0
      %3204 = vmatprep.mubr.bf16.mxu0 0
      %3205 = vmatmul.mubr.bf16.gmra.mxu0 %v3070
      %v3206 = vpop.f32.mrf.mxu0
      %v3207 = vadd.f32 %v3030, %v3206
      %v3208 = vpop.f32.mrf.mxu0
      %v3209 = vpop.f32.mrf.mxu0
      %v3210 = vadd.f32 %v3030, %v3209
      %v3211 = vpop.f32.mrf.mxu0
      %3212 = vmatprep.mubr.bf16.mxu0 0
      %3213 = vmatmul.mubr.bf16.gmra.mxu0 %v3072
      %v3214 = vpop.f32.mrf.mxu0
      %v3215 = vadd.f32 %v3030, %v3214
      %v3216 = vpop.f32.mrf.mxu0
      %v3217 = vpop.f32.mrf.mxu0
      %v3218 = vadd.f32 %v3030, %v3217
      %v3219 = vpop.f32.mrf.mxu0
      %3220 = vmatprep.mubr.bf16.mxu0 0
      %3221 = vmatmul.mubr.bf16.gmra.mxu0 %v3074
      %v3222 = vpop.f32.mrf.mxu0
      %v3223 = vadd.f32 %v3030, %v3222
      %v3224 = vpop.f32.mrf.mxu0
      %v3225 = vpop.f32.mrf.mxu0
      %v3226 = vadd.f32 %v3030, %v3225
      %v3227 = vpop.f32.mrf.mxu0
      %3228 = vmatprep.mubr.bf16.mxu0 0
      %3229 = vmatmul.mubr.bf16.gmra.mxu0 %v3076
      %v3230 = vpop.f32.mrf.mxu0
      %v3231 = vadd.f32 %v3030, %v3230
      %v3232 = vpop.f32.mrf.mxu0
      %v3233 = vpop.f32.mrf.mxu0
      %v3234 = vadd.f32 %v3030, %v3233
      %v3235 = vpop.f32.mrf.mxu0
      %3236 = vmatprep.mubr.bf16.mxu0 0
      %3237 = vmatmul.mubr.bf16.gmra.mxu0 %v3078
      %v3238 = vpop.f32.mrf.mxu0
      %v3239 = vadd.f32 %v3030, %v3238
      %v3240 = vpop.f32.mrf.mxu0
      %v3241 = vpop.f32.mrf.mxu0
      %v3242 = vadd.f32 %v3030, %v3241
      %v3243 = vpop.f32.mrf.mxu0
      %3244 = vdwg.mxu0
      %v3245 = vmax.f32 %v3119, 0.0
      %v3246 = vmax.f32 %v3122, 0.0
      %v3247 = vmax.f32 %v3127, 0.0
      %v3248 = vmax.f32 %v3130, 0.0
      %v3249 = vmax.f32 %v3135, 0.0
      %v3250 = vmax.f32 %v3138, 0.0
      %v3251 = vmax.f32 %v3143, 0.0
      %v3252 = vmax.f32 %v3146, 0.0
      %v3253 = vmax.f32 %v3151, 0.0
      %v3254 = vmax.f32 %v3154, 0.0
      %v3255 = vmax.f32 %v3159, 0.0
      %v3256 = vmax.f32 %v3162, 0.0
      %v3257 = vmax.f32 %v3167, 0.0
      %v3258 = vmax.f32 %v3170, 0.0
      %v3259 = vmax.f32 %v3175, 0.0
      %v3260 = vmax.f32 %v3178, 0.0
      %v3261 = vmax.f32 %v3183, 0.0
      %v3262 = vmax.f32 %v3186, 0.0
      %v3263 = vmax.f32 %v3191, 0.0
      %v3264 = vmax.f32 %v3194, 0.0
      %v3265 = vmax.f32 %v3199, 0.0
      %v3266 = vmax.f32 %v3202, 0.0
      %v3267 = vmax.f32 %v3207, 0.0
      %v3268 = vmax.f32 %v3210, 0.0
      %v3269 = vmax.f32 %v3215, 0.0
      %v3270 = vmax.f32 %v3218, 0.0
      %v3271 = vmax.f32 %v3223, 0.0
      %v3272 = vmax.f32 %v3226, 0.0
      %v3273 = vmax.f32 %v3231, 0.0
      %v3274 = vmax.f32 %v3234, 0.0
      %v3275 = vmax.f32 %v3239, 0.0
      %v3276 = vmax.f32 %v3242, 0.0
      %v3277 = vpack.c.bf16 %v3246, %v3245
      %v3278 = vpack.c.bf16 %v3248, %v3247
      %v3279 = vpack.c.bf16 %v3250, %v3249
      %v3280 = vpack.c.bf16 %v3252, %v3251
      %v3281 = vpack.c.bf16 %v3254, %v3253
      %v3282 = vpack.c.bf16 %v3256, %v3255
      %v3283 = vpack.c.bf16 %v3258, %v3257
      %v3284 = vpack.c.bf16 %v3260, %v3259
      %v3285 = vpack.c.bf16 %v3262, %v3261
      %v3286 = vpack.c.bf16 %v3264, %v3263
      %v3287 = vpack.c.bf16 %v3266, %v3265
      %v3288 = vpack.c.bf16 %v3268, %v3267
      %v3289 = vpack.c.bf16 %v3270, %v3269
      %v3290 = vpack.c.bf16 %v3272, %v3271
      %v3291 = vpack.c.bf16 %v3274, %v3273
      %v3292 = vpack.c.bf16 %v3276, %v3275
      %v3309 = vunpack.c.l.b16 %v3277
      %v3310 = vunpack.c.h.b16 %v3277
      %v3311 = vunpack.c.l.b16 %v3278
      %v3312 = vunpack.c.h.b16 %v3278
      %v3313 = vunpack.c.l.b16 %v3279
      %v3314 = vunpack.c.h.b16 %v3279
      %v3315 = vunpack.c.l.b16 %v3280
      %v3316 = vunpack.c.h.b16 %v3280
      %v3317 = vunpack.c.l.b16 %v3281
      %v3318 = vunpack.c.h.b16 %v3281
      %v3319 = vunpack.c.l.b16 %v3282
      %v3320 = vunpack.c.h.b16 %v3282
      %v3321 = vunpack.c.l.b16 %v3283
      %v3322 = vunpack.c.h.b16 %v3283
      %v3323 = vunpack.c.l.b16 %v3284
      %v3324 = vunpack.c.h.b16 %v3284
      %v3325 = vunpack.c.l.b16 %v3285
      %v3326 = vunpack.c.h.b16 %v3285
      %v3327 = vunpack.c.l.b16 %v3286
      %v3328 = vunpack.c.h.b16 %v3286
      %v3329 = vunpack.c.l.b16 %v3287
      %v3330 = vunpack.c.h.b16 %v3287
      %v3331 = vunpack.c.l.b16 %v3288
      %v3332 = vunpack.c.h.b16 %v3288
      %v3333 = vunpack.c.l.b16 %v3289
      %v3334 = vunpack.c.h.b16 %v3289
      %v3335 = vunpack.c.l.b16 %v3290
      %v3336 = vunpack.c.h.b16 %v3290
      %v3337 = vunpack.c.l.b16 %v3291
      %v3338 = vunpack.c.h.b16 %v3291
      %v3339 = vunpack.c.l.b16 %v3292
      %v3340 = vunpack.c.h.b16 %v3292
      %v3341 = vpack.c.b16 %v3309, %v3309
      %v3342 = vpack.c.b16 %v3310, %v3310
      %v3343 = vpack.c.b16 %v3311, %v3311
      %v3344 = vpack.c.b16 %v3312, %v3312
      %v3345 = vpack.c.b16 %v3313, %v3313
      %v3346 = vpack.c.b16 %v3314, %v3314
      %v3347 = vpack.c.b16 %v3315, %v3315
      %v3348 = vpack.c.b16 %v3316, %v3316
      %v3349 = vpack.c.b16 %v3317, %v3317
      %v3350 = vpack.c.b16 %v3318, %v3318
      %v3351 = vpack.c.b16 %v3319, %v3319
      %v3352 = vpack.c.b16 %v3320, %v3320
      %v3353 = vpack.c.b16 %v3321, %v3321
      %v3354 = vpack.c.b16 %v3322, %v3322
      %v3355 = vpack.c.b16 %v3323, %v3323
      %v3356 = vpack.c.b16 %v3324, %v3324
      %v3357 = vpack.c.b16 %v3325, %v3325
      %v3358 = vpack.c.b16 %v3326, %v3326
      %v3359 = vpack.c.b16 %v3327, %v3327
      %v3360 = vpack.c.b16 %v3328, %v3328
      %v3361 = vpack.c.b16 %v3329, %v3329
      %v3362 = vpack.c.b16 %v3330, %v3330
      %v3363 = vpack.c.b16 %v3331, %v3331
      %v3364 = vpack.c.b16 %v3332, %v3332
      %v3365 = vpack.c.b16 %v3333, %v3333
      %v3366 = vpack.c.b16 %v3334, %v3334
      %v3367 = vpack.c.b16 %v3335, %v3335
      %v3368 = vpack.c.b16 %v3336, %v3336
      %v3369 = vpack.c.b16 %v3337, %v3337
      %v3370 = vpack.c.b16 %v3338, %v3338
      %v3371 = vpack.c.b16 %v3339, %v3339
      %v3372 = vpack.c.b16 %v3340, %v3340
      %vm3405 = vcmask 60416
      %3406 = vst.msk [vmem:[%s170] sm:$0xf] %vm3405, %v3341
      %3407 = vst.msk [vmem:[%s170 + $0x4] sm:$0xf] %vm3405, %v3342
      %3408 = vst.msk [vmem:[%s170 + $0x8] sm:$0xf] %vm3405, %v3343
      %3409 = vst.msk [vmem:[%s170 + $0xc] sm:$0xf] %vm3405, %v3344
      %3410 = vst.msk [vmem:[%s170 + $0x10] sm:$0xf] %vm3405, %v3345
      %3411 = vst.msk [vmem:[%s170 + $0x14] sm:$0xf] %vm3405, %v3346
      %3412 = vst.msk [vmem:[%s170 + $0x18] sm:$0xf] %vm3405, %v3347
      %3413 = vst.msk [vmem:[%s170 + $0x1c] sm:$0xf] %vm3405, %v3348
      %3414 = vst.msk [vmem:[%s170 + $0x20] sm:$0xf] %vm3405, %v3349
      %3415 = vst.msk [vmem:[%s170 + $0x24] sm:$0xf] %vm3405, %v3350
      %3416 = vst.msk [vmem:[%s170 + $0x28] sm:$0xf] %vm3405, %v3351
      %3417 = vst.msk [vmem:[%s170 + $0x2c] sm:$0xf] %vm3405, %v3352
      %3418 = vst.msk [vmem:[%s170 + $0x30] sm:$0xf] %vm3405, %v3353
      %3419 = vst.msk [vmem:[%s170 + $0x34] sm:$0xf] %vm3405, %v3354
      %3420 = vst.msk [vmem:[%s170 + $0x38] sm:$0xf] %vm3405, %v3355
      %3421 = vst.msk [vmem:[%s170 + $0x3c] sm:$0xf] %vm3405, %v3356
      %3422 = vst.msk [vmem:[%s170 + $0x40] sm:$0xf] %vm3405, %v3357
      %3423 = vst.msk [vmem:[%s170 + $0x44] sm:$0xf] %vm3405, %v3358
      %3424 = vst.msk [vmem:[%s170 + $0x48] sm:$0xf] %vm3405, %v3359
      %3425 = vst.msk [vmem:[%s170 + $0x4c] sm:$0xf] %vm3405, %v3360
      %3426 = vst.msk [vmem:[%s170 + $0x50] sm:$0xf] %vm3405, %v3361
      %3427 = vst.msk [vmem:[%s170 + $0x54] sm:$0xf] %vm3405, %v3362
      %3428 = vst.msk [vmem:[%s170 + $0x58] sm:$0xf] %vm3405, %v3363
      %3429 = vst.msk [vmem:[%s170 + $0x5c] sm:$0xf] %vm3405, %v3364
      %3430 = vst.msk [vmem:[%s170 + $0x60] sm:$0xf] %vm3405, %v3365
      %3431 = vst.msk [vmem:[%s170 + $0x64] sm:$0xf] %vm3405, %v3366
      %3432 = vst.msk [vmem:[%s170 + $0x68] sm:$0xf] %vm3405, %v3367
      %3433 = vst.msk [vmem:[%s170 + $0x6c] sm:$0xf] %vm3405, %v3368
      %3434 = vst.msk [vmem:[%s170 + $0x70] sm:$0xf] %vm3405, %v3369
      %3435 = vst.msk [vmem:[%s170 + $0x74] sm:$0xf] %vm3405, %v3370
      %3436 = vst.msk [vmem:[%s170 + $0x78] sm:$0xf] %vm3405, %v3371
      %3437 = vst.msk [vmem:[%s170 + $0x7c] sm:$0xf] %vm3405, %v3372
      %p3438 = scmp.lt.s32.totalorder %s14, 1
      %s3439 = scalar_select %p3438, %s14, 1
      %s3440 = smul.addr %s3439, 32
      %s3441 = smul.addr %s3440, 4
      %s3442 = scalar_lea.vmem %s3, %s3441
      // Predicated region
      $region33: #{alexnet_forward.2} parent=31 // pred_check
        %p3443 = pneg %p100
      $region34: #{alexnet_forward.2} parent=31 // pred_check_branch
        %3445 = sbr.rel (%p3443) target = $region36
      $region35: #{alexnet_forward.2} parent=31 // pred_region
        _
      $region36: #{alexnet_forward.2} parent=31 // pred_fallthru
        _
    $region32: #{alexnet_forward.2} parent=5 // pred_fallthru
      _
    %p3446 = scmp.le.s32.totalorder 2, %s9
    // Predicated region
    $region37: #{alexnet_forward.2} parent=5 // pred_check
      %p3447 = pneg %p3446
    $region38: #{alexnet_forward.2} parent=5 // pred_check_branch
      %3449 = sbr.rel (%p3447) target = $region40
    $region39: #{alexnet_forward.2} parent=5 // pred_region
      %s3450 = ssub.s32 %s9, 2
      // Predicated region
      $region41: #{alexnet_forward.2} parent=39 // pred_check
        %p3451 = pneg %p106
      $region42: #{alexnet_forward.2} parent=39 // pred_check_branch
        %3453 = sbr.rel (%p3451) target = $region44
      $region43: #{alexnet_forward.2} parent=39 // pred_region
        %p3454 = scmp.lt.s32.totalorder %s15, 1
        %s3455 = scalar_select %p3454, %s15, 1
        %s3456 = smul.addr %s3455, 32
        %s3457 = smul.addr %s3456, 4
        %s3458 = scalar_lea.vmem %s3, %s3457
      $region44: #{alexnet_forward.2} parent=39 // pred_fallthru
        _
    $region40: #{alexnet_forward.2} parent=5 // pred_fallthru
      _
  $region6: #{alexnet_forward.2} parent=0 // loop_footer
    %s13 = sadd.s32 1, %s9
  $region7: #{alexnet_forward.2} parent=0 // loop_footer_branch
    %8 = sbr.rel target = $region3
  $region8: #{alexnet_forward.2} parent=0 // loop_exit
    _

</llo_original>
